<compile_context>
chip_gen: v5e
topology: v5e:2x2
jax: 0.10.0
libtpu: 0.0.40
codegen_flags: <defaults>
</compile_context>

<pallas_src>
import functools
import jax
import jax.numpy as jnp
from jax.experimental import pallas as pl
from jax.experimental.pallas import tpu as pltpu

EPS = 1e-5
N_BN_LAYERS = 13                  # 13 x (Linear -> BatchNorm1d -> ReLU), then Linear(D, 1)
MATMUL_DTYPE = jnp.bfloat16       # MXU-native on v5e/v6e/v7x; halves weight VMEM/DMA bytes


# ---------------------------------------------------------------------------
# Kernel: whole forward pass in one invocation (no grid; everything in VMEM).
# refs = (x, [w, gamma, beta] * 13, w_last_row, b_last, o)
# ---------------------------------------------------------------------------
def _mlp_fused_kernel(*refs):
    x_ref = refs[0]
    o_ref = refs[-1]
    p = refs[1:-1]

    h = x_ref[...]                                     # (B, D0) f32
    idx = 0
    for _ in range(N_BN_LAYERS):
        w = p[idx][...]                                # (Din, Dout)  bf16
        gamma = p[idx + 1][...]                        # (1, Dout)    f32
        beta = p[idx + 2][...]                         # (1, Dout)    f32
        idx += 3

        # Linear (bias omitted: cancelled by the batch-mean subtraction below).
        y = jnp.dot(h.astype(w.dtype), w, preferred_element_type=jnp.float32)

        # BatchNorm1d, training mode: batch mean, biased variance, eps=1e-5.
        mean = jnp.mean(y, axis=0, keepdims=True)
        diff = y - mean
        var = jnp.mean(diff * diff, axis=0, keepdims=True)
        scale = gamma * jax.lax.rsqrt(var + EPS)       # fold gamma into the scale
        h = jnp.maximum(diff * scale + beta, 0.0)      # ReLU

    # Final Linear(D_last -> 1): VPU multiply + lane reduction (no N=1 matmul).
    w_row = p[idx][...]                                # (1, D_last) f32
    b_last = p[idx + 1][...]                           # (1, 1)      f32
    o_ref[...] = jnp.sum(h * w_row, axis=-1, keepdims=True) + b_last


def mlp_forward_pallas(x_flat, flat_params):
    B = x_flat.shape[0]
    n_in = 1 + len(flat_params)
    return pl.pallas_call(
        _mlp_fused_kernel,
        out_shape=jax.ShapeDtypeStruct((B, 1), jnp.float32),
        in_specs=[pl.BlockSpec(memory_space=pltpu.MemorySpace.VMEM)] * n_in,
        out_specs=pl.BlockSpec(memory_space=pltpu.MemorySpace.VMEM),
    )(x_flat, *flat_params)


@jax.jit
def mlp_forward(x, flat_params):
    # nn.Flatten: (B, ...) -> (B, input_d)
    B = x.shape[0]
    h = x.reshape(B, -1).astype(jnp.float32)
    return mlp_forward_pallas(h, flat_params)


# ---------------------------------------------------------------------------
# Parameters (PyTorch-style init, deterministic).
# ---------------------------------------------------------------------------
def layer_dims(input_d, ratio=2):
    d, r = input_d, ratio
    return [
        (d, d * r), (d * r, d * r),
        (d * r, d * r**2), (d * r**2, d * r**2),
        (d * r**2, d * r**3), (d * r**3, d * r**3),
        (d * r**3, d * r**3), (d * r**3, d * r**3),
        (d * r**3, d * r**2), (d * r**2, d * r**2),
        (d * r**2, d * r), (d * r, d * r),
        (d * r, d),
        (d, 1),
    ]


def init_params(key, input_d, ratio=2):
    """W ~ U(-1/sqrt(fan_in), +1/sqrt(fan_in)); BN gamma=1, beta=0.
    Weights stored pre-transposed to (in, out). Linear biases of the 13 BN
    layers are not materialized (they cancel against the batch-mean)."""
    dims = layer_dims(input_d, ratio)
    flat = []
    for (din, dout) in dims[:-1]:
        key, kw = jax.random.split(key)
        bound = 1.0 / jnp.sqrt(jnp.float32(din))
        w = jax.random.uniform(kw, (din, dout), jnp.float32, -bound, bound)
        flat.append(w.astype(MATMUL_DTYPE))
        flat.append(jnp.ones((1, dout), jnp.float32))    # gamma
        flat.append(jnp.zeros((1, dout), jnp.float32))   # beta
    # Final Linear(d, 1): weight row (1, d) + bias (1, 1), kept in f32.
    din, dout = dims[-1]
    key, kw, kb = jax.random.split(key, 3)
    bound = 1.0 / jnp.sqrt(jnp.float32(din))
    flat.append(jax.random.uniform(kw, (1, din), jnp.float32, -bound, bound))
    flat.append(jax.random.uniform(kb, (1, 1), jnp.float32, -bound, bound))
    return tuple(flat)


# ---------------------------------------------------------------------------
# Pure-JAX reference (same precision scheme) for a sanity check.
# ---------------------------------------------------------------------------
def mlp_reference(x, flat_params):
    B = x.shape[0]
    h = x.reshape(B, -1).astype(jnp.float32)
    idx = 0
    for _ in range(N_BN_LAYERS):
        w, gamma, beta = flat_params[idx], flat_params[idx + 1], flat_params[idx + 2]
        idx += 3
        y = jnp.dot(h.astype(w.dtype), w, preferred_element_type=jnp.float32)
        mean = jnp.mean(y, axis=0, keepdims=True)
        diff = y - mean
        var = jnp.mean(diff * diff, axis=0, keepdims=True)
        h = jnp.maximum(diff * (gamma * jax.lax.rsqrt(var + EPS)) + beta, 0.0)
    w_row, b_last = flat_params[idx], flat_params[idx + 1]
    return jnp.sum(h * w_row, axis=-1, keepdims=True) + b_last


if __name__ == "__main__":
    key = jax.random.PRNGKey(0)
    input_d = 32
    ratio = 2
    batch = 8

    key, kx, kp = jax.random.split(key, 3)
    # Input with trailing dims that flatten to input_d (2 * 16 = 32).
    x = jax.random.normal(kx, (batch, 2, 16), jnp.float32)
    params = init_params(kp, input_d, ratio)

    out = mlp_forward(x, params)
    out = jax.block_until_ready(out)
    assert out.shape == (batch, 1), out.shape

    ref = jax.block_until_ready(mlp_reference(x, params))
    assert jnp.allclose(out, ref, rtol=2e-2, atol=2e-2), (
        float(jnp.max(jnp.abs(out - ref))))

    # TODO(synk): BatchNorm1d running_mean/running_var buffer updates are not
    # modeled (forward uses batch statistics, matching training-mode output).
    print("KERNEL_OK")
</pallas_src>

<mosaic_0001>
module attributes {stable_mosaic.version = 11 : i64} {
  func.func @_mlp_fused_kernel(%arg0: memref<8x32xf32, #tpu.memory_space<vmem>>, %arg1: memref<32x64xbf16, #tpu.memory_space<vmem>>, %arg2: memref<1x64xf32, #tpu.memory_space<vmem>>, %arg3: memref<1x64xf32, #tpu.memory_space<vmem>>, %arg4: memref<64x64xbf16, #tpu.memory_space<vmem>>, %arg5: memref<1x64xf32, #tpu.memory_space<vmem>>, %arg6: memref<1x64xf32, #tpu.memory_space<vmem>>, %arg7: memref<64x128xbf16, #tpu.memory_space<vmem>>, %arg8: memref<1x128xf32, #tpu.memory_space<vmem>>, %arg9: memref<1x128xf32, #tpu.memory_space<vmem>>, %arg10: memref<128x128xbf16, #tpu.memory_space<vmem>>, %arg11: memref<1x128xf32, #tpu.memory_space<vmem>>, %arg12: memref<1x128xf32, #tpu.memory_space<vmem>>, %arg13: memref<128x256xbf16, #tpu.memory_space<vmem>>, %arg14: memref<1x256xf32, #tpu.memory_space<vmem>>, %arg15: memref<1x256xf32, #tpu.memory_space<vmem>>, %arg16: memref<256x256xbf16, #tpu.memory_space<vmem>>, %arg17: memref<1x256xf32, #tpu.memory_space<vmem>>, %arg18: memref<1x256xf32, #tpu.memory_space<vmem>>, %arg19: memref<256x256xbf16, #tpu.memory_space<vmem>>, %arg20: memref<1x256xf32, #tpu.memory_space<vmem>>, %arg21: memref<1x256xf32, #tpu.memory_space<vmem>>, %arg22: memref<256x256xbf16, #tpu.memory_space<vmem>>, %arg23: memref<1x256xf32, #tpu.memory_space<vmem>>, %arg24: memref<1x256xf32, #tpu.memory_space<vmem>>, %arg25: memref<256x128xbf16, #tpu.memory_space<vmem>>, %arg26: memref<1x128xf32, #tpu.memory_space<vmem>>, %arg27: memref<1x128xf32, #tpu.memory_space<vmem>>, %arg28: memref<128x128xbf16, #tpu.memory_space<vmem>>, %arg29: memref<1x128xf32, #tpu.memory_space<vmem>>, %arg30: memref<1x128xf32, #tpu.memory_space<vmem>>, %arg31: memref<128x64xbf16, #tpu.memory_space<vmem>>, %arg32: memref<1x64xf32, #tpu.memory_space<vmem>>, %arg33: memref<1x64xf32, #tpu.memory_space<vmem>>, %arg34: memref<64x64xbf16, #tpu.memory_space<vmem>>, %arg35: memref<1x64xf32, #tpu.memory_space<vmem>>, %arg36: memref<1x64xf32, #tpu.memory_space<vmem>>, %arg37: memref<64x32xbf16, #tpu.memory_space<vmem>>, %arg38: memref<1x32xf32, #tpu.memory_space<vmem>>, %arg39: memref<1x32xf32, #tpu.memory_space<vmem>>, %arg40: memref<1x32xf32, #tpu.memory_space<vmem>>, %arg41: memref<1x1xf32, #tpu.memory_space<vmem>>, %arg42: memref<8x1xf32, #tpu.memory_space<vmem>>) attributes {dimension_semantics = [], scalar_prefetch = 0 : i64, scratch_operands = 0 : i64, tpu.core_type = #tpu.core_type<tc>} {
    %c0 = arith.constant 0 : index
    %c0_0 = arith.constant 0 : index
    %0 = vector.load %arg0[%c0, %c0_0] : memref<8x32xf32, #tpu.memory_space<vmem>>, vector<8x32xf32>
    %c0_1 = arith.constant 0 : index
    %c0_2 = arith.constant 0 : index
    %1 = vector.load %arg1[%c0_1, %c0_2] : memref<32x64xbf16, #tpu.memory_space<vmem>>, vector<32x64xbf16>
    %c0_3 = arith.constant 0 : index
    %c0_4 = arith.constant 0 : index
    %2 = vector.load %arg2[%c0_3, %c0_4] : memref<1x64xf32, #tpu.memory_space<vmem>>, vector<1x64xf32>
    %c0_5 = arith.constant 0 : index
    %c0_6 = arith.constant 0 : index
    %3 = vector.load %arg3[%c0_5, %c0_6] : memref<1x64xf32, #tpu.memory_space<vmem>>, vector<1x64xf32>
    %4 = arith.truncf %0 : vector<8x32xf32> to vector<8x32xbf16>
    %cst = arith.constant dense<0.000000e+00> : vector<8x64xf32>
    %5 = tpu.matmul %4, %1, %cst {dimension_numbers = #tpu.dot_dimension_numbers<[1], [0], [0], [1], [0, 0, 1, 1], [], []>} : vector<8x32xbf16>, vector<32x64xbf16>, vector<8x64xf32> -> vector<8x64xf32>
    %cst_7 = arith.constant dense<0.000000e+00> : vector<64xf32>
    %6 = vector.multi_reduction <add>, %5, %cst_7 [0] : vector<8x64xf32> to vector<64xf32>
    %7 = vector.shape_cast %6 : vector<64xf32> to vector<1x64xf32>
    %cst_8 = arith.constant 8.000000e+00 : f32
    %8 = vector.broadcast %cst_8 : f32 to vector<1x64xf32>
    %9 = arith.divf %7, %8 : vector<1x64xf32>
    %10 = vector.broadcast %9 : vector<1x64xf32> to vector<8x64xf32>
    %11 = arith.subf %5, %10 : vector<8x64xf32>
    %12 = arith.mulf %11, %11 : vector<8x64xf32>
    %cst_9 = arith.constant dense<0.000000e+00> : vector<64xf32>
    %13 = vector.multi_reduction <add>, %12, %cst_9 [0] : vector<8x64xf32> to vector<64xf32>
    %14 = vector.shape_cast %13 : vector<64xf32> to vector<1x64xf32>
    %cst_10 = arith.constant 8.000000e+00 : f32
    %15 = vector.broadcast %cst_10 : f32 to vector<1x64xf32>
    %16 = arith.divf %14, %15 : vector<1x64xf32>
    %cst_11 = arith.constant 9.99999974E-6 : f32
    %17 = vector.broadcast %cst_11 : f32 to vector<1x64xf32>
    %18 = arith.addf %16, %17 : vector<1x64xf32>
    %19 = math.rsqrt %18 : vector<1x64xf32>
    %20 = arith.mulf %2, %19 : vector<1x64xf32>
    %21 = vector.broadcast %20 : vector<1x64xf32> to vector<8x64xf32>
    %22 = arith.mulf %11, %21 : vector<8x64xf32>
    %23 = vector.broadcast %3 : vector<1x64xf32> to vector<8x64xf32>
    %24 = arith.addf %22, %23 : vector<8x64xf32>
    %cst_12 = arith.constant 0.000000e+00 : f32
    %25 = vector.broadcast %cst_12 : f32 to vector<8x64xf32>
    %26 = arith.maximumf %24, %25 : vector<8x64xf32>
    %c0_13 = arith.constant 0 : index
    %c0_14 = arith.constant 0 : index
    %27 = vector.load %arg4[%c0_13, %c0_14] : memref<64x64xbf16, #tpu.memory_space<vmem>>, vector<64x64xbf16>
    %c0_15 = arith.constant 0 : index
    %c0_16 = arith.constant 0 : index
    %28 = vector.load %arg5[%c0_15, %c0_16] : memref<1x64xf32, #tpu.memory_space<vmem>>, vector<1x64xf32>
    %c0_17 = arith.constant 0 : index
    %c0_18 = arith.constant 0 : index
    %29 = vector.load %arg6[%c0_17, %c0_18] : memref<1x64xf32, #tpu.memory_space<vmem>>, vector<1x64xf32>
    %30 = arith.truncf %26 : vector<8x64xf32> to vector<8x64xbf16>
    %cst_19 = arith.constant dense<0.000000e+00> : vector<8x64xf32>
    %31 = tpu.matmul %30, %27, %cst_19 {dimension_numbers = #tpu.dot_dimension_numbers<[1], [0], [0], [1], [0, 0, 1, 1], [], []>} : vector<8x64xbf16>, vector<64x64xbf16>, vector<8x64xf32> -> vector<8x64xf32>
    %cst_20 = arith.constant dense<0.000000e+00> : vector<64xf32>
    %32 = vector.multi_reduction <add>, %31, %cst_20 [0] : vector<8x64xf32> to vector<64xf32>
    %33 = vector.shape_cast %32 : vector<64xf32> to vector<1x64xf32>
    %cst_21 = arith.constant 8.000000e+00 : f32
    %34 = vector.broadcast %cst_21 : f32 to vector<1x64xf32>
    %35 = arith.divf %33, %34 : vector<1x64xf32>
    %36 = vector.broadcast %35 : vector<1x64xf32> to vector<8x64xf32>
    %37 = arith.subf %31, %36 : vector<8x64xf32>
    %38 = arith.mulf %37, %37 : vector<8x64xf32>
    %cst_22 = arith.constant dense<0.000000e+00> : vector<64xf32>
    %39 = vector.multi_reduction <add>, %38, %cst_22 [0] : vector<8x64xf32> to vector<64xf32>
    %40 = vector.shape_cast %39 : vector<64xf32> to vector<1x64xf32>
    %cst_23 = arith.constant 8.000000e+00 : f32
    %41 = vector.broadcast %cst_23 : f32 to vector<1x64xf32>
    %42 = arith.divf %40, %41 : vector<1x64xf32>
    %cst_24 = arith.constant 9.99999974E-6 : f32
    %43 = vector.broadcast %cst_24 : f32 to vector<1x64xf32>
    %44 = arith.addf %42, %43 : vector<1x64xf32>
    %45 = math.rsqrt %44 : vector<1x64xf32>
    %46 = arith.mulf %28, %45 : vector<1x64xf32>
    %47 = vector.broadcast %46 : vector<1x64xf32> to vector<8x64xf32>
    %48 = arith.mulf %37, %47 : vector<8x64xf32>
    %49 = vector.broadcast %29 : vector<1x64xf32> to vector<8x64xf32>
    %50 = arith.addf %48, %49 : vector<8x64xf32>
    %cst_25 = arith.constant 0.000000e+00 : f32
    %51 = vector.broadcast %cst_25 : f32 to vector<8x64xf32>
    %52 = arith.maximumf %50, %51 : vector<8x64xf32>
    %c0_26 = arith.constant 0 : index
    %c0_27 = arith.constant 0 : index
    %53 = vector.load %arg7[%c0_26, %c0_27] : memref<64x128xbf16, #tpu.memory_space<vmem>>, vector<64x128xbf16>
    %c0_28 = arith.constant 0 : index
    %c0_29 = arith.constant 0 : index
    %54 = vector.load %arg8[%c0_28, %c0_29] : memref<1x128xf32, #tpu.memory_space<vmem>>, vector<1x128xf32>
    %c0_30 = arith.constant 0 : index
    %c0_31 = arith.constant 0 : index
    %55 = vector.load %arg9[%c0_30, %c0_31] : memref<1x128xf32, #tpu.memory_space<vmem>>, vector<1x128xf32>
    %56 = arith.truncf %52 : vector<8x64xf32> to vector<8x64xbf16>
    %cst_32 = arith.constant dense<0.000000e+00> : vector<8x128xf32>
    %57 = tpu.matmul %56, %53, %cst_32 {dimension_numbers = #tpu.dot_dimension_numbers<[1], [0], [0], [1], [0, 0, 1, 1], [], []>} : vector<8x64xbf16>, vector<64x128xbf16>, vector<8x128xf32> -> vector<8x128xf32>
    %cst_33 = arith.constant dense<0.000000e+00> : vector<128xf32>
    %58 = vector.multi_reduction <add>, %57, %cst_33 [0] : vector<8x128xf32> to vector<128xf32>
    %59 = vector.shape_cast %58 : vector<128xf32> to vector<1x128xf32>
    %cst_34 = arith.constant 8.000000e+00 : f32
    %60 = vector.broadcast %cst_34 : f32 to vector<1x128xf32>
    %61 = arith.divf %59, %60 : vector<1x128xf32>
    %62 = vector.broadcast %61 : vector<1x128xf32> to vector<8x128xf32>
    %63 = arith.subf %57, %62 : vector<8x128xf32>
    %64 = arith.mulf %63, %63 : vector<8x128xf32>
    %cst_35 = arith.constant dense<0.000000e+00> : vector<128xf32>
    %65 = vector.multi_reduction <add>, %64, %cst_35 [0] : vector<8x128xf32> to vector<128xf32>
    %66 = vector.shape_cast %65 : vector<128xf32> to vector<1x128xf32>
    %cst_36 = arith.constant 8.000000e+00 : f32
    %67 = vector.broadcast %cst_36 : f32 to vector<1x128xf32>
    %68 = arith.divf %66, %67 : vector<1x128xf32>
    %cst_37 = arith.constant 9.99999974E-6 : f32
    %69 = vector.broadcast %cst_37 : f32 to vector<1x128xf32>
    %70 = arith.addf %68, %69 : vector<1x128xf32>
    %71 = math.rsqrt %70 : vector<1x128xf32>
    %72 = arith.mulf %54, %71 : vector<1x128xf32>
    %73 = vector.broadcast %72 : vector<1x128xf32> to vector<8x128xf32>
    %74 = arith.mulf %63, %73 : vector<8x128xf32>
    %75 = vector.broadcast %55 : vector<1x128xf32> to vector<8x128xf32>
    %76 = arith.addf %74, %75 : vector<8x128xf32>
    %cst_38 = arith.constant 0.000000e+00 : f32
    %77 = vector.broadcast %cst_38 : f32 to vector<8x128xf32>
    %78 = arith.maximumf %76, %77 : vector<8x128xf32>
    %c0_39 = arith.constant 0 : index
    %c0_40 = arith.constant 0 : index
    %79 = vector.load %arg10[%c0_39, %c0_40] : memref<128x128xbf16, #tpu.memory_space<vmem>>, vector<128x128xbf16>
    %c0_41 = arith.constant 0 : index
    %c0_42 = arith.constant 0 : index
    %80 = vector.load %arg11[%c0_41, %c0_42] : memref<1x128xf32, #tpu.memory_space<vmem>>, vector<1x128xf32>
    %c0_43 = arith.constant 0 : index
    %c0_44 = arith.constant 0 : index
    %81 = vector.load %arg12[%c0_43, %c0_44] : memref<1x128xf32, #tpu.memory_space<vmem>>, vector<1x128xf32>
    %82 = arith.truncf %78 : vector<8x128xf32> to vector<8x128xbf16>
    %cst_45 = arith.constant dense<0.000000e+00> : vector<8x128xf32>
    %83 = tpu.matmul %82, %79, %cst_45 {dimension_numbers = #tpu.dot_dimension_numbers<[1], [0], [0], [1], [0, 0, 1, 1], [], []>} : vector<8x128xbf16>, vector<128x128xbf16>, vector<8x128xf32> -> vector<8x128xf32>
    %cst_46 = arith.constant dense<0.000000e+00> : vector<128xf32>
    %84 = vector.multi_reduction <add>, %83, %cst_46 [0] : vector<8x128xf32> to vector<128xf32>
    %85 = vector.shape_cast %84 : vector<128xf32> to vector<1x128xf32>
    %cst_47 = arith.constant 8.000000e+00 : f32
    %86 = vector.broadcast %cst_47 : f32 to vector<1x128xf32>
    %87 = arith.divf %85, %86 : vector<1x128xf32>
    %88 = vector.broadcast %87 : vector<1x128xf32> to vector<8x128xf32>
    %89 = arith.subf %83, %88 : vector<8x128xf32>
    %90 = arith.mulf %89, %89 : vector<8x128xf32>
    %cst_48 = arith.constant dense<0.000000e+00> : vector<128xf32>
    %91 = vector.multi_reduction <add>, %90, %cst_48 [0] : vector<8x128xf32> to vector<128xf32>
    %92 = vector.shape_cast %91 : vector<128xf32> to vector<1x128xf32>
    %cst_49 = arith.constant 8.000000e+00 : f32
    %93 = vector.broadcast %cst_49 : f32 to vector<1x128xf32>
    %94 = arith.divf %92, %93 : vector<1x128xf32>
    %cst_50 = arith.constant 9.99999974E-6 : f32
    %95 = vector.broadcast %cst_50 : f32 to vector<1x128xf32>
    %96 = arith.addf %94, %95 : vector<1x128xf32>
    %97 = math.rsqrt %96 : vector<1x128xf32>
    %98 = arith.mulf %80, %97 : vector<1x128xf32>
    %99 = vector.broadcast %98 : vector<1x128xf32> to vector<8x128xf32>
    %100 = arith.mulf %89, %99 : vector<8x128xf32>
    %101 = vector.broadcast %81 : vector<1x128xf32> to vector<8x128xf32>
    %102 = arith.addf %100, %101 : vector<8x128xf32>
    %cst_51 = arith.constant 0.000000e+00 : f32
    %103 = vector.broadcast %cst_51 : f32 to vector<8x128xf32>
    %104 = arith.maximumf %102, %103 : vector<8x128xf32>
    %c0_52 = arith.constant 0 : index
    %c0_53 = arith.constant 0 : index
    %105 = vector.load %arg13[%c0_52, %c0_53] : memref<128x256xbf16, #tpu.memory_space<vmem>>, vector<128x256xbf16>
    %c0_54 = arith.constant 0 : index
    %c0_55 = arith.constant 0 : index
    %106 = vector.load %arg14[%c0_54, %c0_55] : memref<1x256xf32, #tpu.memory_space<vmem>>, vector<1x256xf32>
    %c0_56 = arith.constant 0 : index
    %c0_57 = arith.constant 0 : index
    %107 = vector.load %arg15[%c0_56, %c0_57] : memref<1x256xf32, #tpu.memory_space<vmem>>, vector<1x256xf32>
    %108 = arith.truncf %104 : vector<8x128xf32> to vector<8x128xbf16>
    %cst_58 = arith.constant dense<0.000000e+00> : vector<8x256xf32>
    %109 = tpu.matmul %108, %105, %cst_58 {dimension_numbers = #tpu.dot_dimension_numbers<[1], [0], [0], [1], [0, 0, 1, 1], [], []>} : vector<8x128xbf16>, vector<128x256xbf16>, vector<8x256xf32> -> vector<8x256xf32>
    %cst_59 = arith.constant dense<0.000000e+00> : vector<256xf32>
    %110 = vector.multi_reduction <add>, %109, %cst_59 [0] : vector<8x256xf32> to vector<256xf32>
    %111 = vector.shape_cast %110 : vector<256xf32> to vector<1x256xf32>
    %cst_60 = arith.constant 8.000000e+00 : f32
    %112 = vector.broadcast %cst_60 : f32 to vector<1x256xf32>
    %113 = arith.divf %111, %112 : vector<1x256xf32>
    %114 = vector.broadcast %113 : vector<1x256xf32> to vector<8x256xf32>
    %115 = arith.subf %109, %114 : vector<8x256xf32>
    %116 = arith.mulf %115, %115 : vector<8x256xf32>
    %cst_61 = arith.constant dense<0.000000e+00> : vector<256xf32>
    %117 = vector.multi_reduction <add>, %116, %cst_61 [0] : vector<8x256xf32> to vector<256xf32>
    %118 = vector.shape_cast %117 : vector<256xf32> to vector<1x256xf32>
    %cst_62 = arith.constant 8.000000e+00 : f32
    %119 = vector.broadcast %cst_62 : f32 to vector<1x256xf32>
    %120 = arith.divf %118, %119 : vector<1x256xf32>
    %cst_63 = arith.constant 9.99999974E-6 : f32
    %121 = vector.broadcast %cst_63 : f32 to vector<1x256xf32>
    %122 = arith.addf %120, %121 : vector<1x256xf32>
    %123 = math.rsqrt %122 : vector<1x256xf32>
    %124 = arith.mulf %106, %123 : vector<1x256xf32>
    %125 = vector.broadcast %124 : vector<1x256xf32> to vector<8x256xf32>
    %126 = arith.mulf %115, %125 : vector<8x256xf32>
    %127 = vector.broadcast %107 : vector<1x256xf32> to vector<8x256xf32>
    %128 = arith.addf %126, %127 : vector<8x256xf32>
    %cst_64 = arith.constant 0.000000e+00 : f32
    %129 = vector.broadcast %cst_64 : f32 to vector<8x256xf32>
    %130 = arith.maximumf %128, %129 : vector<8x256xf32>
    %c0_65 = arith.constant 0 : index
    %c0_66 = arith.constant 0 : index
    %131 = vector.load %arg16[%c0_65, %c0_66] : memref<256x256xbf16, #tpu.memory_space<vmem>>, vector<256x256xbf16>
    %c0_67 = arith.constant 0 : index
    %c0_68 = arith.constant 0 : index
    %132 = vector.load %arg17[%c0_67, %c0_68] : memref<1x256xf32, #tpu.memory_space<vmem>>, vector<1x256xf32>
    %c0_69 = arith.constant 0 : index
    %c0_70 = arith.constant 0 : index
    %133 = vector.load %arg18[%c0_69, %c0_70] : memref<1x256xf32, #tpu.memory_space<vmem>>, vector<1x256xf32>
    %134 = arith.truncf %130 : vector<8x256xf32> to vector<8x256xbf16>
    %cst_71 = arith.constant dense<0.000000e+00> : vector<8x256xf32>
    %135 = tpu.matmul %134, %131, %cst_71 {dimension_numbers = #tpu.dot_dimension_numbers<[1], [0], [0], [1], [0, 0, 1, 1], [], []>} : vector<8x256xbf16>, vector<256x256xbf16>, vector<8x256xf32> -> vector<8x256xf32>
    %cst_72 = arith.constant dense<0.000000e+00> : vector<256xf32>
    %136 = vector.multi_reduction <add>, %135, %cst_72 [0] : vector<8x256xf32> to vector<256xf32>
    %137 = vector.shape_cast %136 : vector<256xf32> to vector<1x256xf32>
    %cst_73 = arith.constant 8.000000e+00 : f32
    %138 = vector.broadcast %cst_73 : f32 to vector<1x256xf32>
    %139 = arith.divf %137, %138 : vector<1x256xf32>
    %140 = vector.broadcast %139 : vector<1x256xf32> to vector<8x256xf32>
    %141 = arith.subf %135, %140 : vector<8x256xf32>
    %142 = arith.mulf %141, %141 : vector<8x256xf32>
    %cst_74 = arith.constant dense<0.000000e+00> : vector<256xf32>
    %143 = vector.multi_reduction <add>, %142, %cst_74 [0] : vector<8x256xf32> to vector<256xf32>
    %144 = vector.shape_cast %143 : vector<256xf32> to vector<1x256xf32>
    %cst_75 = arith.constant 8.000000e+00 : f32
    %145 = vector.broadcast %cst_75 : f32 to vector<1x256xf32>
    %146 = arith.divf %144, %145 : vector<1x256xf32>
    %cst_76 = arith.constant 9.99999974E-6 : f32
    %147 = vector.broadcast %cst_76 : f32 to vector<1x256xf32>
    %148 = arith.addf %146, %147 : vector<1x256xf32>
    %149 = math.rsqrt %148 : vector<1x256xf32>
    %150 = arith.mulf %132, %149 : vector<1x256xf32>
    %151 = vector.broadcast %150 : vector<1x256xf32> to vector<8x256xf32>
    %152 = arith.mulf %141, %151 : vector<8x256xf32>
    %153 = vector.broadcast %133 : vector<1x256xf32> to vector<8x256xf32>
    %154 = arith.addf %152, %153 : vector<8x256xf32>
    %cst_77 = arith.constant 0.000000e+00 : f32
    %155 = vector.broadcast %cst_77 : f32 to vector<8x256xf32>
    %156 = arith.maximumf %154, %155 : vector<8x256xf32>
    %c0_78 = arith.constant 0 : index
    %c0_79 = arith.constant 0 : index
    %157 = vector.load %arg19[%c0_78, %c0_79] : memref<256x256xbf16, #tpu.memory_space<vmem>>, vector<256x256xbf16>
    %c0_80 = arith.constant 0 : index
    %c0_81 = arith.constant 0 : index
    %158 = vector.load %arg20[%c0_80, %c0_81] : memref<1x256xf32, #tpu.memory_space<vmem>>, vector<1x256xf32>
    %c0_82 = arith.constant 0 : index
    %c0_83 = arith.constant 0 : index
    %159 = vector.load %arg21[%c0_82, %c0_83] : memref<1x256xf32, #tpu.memory_space<vmem>>, vector<1x256xf32>
    %160 = arith.truncf %156 : vector<8x256xf32> to vector<8x256xbf16>
    %cst_84 = arith.constant dense<0.000000e+00> : vector<8x256xf32>
    %161 = tpu.matmul %160, %157, %cst_84 {dimension_numbers = #tpu.dot_dimension_numbers<[1], [0], [0], [1], [0, 0, 1, 1], [], []>} : vector<8x256xbf16>, vector<256x256xbf16>, vector<8x256xf32> -> vector<8x256xf32>
    %cst_85 = arith.constant dense<0.000000e+00> : vector<256xf32>
    %162 = vector.multi_reduction <add>, %161, %cst_85 [0] : vector<8x256xf32> to vector<256xf32>
    %163 = vector.shape_cast %162 : vector<256xf32> to vector<1x256xf32>
    %cst_86 = arith.constant 8.000000e+00 : f32
    %164 = vector.broadcast %cst_86 : f32 to vector<1x256xf32>
    %165 = arith.divf %163, %164 : vector<1x256xf32>
    %166 = vector.broadcast %165 : vector<1x256xf32> to vector<8x256xf32>
    %167 = arith.subf %161, %166 : vector<8x256xf32>
    %168 = arith.mulf %167, %167 : vector<8x256xf32>
    %cst_87 = arith.constant dense<0.000000e+00> : vector<256xf32>
    %169 = vector.multi_reduction <add>, %168, %cst_87 [0] : vector<8x256xf32> to vector<256xf32>
    %170 = vector.shape_cast %169 : vector<256xf32> to vector<1x256xf32>
    %cst_88 = arith.constant 8.000000e+00 : f32
    %171 = vector.broadcast %cst_88 : f32 to vector<1x256xf32>
    %172 = arith.divf %170, %171 : vector<1x256xf32>
    %cst_89 = arith.constant 9.99999974E-6 : f32
    %173 = vector.broadcast %cst_89 : f32 to vector<1x256xf32>
    %174 = arith.addf %172, %173 : vector<1x256xf32>
    %175 = math.rsqrt %174 : vector<1x256xf32>
    %176 = arith.mulf %158, %175 : vector<1x256xf32>
    %177 = vector.broadcast %176 : vector<1x256xf32> to vector<8x256xf32>
    %178 = arith.mulf %167, %177 : vector<8x256xf32>
    %179 = vector.broadcast %159 : vector<1x256xf32> to vector<8x256xf32>
    %180 = arith.addf %178, %179 : vector<8x256xf32>
    %cst_90 = arith.constant 0.000000e+00 : f32
    %181 = vector.broadcast %cst_90 : f32 to vector<8x256xf32>
    %182 = arith.maximumf %180, %181 : vector<8x256xf32>
    %c0_91 = arith.constant 0 : index
    %c0_92 = arith.constant 0 : index
    %183 = vector.load %arg22[%c0_91, %c0_92] : memref<256x256xbf16, #tpu.memory_space<vmem>>, vector<256x256xbf16>
    %c0_93 = arith.constant 0 : index
    %c0_94 = arith.constant 0 : index
    %184 = vector.load %arg23[%c0_93, %c0_94] : memref<1x256xf32, #tpu.memory_space<vmem>>, vector<1x256xf32>
    %c0_95 = arith.constant 0 : index
    %c0_96 = arith.constant 0 : index
    %185 = vector.load %arg24[%c0_95, %c0_96] : memref<1x256xf32, #tpu.memory_space<vmem>>, vector<1x256xf32>
    %186 = arith.truncf %182 : vector<8x256xf32> to vector<8x256xbf16>
    %cst_97 = arith.constant dense<0.000000e+00> : vector<8x256xf32>
    %187 = tpu.matmul %186, %183, %cst_97 {dimension_numbers = #tpu.dot_dimension_numbers<[1], [0], [0], [1], [0, 0, 1, 1], [], []>} : vector<8x256xbf16>, vector<256x256xbf16>, vector<8x256xf32> -> vector<8x256xf32>
    %cst_98 = arith.constant dense<0.000000e+00> : vector<256xf32>
    %188 = vector.multi_reduction <add>, %187, %cst_98 [0] : vector<8x256xf32> to vector<256xf32>
    %189 = vector.shape_cast %188 : vector<256xf32> to vector<1x256xf32>
    %cst_99 = arith.constant 8.000000e+00 : f32
    %190 = vector.broadcast %cst_99 : f32 to vector<1x256xf32>
    %191 = arith.divf %189, %190 : vector<1x256xf32>
    %192 = vector.broadcast %191 : vector<1x256xf32> to vector<8x256xf32>
    %193 = arith.subf %187, %192 : vector<8x256xf32>
    %194 = arith.mulf %193, %193 : vector<8x256xf32>
    %cst_100 = arith.constant dense<0.000000e+00> : vector<256xf32>
    %195 = vector.multi_reduction <add>, %194, %cst_100 [0] : vector<8x256xf32> to vector<256xf32>
    %196 = vector.shape_cast %195 : vector<256xf32> to vector<1x256xf32>
    %cst_101 = arith.constant 8.000000e+00 : f32
    %197 = vector.broadcast %cst_101 : f32 to vector<1x256xf32>
    %198 = arith.divf %196, %197 : vector<1x256xf32>
    %cst_102 = arith.constant 9.99999974E-6 : f32
    %199 = vector.broadcast %cst_102 : f32 to vector<1x256xf32>
    %200 = arith.addf %198, %199 : vector<1x256xf32>
    %201 = math.rsqrt %200 : vector<1x256xf32>
    %202 = arith.mulf %184, %201 : vector<1x256xf32>
    %203 = vector.broadcast %202 : vector<1x256xf32> to vector<8x256xf32>
    %204 = arith.mulf %193, %203 : vector<8x256xf32>
    %205 = vector.broadcast %185 : vector<1x256xf32> to vector<8x256xf32>
    %206 = arith.addf %204, %205 : vector<8x256xf32>
    %cst_103 = arith.constant 0.000000e+00 : f32
    %207 = vector.broadcast %cst_103 : f32 to vector<8x256xf32>
    %208 = arith.maximumf %206, %207 : vector<8x256xf32>
    %c0_104 = arith.constant 0 : index
    %c0_105 = arith.constant 0 : index
    %209 = vector.load %arg25[%c0_104, %c0_105] : memref<256x128xbf16, #tpu.memory_space<vmem>>, vector<256x128xbf16>
    %c0_106 = arith.constant 0 : index
    %c0_107 = arith.constant 0 : index
    %210 = vector.load %arg26[%c0_106, %c0_107] : memref<1x128xf32, #tpu.memory_space<vmem>>, vector<1x128xf32>
    %c0_108 = arith.constant 0 : index
    %c0_109 = arith.constant 0 : index
    %211 = vector.load %arg27[%c0_108, %c0_109] : memref<1x128xf32, #tpu.memory_space<vmem>>, vector<1x128xf32>
    %212 = arith.truncf %208 : vector<8x256xf32> to vector<8x256xbf16>
    %cst_110 = arith.constant dense<0.000000e+00> : vector<8x128xf32>
    %213 = tpu.matmul %212, %209, %cst_110 {dimension_numbers = #tpu.dot_dimension_numbers<[1], [0], [0], [1], [0, 0, 1, 1], [], []>} : vector<8x256xbf16>, vector<256x128xbf16>, vector<8x128xf32> -> vector<8x128xf32>
    %cst_111 = arith.constant dense<0.000000e+00> : vector<128xf32>
    %214 = vector.multi_reduction <add>, %213, %cst_111 [0] : vector<8x128xf32> to vector<128xf32>
    %215 = vector.shape_cast %214 : vector<128xf32> to vector<1x128xf32>
    %cst_112 = arith.constant 8.000000e+00 : f32
    %216 = vector.broadcast %cst_112 : f32 to vector<1x128xf32>
    %217 = arith.divf %215, %216 : vector<1x128xf32>
    %218 = vector.broadcast %217 : vector<1x128xf32> to vector<8x128xf32>
    %219 = arith.subf %213, %218 : vector<8x128xf32>
    %220 = arith.mulf %219, %219 : vector<8x128xf32>
    %cst_113 = arith.constant dense<0.000000e+00> : vector<128xf32>
    %221 = vector.multi_reduction <add>, %220, %cst_113 [0] : vector<8x128xf32> to vector<128xf32>
    %222 = vector.shape_cast %221 : vector<128xf32> to vector<1x128xf32>
    %cst_114 = arith.constant 8.000000e+00 : f32
    %223 = vector.broadcast %cst_114 : f32 to vector<1x128xf32>
    %224 = arith.divf %222, %223 : vector<1x128xf32>
    %cst_115 = arith.constant 9.99999974E-6 : f32
    %225 = vector.broadcast %cst_115 : f32 to vector<1x128xf32>
    %226 = arith.addf %224, %225 : vector<1x128xf32>
    %227 = math.rsqrt %226 : vector<1x128xf32>
    %228 = arith.mulf %210, %227 : vector<1x128xf32>
    %229 = vector.broadcast %228 : vector<1x128xf32> to vector<8x128xf32>
    %230 = arith.mulf %219, %229 : vector<8x128xf32>
    %231 = vector.broadcast %211 : vector<1x128xf32> to vector<8x128xf32>
    %232 = arith.addf %230, %231 : vector<8x128xf32>
    %cst_116 = arith.constant 0.000000e+00 : f32
    %233 = vector.broadcast %cst_116 : f32 to vector<8x128xf32>
    %234 = arith.maximumf %232, %233 : vector<8x128xf32>
    %c0_117 = arith.constant 0 : index
    %c0_118 = arith.constant 0 : index
    %235 = vector.load %arg28[%c0_117, %c0_118] : memref<128x128xbf16, #tpu.memory_space<vmem>>, vector<128x128xbf16>
    %c0_119 = arith.constant 0 : index
    %c0_120 = arith.constant 0 : index
    %236 = vector.load %arg29[%c0_119, %c0_120] : memref<1x128xf32, #tpu.memory_space<vmem>>, vector<1x128xf32>
    %c0_121 = arith.constant 0 : index
    %c0_122 = arith.constant 0 : index
    %237 = vector.load %arg30[%c0_121, %c0_122] : memref<1x128xf32, #tpu.memory_space<vmem>>, vector<1x128xf32>
    %238 = arith.truncf %234 : vector<8x128xf32> to vector<8x128xbf16>
    %cst_123 = arith.constant dense<0.000000e+00> : vector<8x128xf32>
    %239 = tpu.matmul %238, %235, %cst_123 {dimension_numbers = #tpu.dot_dimension_numbers<[1], [0], [0], [1], [0, 0, 1, 1], [], []>} : vector<8x128xbf16>, vector<128x128xbf16>, vector<8x128xf32> -> vector<8x128xf32>
    %cst_124 = arith.constant dense<0.000000e+00> : vector<128xf32>
    %240 = vector.multi_reduction <add>, %239, %cst_124 [0] : vector<8x128xf32> to vector<128xf32>
    %241 = vector.shape_cast %240 : vector<128xf32> to vector<1x128xf32>
    %cst_125 = arith.constant 8.000000e+00 : f32
    %242 = vector.broadcast %cst_125 : f32 to vector<1x128xf32>
    %243 = arith.divf %241, %242 : vector<1x128xf32>
    %244 = vector.broadcast %243 : vector<1x128xf32> to vector<8x128xf32>
    %245 = arith.subf %239, %244 : vector<8x128xf32>
    %246 = arith.mulf %245, %245 : vector<8x128xf32>
    %cst_126 = arith.constant dense<0.000000e+00> : vector<128xf32>
    %247 = vector.multi_reduction <add>, %246, %cst_126 [0] : vector<8x128xf32> to vector<128xf32>
    %248 = vector.shape_cast %247 : vector<128xf32> to vector<1x128xf32>
    %cst_127 = arith.constant 8.000000e+00 : f32
    %249 = vector.broadcast %cst_127 : f32 to vector<1x128xf32>
    %250 = arith.divf %248, %249 : vector<1x128xf32>
    %cst_128 = arith.constant 9.99999974E-6 : f32
    %251 = vector.broadcast %cst_128 : f32 to vector<1x128xf32>
    %252 = arith.addf %250, %251 : vector<1x128xf32>
    %253 = math.rsqrt %252 : vector<1x128xf32>
    %254 = arith.mulf %236, %253 : vector<1x128xf32>
    %255 = vector.broadcast %254 : vector<1x128xf32> to vector<8x128xf32>
    %256 = arith.mulf %245, %255 : vector<8x128xf32>
    %257 = vector.broadcast %237 : vector<1x128xf32> to vector<8x128xf32>
    %258 = arith.addf %256, %257 : vector<8x128xf32>
    %cst_129 = arith.constant 0.000000e+00 : f32
    %259 = vector.broadcast %cst_129 : f32 to vector<8x128xf32>
    %260 = arith.maximumf %258, %259 : vector<8x128xf32>
    %c0_130 = arith.constant 0 : index
    %c0_131 = arith.constant 0 : index
    %261 = vector.load %arg31[%c0_130, %c0_131] : memref<128x64xbf16, #tpu.memory_space<vmem>>, vector<128x64xbf16>
    %c0_132 = arith.constant 0 : index
    %c0_133 = arith.constant 0 : index
    %262 = vector.load %arg32[%c0_132, %c0_133] : memref<1x64xf32, #tpu.memory_space<vmem>>, vector<1x64xf32>
    %c0_134 = arith.constant 0 : index
    %c0_135 = arith.constant 0 : index
    %263 = vector.load %arg33[%c0_134, %c0_135] : memref<1x64xf32, #tpu.memory_space<vmem>>, vector<1x64xf32>
    %264 = arith.truncf %260 : vector<8x128xf32> to vector<8x128xbf16>
    %cst_136 = arith.constant dense<0.000000e+00> : vector<8x64xf32>
    %265 = tpu.matmul %264, %261, %cst_136 {dimension_numbers = #tpu.dot_dimension_numbers<[1], [0], [0], [1], [0, 0, 1, 1], [], []>} : vector<8x128xbf16>, vector<128x64xbf16>, vector<8x64xf32> -> vector<8x64xf32>
    %cst_137 = arith.constant dense<0.000000e+00> : vector<64xf32>
    %266 = vector.multi_reduction <add>, %265, %cst_137 [0] : vector<8x64xf32> to vector<64xf32>
    %267 = vector.shape_cast %266 : vector<64xf32> to vector<1x64xf32>
    %cst_138 = arith.constant 8.000000e+00 : f32
    %268 = vector.broadcast %cst_138 : f32 to vector<1x64xf32>
    %269 = arith.divf %267, %268 : vector<1x64xf32>
    %270 = vector.broadcast %269 : vector<1x64xf32> to vector<8x64xf32>
    %271 = arith.subf %265, %270 : vector<8x64xf32>
    %272 = arith.mulf %271, %271 : vector<8x64xf32>
    %cst_139 = arith.constant dense<0.000000e+00> : vector<64xf32>
    %273 = vector.multi_reduction <add>, %272, %cst_139 [0] : vector<8x64xf32> to vector<64xf32>
    %274 = vector.shape_cast %273 : vector<64xf32> to vector<1x64xf32>
    %cst_140 = arith.constant 8.000000e+00 : f32
    %275 = vector.broadcast %cst_140 : f32 to vector<1x64xf32>
    %276 = arith.divf %274, %275 : vector<1x64xf32>
    %cst_141 = arith.constant 9.99999974E-6 : f32
    %277 = vector.broadcast %cst_141 : f32 to vector<1x64xf32>
    %278 = arith.addf %276, %277 : vector<1x64xf32>
    %279 = math.rsqrt %278 : vector<1x64xf32>
    %280 = arith.mulf %262, %279 : vector<1x64xf32>
    %281 = vector.broadcast %280 : vector<1x64xf32> to vector<8x64xf32>
    %282 = arith.mulf %271, %281 : vector<8x64xf32>
    %283 = vector.broadcast %263 : vector<1x64xf32> to vector<8x64xf32>
    %284 = arith.addf %282, %283 : vector<8x64xf32>
    %cst_142 = arith.constant 0.000000e+00 : f32
    %285 = vector.broadcast %cst_142 : f32 to vector<8x64xf32>
    %286 = arith.maximumf %284, %285 : vector<8x64xf32>
    %c0_143 = arith.constant 0 : index
    %c0_144 = arith.constant 0 : index
    %287 = vector.load %arg34[%c0_143, %c0_144] : memref<64x64xbf16, #tpu.memory_space<vmem>>, vector<64x64xbf16>
    %c0_145 = arith.constant 0 : index
    %c0_146 = arith.constant 0 : index
    %288 = vector.load %arg35[%c0_145, %c0_146] : memref<1x64xf32, #tpu.memory_space<vmem>>, vector<1x64xf32>
    %c0_147 = arith.constant 0 : index
    %c0_148 = arith.constant 0 : index
    %289 = vector.load %arg36[%c0_147, %c0_148] : memref<1x64xf32, #tpu.memory_space<vmem>>, vector<1x64xf32>
    %290 = arith.truncf %286 : vector<8x64xf32> to vector<8x64xbf16>
    %cst_149 = arith.constant dense<0.000000e+00> : vector<8x64xf32>
    %291 = tpu.matmul %290, %287, %cst_149 {dimension_numbers = #tpu.dot_dimension_numbers<[1], [0], [0], [1], [0, 0, 1, 1], [], []>} : vector<8x64xbf16>, vector<64x64xbf16>, vector<8x64xf32> -> vector<8x64xf32>
    %cst_150 = arith.constant dense<0.000000e+00> : vector<64xf32>
    %292 = vector.multi_reduction <add>, %291, %cst_150 [0] : vector<8x64xf32> to vector<64xf32>
    %293 = vector.shape_cast %292 : vector<64xf32> to vector<1x64xf32>
    %cst_151 = arith.constant 8.000000e+00 : f32
    %294 = vector.broadcast %cst_151 : f32 to vector<1x64xf32>
    %295 = arith.divf %293, %294 : vector<1x64xf32>
    %296 = vector.broadcast %295 : vector<1x64xf32> to vector<8x64xf32>
    %297 = arith.subf %291, %296 : vector<8x64xf32>
    %298 = arith.mulf %297, %297 : vector<8x64xf32>
    %cst_152 = arith.constant dense<0.000000e+00> : vector<64xf32>
    %299 = vector.multi_reduction <add>, %298, %cst_152 [0] : vector<8x64xf32> to vector<64xf32>
    %300 = vector.shape_cast %299 : vector<64xf32> to vector<1x64xf32>
    %cst_153 = arith.constant 8.000000e+00 : f32
    %301 = vector.broadcast %cst_153 : f32 to vector<1x64xf32>
    %302 = arith.divf %300, %301 : vector<1x64xf32>
    %cst_154 = arith.constant 9.99999974E-6 : f32
    %303 = vector.broadcast %cst_154 : f32 to vector<1x64xf32>
    %304 = arith.addf %302, %303 : vector<1x64xf32>
    %305 = math.rsqrt %304 : vector<1x64xf32>
    %306 = arith.mulf %288, %305 : vector<1x64xf32>
    %307 = vector.broadcast %306 : vector<1x64xf32> to vector<8x64xf32>
    %308 = arith.mulf %297, %307 : vector<8x64xf32>
    %309 = vector.broadcast %289 : vector<1x64xf32> to vector<8x64xf32>
    %310 = arith.addf %308, %309 : vector<8x64xf32>
    %cst_155 = arith.constant 0.000000e+00 : f32
    %311 = vector.broadcast %cst_155 : f32 to vector<8x64xf32>
    %312 = arith.maximumf %310, %311 : vector<8x64xf32>
    %c0_156 = arith.constant 0 : index
    %c0_157 = arith.constant 0 : index
    %313 = vector.load %arg37[%c0_156, %c0_157] : memref<64x32xbf16, #tpu.memory_space<vmem>>, vector<64x32xbf16>
    %c0_158 = arith.constant 0 : index
    %c0_159 = arith.constant 0 : index
    %314 = vector.load %arg38[%c0_158, %c0_159] : memref<1x32xf32, #tpu.memory_space<vmem>>, vector<1x32xf32>
    %c0_160 = arith.constant 0 : index
    %c0_161 = arith.constant 0 : index
    %315 = vector.load %arg39[%c0_160, %c0_161] : memref<1x32xf32, #tpu.memory_space<vmem>>, vector<1x32xf32>
    %316 = arith.truncf %312 : vector<8x64xf32> to vector<8x64xbf16>
    %cst_162 = arith.constant dense<0.000000e+00> : vector<8x32xf32>
    %317 = tpu.matmul %316, %313, %cst_162 {dimension_numbers = #tpu.dot_dimension_numbers<[1], [0], [0], [1], [0, 0, 1, 1], [], []>} : vector<8x64xbf16>, vector<64x32xbf16>, vector<8x32xf32> -> vector<8x32xf32>
    %cst_163 = arith.constant dense<0.000000e+00> : vector<32xf32>
    %318 = vector.multi_reduction <add>, %317, %cst_163 [0] : vector<8x32xf32> to vector<32xf32>
    %319 = vector.shape_cast %318 : vector<32xf32> to vector<1x32xf32>
    %cst_164 = arith.constant 8.000000e+00 : f32
    %320 = vector.broadcast %cst_164 : f32 to vector<1x32xf32>
    %321 = arith.divf %319, %320 : vector<1x32xf32>
    %322 = vector.broadcast %321 : vector<1x32xf32> to vector<8x32xf32>
    %323 = arith.subf %317, %322 : vector<8x32xf32>
    %324 = arith.mulf %323, %323 : vector<8x32xf32>
    %cst_165 = arith.constant dense<0.000000e+00> : vector<32xf32>
    %325 = vector.multi_reduction <add>, %324, %cst_165 [0] : vector<8x32xf32> to vector<32xf32>
    %326 = vector.shape_cast %325 : vector<32xf32> to vector<1x32xf32>
    %cst_166 = arith.constant 8.000000e+00 : f32
    %327 = vector.broadcast %cst_166 : f32 to vector<1x32xf32>
    %328 = arith.divf %326, %327 : vector<1x32xf32>
    %cst_167 = arith.constant 9.99999974E-6 : f32
    %329 = vector.broadcast %cst_167 : f32 to vector<1x32xf32>
    %330 = arith.addf %328, %329 : vector<1x32xf32>
    %331 = math.rsqrt %330 : vector<1x32xf32>
    %332 = arith.mulf %314, %331 : vector<1x32xf32>
    %333 = vector.broadcast %332 : vector<1x32xf32> to vector<8x32xf32>
    %334 = arith.mulf %323, %333 : vector<8x32xf32>
    %335 = vector.broadcast %315 : vector<1x32xf32> to vector<8x32xf32>
    %336 = arith.addf %334, %335 : vector<8x32xf32>
    %cst_168 = arith.constant 0.000000e+00 : f32
    %337 = vector.broadcast %cst_168 : f32 to vector<8x32xf32>
    %338 = arith.maximumf %336, %337 : vector<8x32xf32>
    %c0_169 = arith.constant 0 : index
    %c0_170 = arith.constant 0 : index
    %339 = vector.load %arg40[%c0_169, %c0_170] : memref<1x32xf32, #tpu.memory_space<vmem>>, vector<1x32xf32>
    %c0_171 = arith.constant 0 : index
    %c0_172 = arith.constant 0 : index
    %340 = vector.load %arg41[%c0_171, %c0_172] : memref<1x1xf32, #tpu.memory_space<vmem>>, vector<1x1xf32>
    %341 = vector.broadcast %339 : vector<1x32xf32> to vector<8x32xf32>
    %342 = arith.mulf %338, %341 : vector<8x32xf32>
    %cst_173 = arith.constant dense<0.000000e+00> : vector<8xf32>
    %343 = vector.multi_reduction <add>, %342, %cst_173 [1] : vector<8x32xf32> to vector<8xf32>
    %344 = vector.shape_cast %343 : vector<8xf32> to vector<8x1xf32>
    %345 = vector.broadcast %340 : vector<1x1xf32> to vector<8x1xf32>
    %346 = arith.addf %344, %345 : vector<8x1xf32>
    %c0_174 = arith.constant 0 : index
    %c0_175 = arith.constant 0 : index
    %347 = vector.load %arg42[%c0_174, %c0_175] : memref<8x1xf32, #tpu.memory_space<vmem>>, vector<8x1xf32>
    tpu.vector_store %arg42[%c0_174, %c0_175], %346 {strides = array<i32>} : memref<8x1xf32, #tpu.memory_space<vmem>>, vector<8x1xf32>,
    return
  }
}

</mosaic_0001>

<llo_original>
// kernel: mlp_forward.1
$region0: #{mlp_forward.1}
  #allocation0 [shape = 'u32[]', space=smem, size = 0x4, offset = 0x4, fixed_abs, tag = 'smem constant byte address 0x4 - core index']
  #allocation1 [shape = 'u32[72,128]{1,0:T(1,128)}', space=vmem, size = 0x9000, scoped, tag = 'internal scratch']
  #allocation2 [shape = 'f32[1,1]{1,0:T(1,128)S(1)}', space=vmem, size = 0x200, scoped, tag = 'scoped memory for mlp_forward.1']
  %s0 = inlined_call_operand.smem [shape: u32[43], index: -1, kind: input, shape index: {}]
  %s1 = sld [smem:[%s0]]
  %s2 = scalar_lea.smem %s0, 1
  %s3 = sld [smem:[%s2]]
  %s4 = scalar_lea.smem %s0, 2
  %s5 = sld [smem:[%s4]]
  %s6 = scalar_lea.smem %s0, 3
  %s7 = sld [smem:[%s6]]
  %s8 = scalar_lea.smem %s0, 4
  %s9 = sld [smem:[%s8]]
  %s10 = scalar_lea.smem %s0, 5
  %s11 = sld [smem:[%s10]]
  %s12 = scalar_lea.smem %s0, 6
  %s13 = sld [smem:[%s12]]
  %s14 = scalar_lea.smem %s0, 7
  %s15 = sld [smem:[%s14]]
  %s16 = scalar_lea.smem %s0, 8
  %s17 = sld [smem:[%s16]]
  %s18 = scalar_lea.smem %s0, 9
  %s19 = sld [smem:[%s18]]
  %s20 = scalar_lea.smem %s0, 10
  %s21 = sld [smem:[%s20]]
  %s22 = scalar_lea.smem %s0, 11
  %s23 = sld [smem:[%s22]]
  %s24 = scalar_lea.smem %s0, 12
  %s25 = sld [smem:[%s24]]
  %s26 = scalar_lea.smem %s0, 13
  %s27 = sld [smem:[%s26]]
  %s28 = scalar_lea.smem %s0, 14
  %s29 = sld [smem:[%s28]]
  %s30 = scalar_lea.smem %s0, 15
  %s31 = sld [smem:[%s30]]
  %s32 = scalar_lea.smem %s0, 16
  %s33 = sld [smem:[%s32]]
  %s34 = scalar_lea.smem %s0, 17
  %s35 = sld [smem:[%s34]]
  %s36 = scalar_lea.smem %s0, 18
  %s37 = sld [smem:[%s36]]
  %s38 = scalar_lea.smem %s0, 19
  %s39 = sld [smem:[%s38]]
  %s40 = scalar_lea.smem %s0, 20
  %s41 = sld [smem:[%s40]]
  %s42 = scalar_lea.smem %s0, 21
  %s43 = sld [smem:[%s42]]
  %s44 = scalar_lea.smem %s0, 22
  %s45 = sld [smem:[%s44]]
  %s46 = scalar_lea.smem %s0, 23
  %s47 = sld [smem:[%s46]]
  %s48 = scalar_lea.smem %s0, 24
  %s49 = sld [smem:[%s48]]
  %s50 = scalar_lea.smem %s0, 25
  %s51 = sld [smem:[%s50]]
  %s52 = scalar_lea.smem %s0, 26
  %s53 = sld [smem:[%s52]]
  %s54 = scalar_lea.smem %s0, 27
  %s55 = sld [smem:[%s54]]
  %s56 = scalar_lea.smem %s0, 28
  %s57 = sld [smem:[%s56]]
  %s58 = scalar_lea.smem %s0, 29
  %s59 = sld [smem:[%s58]]
  %s60 = scalar_lea.smem %s0, 30
  %s61 = sld [smem:[%s60]]
  %s62 = scalar_lea.smem %s0, 31
  %s63 = sld [smem:[%s62]]
  %s64 = scalar_lea.smem %s0, 32
  %s65 = sld [smem:[%s64]]
  %s66 = scalar_lea.smem %s0, 33
  %s67 = sld [smem:[%s66]]
  %s68 = scalar_lea.smem %s0, 34
  %s69 = sld [smem:[%s68]]
  %s70 = scalar_lea.smem %s0, 35
  %s71 = sld [smem:[%s70]]
  %s72 = scalar_lea.smem %s0, 36
  %s73 = sld [smem:[%s72]]
  %s74 = scalar_lea.smem %s0, 37
  %s75 = sld [smem:[%s74]]
  %s76 = scalar_lea.smem %s0, 38
  %s77 = sld [smem:[%s76]]
  %s78 = scalar_lea.smem %s0, 39
  %s79 = sld [smem:[%s78]]
  %s80 = scalar_lea.smem %s0, 40
  %s81 = sld [smem:[%s80]]
  %s82 = scalar_lea.smem %s0, 41
  %s83 = sld [smem:[%s82]]
  %s84 = scalar_lea.smem %s0, 42
  %s85 = sld [smem:[%s84]]
  %s86 = sld [smem:[#allocation0]]
  $region274: #{mlp_forward.1} parent=0
    _
  %s88 = ssub.s32 1, %s86
  %s89 = scalar_select 0, %s88, %s86
  %v90 = vstv %s83
  %91 = vst [vmem:[#allocation2] sm:$0x1] %v90
  $region1: #{mlp_forward.1} parent=0
    #allocation3 [shape = 'u8[512]{0}', space=vmem, size = 0x400, scoped, tag = 'input window, operand 2, single buffered']
    #allocation4 [shape = 's32[1]{0}', space=sflag, size = 0x4, scoped, tag = 'scoped memory for mlp_forward.1']
    #allocation5 [shape = 'u8[512]{0}', space=vmem, size = 0x400, scoped, tag = 'input window, operand 3, single buffered']
    #allocation6 [shape = 's32[1]{0}', space=sflag, size = 0x4, scoped, tag = 'scoped memory for mlp_forward.1']
    #allocation7 [shape = 'u8[512]{0}', space=vmem, size = 0x400, scoped, tag = 'input window, operand 5, single buffered']
    #allocation8 [shape = 'u8[512]{0}', space=vmem, size = 0x400, scoped, tag = 'input window, operand 6, single buffered']
    #allocation9 [shape = 's32[1]{0}', space=sflag, size = 0x4, scoped, tag = 'scoped memory for mlp_forward.1']
    #allocation10 [shape = 'u8[16384]{0}', space=vmem, size = 0x4000, scoped, tag = 'input window, operand 7, single buffered']
    #allocation11 [shape = 'u8[512]{0}', space=vmem, size = 0x400, scoped, tag = 'input window, operand 8, single buffered']
    #allocation12 [shape = 's32[1]{0}', space=sflag, size = 0x4, scoped, tag = 'scoped memory for mlp_forward.1']
    #allocation13 [shape = 'u8[512]{0}', space=vmem, size = 0x400, scoped, tag = 'input window, operand 9, single buffered']
    #allocation14 [shape = 'u8[512]{0}', space=vmem, size = 0x400, scoped, tag = 'input window, operand 11, single buffered']
    #allocation15 [shape = 's32[1]{0}', space=sflag, size = 0x4, scoped, tag = 'scoped memory for mlp_forward.1']
    #allocation16 [shape = 'u8[512]{0}', space=vmem, size = 0x400, scoped, tag = 'input window, operand 12, single buffered']
    #allocation17 [shape = 'u8[65536]{0}', space=vmem, size = 0x10000, scoped, tag = 'input window, operand 13, single buffered']
    #allocation18 [shape = 's32[1]{0}', space=sflag, size = 0x4, scoped, tag = 'scoped memory for mlp_forward.1']
    #allocation19 [shape = 'u8[1024]{0}', space=vmem, size = 0x400, scoped, tag = 'input window, operand 15, single buffered']
    #allocation20 [shape = 'u8[131072]{0}', space=vmem, size = 0x20000, scoped, tag = 'input window, operand 16, single buffered']
    #allocation21 [shape = 's32[1]{0}', space=sflag, size = 0x4, scoped, tag = 'scoped memory for mlp_forward.1']
    #allocation22 [shape = 'u8[1024]{0}', space=vmem, size = 0x400, scoped, tag = 'input window, operand 17, single buffered']
    #allocation23 [shape = 'u8[1024]{0}', space=vmem, size = 0x400, scoped, tag = 'input window, operand 18, single buffered']
    #allocation24 [shape = 's32[1]{0}', space=sflag, size = 0x4, scoped, tag = 'scoped memory for mlp_forward.1']
    #allocation25 [shape = 'u8[131072]{0}', space=vmem, size = 0x20000, scoped, tag = 'input window, operand 19, single buffered']
    #allocation26 [shape = 'u8[1024]{0}', space=vmem, size = 0x400, scoped, tag = 'input window, operand 20, single buffered']
    #allocation27 [shape = 's32[1]{0}', space=sflag, size = 0x4, scoped, tag = 'scoped memory for mlp_forward.1']
    #allocation28 [shape = 'u8[1024]{0}', space=vmem, size = 0x400, scoped, tag = 'input window, operand 21, single buffered']
    #allocation29 [shape = 'u8[131072]{0}', space=vmem, size = 0x20000, scoped, tag = 'input window, operand 22, single buffered']
    #allocation30 [shape = 's32[1]{0}', space=sflag, size = 0x4, scoped, tag = 'scoped memory for mlp_forward.1']
    #allocation31 [shape = 'u8[1024]{0}', space=vmem, size = 0x400, scoped, tag = 'input window, operand 23, single buffered']
    #allocation32 [shape = 'u8[1024]{0}', space=vmem, size = 0x400, scoped, tag = 'input window, operand 24, single buffered']
    #allocation33 [shape = 's32[1]{0}', space=sflag, size = 0x4, scoped, tag = 'scoped memory for mlp_forward.1']
    #allocation34 [shape = 'u8[65536]{0}', space=vmem, size = 0x10000, scoped, tag = 'input window, operand 25, single buffered']
    #allocation35 [shape = 'u8[512]{0}', space=vmem, size = 0x400, scoped, tag = 'input window, operand 26, single buffered']
    #allocation36 [shape = 's32[1]{0}', space=sflag, size = 0x4, scoped, tag = 'scoped memory for mlp_forward.1']
    #allocation37 [shape = 'u8[32768]{0}', space=vmem, size = 0x8000, scoped, tag = 'input window, operand 28, single buffered']
    #allocation38 [shape = 'u8[512]{0}', space=vmem, size = 0x400, scoped, tag = 'input window, operand 29, single buffered']
    #allocation39 [shape = 's32[1]{0}', space=sflag, size = 0x4, scoped, tag = 'scoped memory for mlp_forward.1']
    %92 = vsyncpa [#allocation4], 0
    %93 = vsyncpa [#allocation6], 0
    %94 = vsyncpa [#allocation9], 0
    %95 = vsyncpa [#allocation12], 0
    %96 = vsyncpa [#allocation15], 0
    %97 = vsyncpa [#allocation18], 0
    %98 = vsyncpa [#allocation21], 0
    %99 = vsyncpa [#allocation24], 0
    %100 = vsyncpa [#allocation27], 0
    %101 = vsyncpa [#allocation30], 0
    %102 = vsyncpa [#allocation33], 0
    %103 = vsyncpa [#allocation36], 0
    %104 = vsyncpa [#allocation39], 0
    // Predicated region
    $region2: #{mlp_forward.1} parent=1 // pred_check
      _
    $region3: #{mlp_forward.1} parent=1 // pred_check_branch
      %106 = sbr.rel (0) target = $region5
    $region4: #{mlp_forward.1} parent=1 // pred_region
      _
    $region5: #{mlp_forward.1} parent=1 // pred_fallthru
      _
    // Predicated region
    $region6: #{mlp_forward.1} parent=1 // pred_check
      _
    $region7: #{mlp_forward.1} parent=1 // pred_check_branch
      %108 = sbr.rel (0) target = $region9
    $region8: #{mlp_forward.1} parent=1 // pred_region
      _
    $region9: #{mlp_forward.1} parent=1 // pred_fallthru
      _
    // Predicated region
    $region10: #{mlp_forward.1} parent=1 // pred_check
      _
    $region11: #{mlp_forward.1} parent=1 // pred_check_branch
      %110 = sbr.rel (0) target = $region13
    $region12: #{mlp_forward.1} parent=1 // pred_region
      %112 = vsyncadd [#allocation4], 0
      %s114 = sshll.u32 %s5, 4
      %s115 = int_to_ptr.hbm [resolvable:$true] %s114
      %s116 = sshll.u32 [#allocation3], 4
      %s117 = int_to_ptr.vmem [resolvable:$true] %s116
      %119 = dma.hbm_to_vmem [thread:$0]  %s115, 16, %s117, [#allocation4]
    $region13: #{mlp_forward.1} parent=1 // pred_fallthru
      _
    // Predicated region
    $region14: #{mlp_forward.1} parent=1 // pred_check
      _
    $region15: #{mlp_forward.1} parent=1 // pred_check_branch
      %121 = sbr.rel (0) target = $region17
    $region16: #{mlp_forward.1} parent=1 // pred_region
      %123 = vsyncadd [#allocation6], 0
      %s125 = sshll.u32 %s7, 4
      %s126 = int_to_ptr.hbm [resolvable:$true] %s125
      %s127 = sshll.u32 [#allocation5], 4
      %s128 = int_to_ptr.vmem [resolvable:$true] %s127
      %130 = dma.hbm_to_vmem [thread:$0]  %s126, 16, %s128, [#allocation6]
    $region17: #{mlp_forward.1} parent=1 // pred_fallthru
      _
    // Predicated region
    $region18: #{mlp_forward.1} parent=1 // pred_check
      _
    $region19: #{mlp_forward.1} parent=1 // pred_check_branch
      %132 = sbr.rel (0) target = $region21
    $region20: #{mlp_forward.1} parent=1 // pred_region
      _
    $region21: #{mlp_forward.1} parent=1 // pred_fallthru
      _
    // Predicated region
    $region22: #{mlp_forward.1} parent=1 // pred_check
      _
    $region23: #{mlp_forward.1} parent=1 // pred_check_branch
      %134 = sbr.rel (0) target = $region25
    $region24: #{mlp_forward.1} parent=1 // pred_region
      %136 = vsyncadd [#allocation6], 0
      %s138 = sshll.u32 %s11, 4
      %s139 = int_to_ptr.hbm [resolvable:$true] %s138
      %s140 = sshll.u32 [#allocation7], 4
      %s141 = int_to_ptr.vmem [resolvable:$true] %s140
      %143 = dma.hbm_to_vmem [thread:$0]  %s139, 16, %s141, [#allocation6]
    $region25: #{mlp_forward.1} parent=1 // pred_fallthru
      _
    // Predicated region
    $region26: #{mlp_forward.1} parent=1 // pred_check
      _
    $region27: #{mlp_forward.1} parent=1 // pred_check_branch
      %145 = sbr.rel (0) target = $region29
    $region28: #{mlp_forward.1} parent=1 // pred_region
      %147 = vsyncadd [#allocation9], 0
      %s149 = sshll.u32 %s13, 4
      %s150 = int_to_ptr.hbm [resolvable:$true] %s149
      %s151 = sshll.u32 [#allocation8], 4
      %s152 = int_to_ptr.vmem [resolvable:$true] %s151
      %154 = dma.hbm_to_vmem [thread:$0]  %s150, 16, %s152, [#allocation9]
    $region29: #{mlp_forward.1} parent=1 // pred_fallthru
      _
    // Predicated region
    $region30: #{mlp_forward.1} parent=1 // pred_check
      _
    $region31: #{mlp_forward.1} parent=1 // pred_check_branch
      %156 = sbr.rel (0) target = $region33
    $region32: #{mlp_forward.1} parent=1 // pred_region
      %158 = vsyncadd [#allocation9], 0
      %s159 = sshll.u32 %s15, 4
      %s160 = int_to_ptr.hbm [resolvable:$true] %s159
      %s161 = sshll.u32 [#allocation10], 4
      %s162 = int_to_ptr.vmem [resolvable:$true] %s161
      %167 = dma.hbm_to_vmem [thread:$0]  %s160, 512, %s162, [#allocation9], 64, 64, 4
    $region33: #{mlp_forward.1} parent=1 // pred_fallthru
      _
    // Predicated region
    $region34: #{mlp_forward.1} parent=1 // pred_check
      _
    $region35: #{mlp_forward.1} parent=1 // pred_check_branch
      %169 = sbr.rel (0) target = $region37
    $region36: #{mlp_forward.1} parent=1 // pred_region
      %171 = vsyncadd [#allocation12], 0
      %s173 = sshll.u32 %s17, 4
      %s174 = int_to_ptr.hbm [resolvable:$true] %s173
      %s175 = sshll.u32 [#allocation11], 4
      %s176 = int_to_ptr.vmem [resolvable:$true] %s175
      %178 = dma.hbm_to_vmem [thread:$0]  %s174, 16, %s176, [#allocation12]
    $region37: #{mlp_forward.1} parent=1 // pred_fallthru
      _
    // Predicated region
    $region38: #{mlp_forward.1} parent=1 // pred_check
      _
    $region39: #{mlp_forward.1} parent=1 // pred_check_branch
      %180 = sbr.rel (0) target = $region41
    $region40: #{mlp_forward.1} parent=1 // pred_region
      %182 = vsyncadd [#allocation12], 0
      %s184 = sshll.u32 %s19, 4
      %s185 = int_to_ptr.hbm [resolvable:$true] %s184
      %s186 = sshll.u32 [#allocation13], 4
      %s187 = int_to_ptr.vmem [resolvable:$true] %s186
      %189 = dma.hbm_to_vmem [thread:$0]  %s185, 16, %s187, [#allocation12]
    $region41: #{mlp_forward.1} parent=1 // pred_fallthru
      _
    // Predicated region
    $region42: #{mlp_forward.1} parent=1 // pred_check
      _
    $region43: #{mlp_forward.1} parent=1 // pred_check_branch
      %191 = sbr.rel (0) target = $region45
    $region44: #{mlp_forward.1} parent=1 // pred_region
      _
    $region45: #{mlp_forward.1} parent=1 // pred_fallthru
      _
    // Predicated region
    $region46: #{mlp_forward.1} parent=1 // pred_check
      _
    $region47: #{mlp_forward.1} parent=1 // pred_check_branch
      %193 = sbr.rel (0) target = $region49
    $region48: #{mlp_forward.1} parent=1 // pred_region
      %195 = vsyncadd [#allocation15], 0
      %s197 = sshll.u32 %s23, 4
      %s198 = int_to_ptr.hbm [resolvable:$true] %s197
      %s199 = sshll.u32 [#allocation14], 4
      %s200 = int_to_ptr.vmem [resolvable:$true] %s199
      %202 = dma.hbm_to_vmem [thread:$0]  %s198, 16, %s200, [#allocation15]
    $region49: #{mlp_forward.1} parent=1 // pred_fallthru
      _
    // Predicated region
    $region50: #{mlp_forward.1} parent=1 // pred_check
      _
    $region51: #{mlp_forward.1} parent=1 // pred_check_branch
      %204 = sbr.rel (0) target = $region53
    $region52: #{mlp_forward.1} parent=1 // pred_region
      %206 = vsyncadd [#allocation15], 0
      %s208 = sshll.u32 %s25, 4
      %s209 = int_to_ptr.hbm [resolvable:$true] %s208
      %s210 = sshll.u32 [#allocation16], 4
      %s211 = int_to_ptr.vmem [resolvable:$true] %s210
      %213 = dma.hbm_to_vmem [thread:$0]  %s209, 16, %s211, [#allocation15]
    $region53: #{mlp_forward.1} parent=1 // pred_fallthru
      _
    // Predicated region
    $region54: #{mlp_forward.1} parent=1 // pred_check
      _
    $region55: #{mlp_forward.1} parent=1 // pred_check_branch
      %215 = sbr.rel (0) target = $region57
    $region56: #{mlp_forward.1} parent=1 // pred_region
      %217 = vsyncadd [#allocation18], 0
      %s218 = sshll.u32 %s27, 4
      %s219 = int_to_ptr.hbm [resolvable:$true] %s218
      %s220 = sshll.u32 [#allocation17], 4
      %s221 = int_to_ptr.vmem [resolvable:$true] %s220
      %226 = dma.hbm_to_vmem [thread:$0]  %s219, 2048, %s221, [#allocation18], 128, 128, 8
    $region57: #{mlp_forward.1} parent=1 // pred_fallthru
      _
    // Predicated region
    $region58: #{mlp_forward.1} parent=1 // pred_check
      _
    $region59: #{mlp_forward.1} parent=1 // pred_check_branch
      %228 = sbr.rel (0) target = $region61
    $region60: #{mlp_forward.1} parent=1 // pred_region
      _
    $region61: #{mlp_forward.1} parent=1 // pred_fallthru
      _
    // Predicated region
    $region62: #{mlp_forward.1} parent=1 // pred_check
      _
    $region63: #{mlp_forward.1} parent=1 // pred_check_branch
      %230 = sbr.rel (0) target = $region65
    $region64: #{mlp_forward.1} parent=1 // pred_region
      %232 = vsyncadd [#allocation18], 0
      %s234 = sshll.u32 %s31, 4
      %s235 = int_to_ptr.hbm [resolvable:$true] %s234
      %s236 = sshll.u32 [#allocation19], 4
      %s237 = int_to_ptr.vmem [resolvable:$true] %s236
      %239 = dma.hbm_to_vmem [thread:$0]  %s235, 32, %s237, [#allocation18]
    $region65: #{mlp_forward.1} parent=1 // pred_fallthru
      _
    // Predicated region
    $region66: #{mlp_forward.1} parent=1 // pred_check
      _
    $region67: #{mlp_forward.1} parent=1 // pred_check_branch
      %241 = sbr.rel (0) target = $region69
    $region68: #{mlp_forward.1} parent=1 // pred_region
      %243 = vsyncadd [#allocation21], 0
      %s244 = sshll.u32 %s33, 4
      %s245 = int_to_ptr.hbm [resolvable:$true] %s244
      %s246 = sshll.u32 [#allocation20], 4
      %s247 = int_to_ptr.vmem [resolvable:$true] %s246
      %252 = dma.hbm_to_vmem [thread:$0]  %s245, 4096, %s247, [#allocation21], 128, 128, 8
    $region69: #{mlp_forward.1} parent=1 // pred_fallthru
      _
    // Predicated region
    $region70: #{mlp_forward.1} parent=1 // pred_check
      _
    $region71: #{mlp_forward.1} parent=1 // pred_check_branch
      %254 = sbr.rel (0) target = $region73
    $region72: #{mlp_forward.1} parent=1 // pred_region
      %256 = vsyncadd [#allocation21], 0
      %s258 = sshll.u32 %s35, 4
      %s259 = int_to_ptr.hbm [resolvable:$true] %s258
      %s260 = sshll.u32 [#allocation22], 4
      %s261 = int_to_ptr.vmem [resolvable:$true] %s260
      %263 = dma.hbm_to_vmem [thread:$0]  %s259, 32, %s261, [#allocation21]
    $region73: #{mlp_forward.1} parent=1 // pred_fallthru
      _
    // Predicated region
    $region74: #{mlp_forward.1} parent=1 // pred_check
      _
    $region75: #{mlp_forward.1} parent=1 // pred_check_branch
      %265 = sbr.rel (0) target = $region77
    $region76: #{mlp_forward.1} parent=1 // pred_region
      %267 = vsyncadd [#allocation24], 0
      %s269 = sshll.u32 %s37, 4
      %s270 = int_to_ptr.hbm [resolvable:$true] %s269
      %s271 = sshll.u32 [#allocation23], 4
      %s272 = int_to_ptr.vmem [resolvable:$true] %s271
      %274 = dma.hbm_to_vmem [thread:$0]  %s270, 32, %s272, [#allocation24]
    $region77: #{mlp_forward.1} parent=1 // pred_fallthru
      _
    // Predicated region
    $region78: #{mlp_forward.1} parent=1 // pred_check
      _
    $region79: #{mlp_forward.1} parent=1 // pred_check_branch
      %276 = sbr.rel (0) target = $region81
    $region80: #{mlp_forward.1} parent=1 // pred_region
      %278 = vsyncadd [#allocation24], 0
      %s279 = sshll.u32 %s39, 4
      %s280 = int_to_ptr.hbm [resolvable:$true] %s279
      %s281 = sshll.u32 [#allocation25], 4
      %s282 = int_to_ptr.vmem [resolvable:$true] %s281
      %287 = dma.hbm_to_vmem [thread:$0]  %s280, 4096, %s282, [#allocation24], 128, 128, 8
    $region81: #{mlp_forward.1} parent=1 // pred_fallthru
      _
    // Predicated region
    $region82: #{mlp_forward.1} parent=1 // pred_check
      _
    $region83: #{mlp_forward.1} parent=1 // pred_check_branch
      %289 = sbr.rel (0) target = $region85
    $region84: #{mlp_forward.1} parent=1 // pred_region
      %291 = vsyncadd [#allocation27], 0
      %s293 = sshll.u32 %s41, 4
      %s294 = int_to_ptr.hbm [resolvable:$true] %s293
      %s295 = sshll.u32 [#allocation26], 4
      %s296 = int_to_ptr.vmem [resolvable:$true] %s295
      %298 = dma.hbm_to_vmem [thread:$0]  %s294, 32, %s296, [#allocation27]
    $region85: #{mlp_forward.1} parent=1 // pred_fallthru
      _
    // Predicated region
    $region86: #{mlp_forward.1} parent=1 // pred_check
      _
    $region87: #{mlp_forward.1} parent=1 // pred_check_branch
      %300 = sbr.rel (0) target = $region89
    $region88: #{mlp_forward.1} parent=1 // pred_region
      %302 = vsyncadd [#allocation27], 0
      %s304 = sshll.u32 %s43, 4
      %s305 = int_to_ptr.hbm [resolvable:$true] %s304
      %s306 = sshll.u32 [#allocation28], 4
      %s307 = int_to_ptr.vmem [resolvable:$true] %s306
      %309 = dma.hbm_to_vmem [thread:$0]  %s305, 32, %s307, [#allocation27]
    $region89: #{mlp_forward.1} parent=1 // pred_fallthru
      _
    // Predicated region
    $region90: #{mlp_forward.1} parent=1 // pred_check
      _
    $region91: #{mlp_forward.1} parent=1 // pred_check_branch
      %311 = sbr.rel (0) target = $region93
    $region92: #{mlp_forward.1} parent=1 // pred_region
      %313 = vsyncadd [#allocation30], 0
      %s314 = sshll.u32 %s45, 4
      %s315 = int_to_ptr.hbm [resolvable:$true] %s314
      %s316 = sshll.u32 [#allocation29], 4
      %s317 = int_to_ptr.vmem [resolvable:$true] %s316
      %322 = dma.hbm_to_vmem [thread:$0]  %s315, 4096, %s317, [#allocation30], 128, 128, 8
    $region93: #{mlp_forward.1} parent=1 // pred_fallthru
      _
    // Predicated region
    $region94: #{mlp_forward.1} parent=1 // pred_check
      _
    $region95: #{mlp_forward.1} parent=1 // pred_check_branch
      %324 = sbr.rel (0) target = $region97
    $region96: #{mlp_forward.1} parent=1 // pred_region
      %326 = vsyncadd [#allocation30], 0
      %s328 = sshll.u32 %s47, 4
      %s329 = int_to_ptr.hbm [resolvable:$true] %s328
      %s330 = sshll.u32 [#allocation31], 4
      %s331 = int_to_ptr.vmem [resolvable:$true] %s330
      %333 = dma.hbm_to_vmem [thread:$0]  %s329, 32, %s331, [#allocation30]
    $region97: #{mlp_forward.1} parent=1 // pred_fallthru
      _
    // Predicated region
    $region98: #{mlp_forward.1} parent=1 // pred_check
      _
    $region99: #{mlp_forward.1} parent=1 // pred_check_branch
      %335 = sbr.rel (0) target = $region101
    $region100: #{mlp_forward.1} parent=1 // pred_region
      %337 = vsyncadd [#allocation33], 0
      %s339 = sshll.u32 %s49, 4
      %s340 = int_to_ptr.hbm [resolvable:$true] %s339
      %s341 = sshll.u32 [#allocation32], 4
      %s342 = int_to_ptr.vmem [resolvable:$true] %s341
      %344 = dma.hbm_to_vmem [thread:$0]  %s340, 32, %s342, [#allocation33]
    $region101: #{mlp_forward.1} parent=1 // pred_fallthru
      _
    // Predicated region
    $region102: #{mlp_forward.1} parent=1 // pred_check
      _
    $region103: #{mlp_forward.1} parent=1 // pred_check_branch
      %346 = sbr.rel (0) target = $region105
    $region104: #{mlp_forward.1} parent=1 // pred_region
      %348 = vsyncadd [#allocation33], 0
      %s349 = sshll.u32 %s51, 4
      %s350 = int_to_ptr.hbm [resolvable:$true] %s349
      %s351 = sshll.u32 [#allocation34], 4
      %s352 = int_to_ptr.vmem [resolvable:$true] %s351
      %357 = dma.hbm_to_vmem [thread:$0]  %s350, 2048, %s352, [#allocation33], 64, 64, 4
    $region105: #{mlp_forward.1} parent=1 // pred_fallthru
      _
    // Predicated region
    $region106: #{mlp_forward.1} parent=1 // pred_check
      _
    $region107: #{mlp_forward.1} parent=1 // pred_check_branch
      %359 = sbr.rel (0) target = $region109
    $region108: #{mlp_forward.1} parent=1 // pred_region
      %361 = vsyncadd [#allocation36], 0
      %s363 = sshll.u32 %s53, 4
      %s364 = int_to_ptr.hbm [resolvable:$true] %s363
      %s365 = sshll.u32 [#allocation35], 4
      %s366 = int_to_ptr.vmem [resolvable:$true] %s365
      %368 = dma.hbm_to_vmem [thread:$0]  %s364, 16, %s366, [#allocation36]
    $region109: #{mlp_forward.1} parent=1 // pred_fallthru
      _
    // Predicated region
    $region110: #{mlp_forward.1} parent=1 // pred_check
      _
    $region111: #{mlp_forward.1} parent=1 // pred_check_branch
      %370 = sbr.rel (0) target = $region113
    $region112: #{mlp_forward.1} parent=1 // pred_region
      _
    $region113: #{mlp_forward.1} parent=1 // pred_fallthru
      _
    // Predicated region
    $region114: #{mlp_forward.1} parent=1 // pred_check
      _
    $region115: #{mlp_forward.1} parent=1 // pred_check_branch
      %372 = sbr.rel (0) target = $region117
    $region116: #{mlp_forward.1} parent=1 // pred_region
      %374 = vsyncadd [#allocation36], 0
      %s375 = sshll.u32 %s57, 4
      %s376 = int_to_ptr.hbm [resolvable:$true] %s375
      %s377 = sshll.u32 [#allocation37], 4
      %s378 = int_to_ptr.vmem [resolvable:$true] %s377
      %383 = dma.hbm_to_vmem [thread:$0]  %s376, 1024, %s378, [#allocation36], 64, 64, 4
    $region117: #{mlp_forward.1} parent=1 // pred_fallthru
      _
    // Predicated region
    $region118: #{mlp_forward.1} parent=1 // pred_check
      _
    $region119: #{mlp_forward.1} parent=1 // pred_check_branch
      %385 = sbr.rel (0) target = $region121
    $region120: #{mlp_forward.1} parent=1 // pred_region
      %387 = vsyncadd [#allocation39], 0
      %s389 = sshll.u32 %s59, 4
      %s390 = int_to_ptr.hbm [resolvable:$true] %s389
      %s391 = sshll.u32 [#allocation38], 4
      %s392 = int_to_ptr.vmem [resolvable:$true] %s391
      %394 = dma.hbm_to_vmem [thread:$0]  %s390, 16, %s392, [#allocation39]
    $region121: #{mlp_forward.1} parent=1 // pred_fallthru
      _
    // Predicated region
    $region122: #{mlp_forward.1} parent=1 // pred_check
      _
    $region123: #{mlp_forward.1} parent=1 // pred_check_branch
      %396 = sbr.rel (0) target = $region125
    $region124: #{mlp_forward.1} parent=1 // pred_region
      _
    $region125: #{mlp_forward.1} parent=1 // pred_fallthru
      _
    // Predicated region
    $region126: #{mlp_forward.1} parent=1 // pred_check
      _
    $region127: #{mlp_forward.1} parent=1 // pred_check_branch
      %398 = sbr.rel (0) target = $region129
    $region128: #{mlp_forward.1} parent=1 // pred_region
      _
    $region129: #{mlp_forward.1} parent=1 // pred_fallthru
      _
    // Predicated region
    $region130: #{mlp_forward.1} parent=1 // pred_check
      _
    $region131: #{mlp_forward.1} parent=1 // pred_check_branch
      %400 = sbr.rel (0) target = $region133
    $region132: #{mlp_forward.1} parent=1 // pred_region
      _
    $region133: #{mlp_forward.1} parent=1 // pred_fallthru
      _
    // Predicated region
    $region134: #{mlp_forward.1} parent=1 // pred_check
      _
    $region135: #{mlp_forward.1} parent=1 // pred_check_branch
      %402 = sbr.rel (0) target = $region137
    $region136: #{mlp_forward.1} parent=1 // pred_region
      _
    $region137: #{mlp_forward.1} parent=1 // pred_fallthru
      _
    // Predicated region
    $region138: #{mlp_forward.1} parent=1 // pred_check
      _
    $region139: #{mlp_forward.1} parent=1 // pred_check_branch
      %404 = sbr.rel (0) target = $region141
    $region140: #{mlp_forward.1} parent=1 // pred_region
      _
    $region141: #{mlp_forward.1} parent=1 // pred_fallthru
      _
    // Predicated region
    $region142: #{mlp_forward.1} parent=1 // pred_check
      _
    $region143: #{mlp_forward.1} parent=1 // pred_check_branch
      %406 = sbr.rel (0) target = $region145
    $region144: #{mlp_forward.1} parent=1 // pred_region
      _
    $region145: #{mlp_forward.1} parent=1 // pred_fallthru
      _
    // Predicated region
    $region146: #{mlp_forward.1} parent=1 // pred_check
      _
    $region147: #{mlp_forward.1} parent=1 // pred_check_branch
      %408 = sbr.rel (0) target = $region149
    $region148: #{mlp_forward.1} parent=1 // pred_region
      _
    $region149: #{mlp_forward.1} parent=1 // pred_fallthru
      _
    // Predicated region
    $region150: #{mlp_forward.1} parent=1 // pred_check
      _
    $region151: #{mlp_forward.1} parent=1 // pred_check_branch
      %410 = sbr.rel (0) target = $region153
    $region152: #{mlp_forward.1} parent=1 // pred_region
      _
    $region153: #{mlp_forward.1} parent=1 // pred_fallthru
      _
    // Predicated region
    $region154: #{mlp_forward.1} parent=1 // pred_check
      _
    $region155: #{mlp_forward.1} parent=1 // pred_check_branch
      %412 = sbr.rel (0) target = $region157
    $region156: #{mlp_forward.1} parent=1 // pred_region
      _
    $region157: #{mlp_forward.1} parent=1 // pred_fallthru
      _
    // Predicated region
    $region158: #{mlp_forward.1} parent=1 // pred_check
      _
    $region159: #{mlp_forward.1} parent=1 // pred_check_branch
      %414 = sbr.rel (0) target = $region161
    $region160: #{mlp_forward.1} parent=1 // pred_region
      _
    $region161: #{mlp_forward.1} parent=1 // pred_fallthru
      _
    // Predicated region
    $region162: #{mlp_forward.1} parent=1 // pred_check
      _
    $region163: #{mlp_forward.1} parent=1 // pred_check_branch
      %416 = sbr.rel (0) target = $region165
    $region164: #{mlp_forward.1} parent=1 // pred_region
      _
    $region165: #{mlp_forward.1} parent=1 // pred_fallthru
      _
    // Predicated region
    $region166: #{mlp_forward.1} parent=1 // pred_check
      _
    $region167: #{mlp_forward.1} parent=1 // pred_check_branch
      %418 = sbr.rel (0) target = $region169
    $region168: #{mlp_forward.1} parent=1 // pred_region
      _
    $region169: #{mlp_forward.1} parent=1 // pred_fallthru
      _
    // Predicated region
    $region170: #{mlp_forward.1} parent=1 // pred_check
      _
    $region171: #{mlp_forward.1} parent=1 // pred_check_branch
      %420 = sbr.rel (0) target = $region173
    $region172: #{mlp_forward.1} parent=1 // pred_region
      %422 = dma.done [#allocation4], 16
    $region173: #{mlp_forward.1} parent=1 // pred_fallthru
      _
    // Predicated region
    $region174: #{mlp_forward.1} parent=1 // pred_check
      _
    $region175: #{mlp_forward.1} parent=1 // pred_check_branch
      %424 = sbr.rel (0) target = $region177
    $region176: #{mlp_forward.1} parent=1 // pred_region
      %426 = dma.done [#allocation6], 16
    $region177: #{mlp_forward.1} parent=1 // pred_fallthru
      _
    // Predicated region
    $region178: #{mlp_forward.1} parent=1 // pred_check
      _
    $region179: #{mlp_forward.1} parent=1 // pred_check_branch
      %428 = sbr.rel (0) target = $region181
    $region180: #{mlp_forward.1} parent=1 // pred_region
      %430 = dma.done [#allocation6], 16
    $region181: #{mlp_forward.1} parent=1 // pred_fallthru
      _
    // Predicated region
    $region182: #{mlp_forward.1} parent=1 // pred_check
      _
    $region183: #{mlp_forward.1} parent=1 // pred_check_branch
      %432 = sbr.rel (0) target = $region185
    $region184: #{mlp_forward.1} parent=1 // pred_region
      %434 = dma.done [#allocation9], 16
    $region185: #{mlp_forward.1} parent=1 // pred_fallthru
      _
    // Predicated region
    $region186: #{mlp_forward.1} parent=1 // pred_check
      _
    $region187: #{mlp_forward.1} parent=1 // pred_check_branch
      %436 = sbr.rel (0) target = $region189
    $region188: #{mlp_forward.1} parent=1 // pred_region
      %438 = dma.done [#allocation9], 512
    $region189: #{mlp_forward.1} parent=1 // pred_fallthru
      _
    // Predicated region
    $region190: #{mlp_forward.1} parent=1 // pred_check
      _
    $region191: #{mlp_forward.1} parent=1 // pred_check_branch
      %440 = sbr.rel (0) target = $region193
    $region192: #{mlp_forward.1} parent=1 // pred_region
      %442 = dma.done [#allocation12], 16
    $region193: #{mlp_forward.1} parent=1 // pred_fallthru
      _
    // Predicated region
    $region194: #{mlp_forward.1} parent=1 // pred_check
      _
    $region195: #{mlp_forward.1} parent=1 // pred_check_branch
      %444 = sbr.rel (0) target = $region197
    $region196: #{mlp_forward.1} parent=1 // pred_region
      %446 = dma.done [#allocation12], 16
    $region197: #{mlp_forward.1} parent=1 // pred_fallthru
      _
    // Predicated region
    $region198: #{mlp_forward.1} parent=1 // pred_check
      _
    $region199: #{mlp_forward.1} parent=1 // pred_check_branch
      %448 = sbr.rel (0) target = $region201
    $region200: #{mlp_forward.1} parent=1 // pred_region
      %450 = dma.done [#allocation15], 16
    $region201: #{mlp_forward.1} parent=1 // pred_fallthru
      _
    // Predicated region
    $region202: #{mlp_forward.1} parent=1 // pred_check
      _
    $region203: #{mlp_forward.1} parent=1 // pred_check_branch
      %452 = sbr.rel (0) target = $region205
    $region204: #{mlp_forward.1} parent=1 // pred_region
      %454 = dma.done [#allocation15], 16
    $region205: #{mlp_forward.1} parent=1 // pred_fallthru
      _
    // Predicated region
    $region206: #{mlp_forward.1} parent=1 // pred_check
      _
    $region207: #{mlp_forward.1} parent=1 // pred_check_branch
      %456 = sbr.rel (0) target = $region209
    $region208: #{mlp_forward.1} parent=1 // pred_region
      %458 = dma.done [#allocation18], 2048
    $region209: #{mlp_forward.1} parent=1 // pred_fallthru
      _
    // Predicated region
    $region210: #{mlp_forward.1} parent=1 // pred_check
      _
    $region211: #{mlp_forward.1} parent=1 // pred_check_branch
      %460 = sbr.rel (0) target = $region213
    $region212: #{mlp_forward.1} parent=1 // pred_region
      %462 = dma.done [#allocation18], 32
    $region213: #{mlp_forward.1} parent=1 // pred_fallthru
      _
    // Predicated region
    $region214: #{mlp_forward.1} parent=1 // pred_check
      _
    $region215: #{mlp_forward.1} parent=1 // pred_check_branch
      %464 = sbr.rel (0) target = $region217
    $region216: #{mlp_forward.1} parent=1 // pred_region
      %466 = dma.done [#allocation21], 4096
    $region217: #{mlp_forward.1} parent=1 // pred_fallthru
      _
    // Predicated region
    $region218: #{mlp_forward.1} parent=1 // pred_check
      _
    $region219: #{mlp_forward.1} parent=1 // pred_check_branch
      %468 = sbr.rel (0) target = $region221
    $region220: #{mlp_forward.1} parent=1 // pred_region
      %470 = dma.done [#allocation21], 32
    $region221: #{mlp_forward.1} parent=1 // pred_fallthru
      _
    // Predicated region
    $region222: #{mlp_forward.1} parent=1 // pred_check
      _
    $region223: #{mlp_forward.1} parent=1 // pred_check_branch
      %472 = sbr.rel (0) target = $region225
    $region224: #{mlp_forward.1} parent=1 // pred_region
      %474 = dma.done [#allocation24], 32
    $region225: #{mlp_forward.1} parent=1 // pred_fallthru
      _
    // Predicated region
    $region226: #{mlp_forward.1} parent=1 // pred_check
      _
    $region227: #{mlp_forward.1} parent=1 // pred_check_branch
      %476 = sbr.rel (0) target = $region229
    $region228: #{mlp_forward.1} parent=1 // pred_region
      %478 = dma.done [#allocation24], 4096
    $region229: #{mlp_forward.1} parent=1 // pred_fallthru
      _
    // Predicated region
    $region230: #{mlp_forward.1} parent=1 // pred_check
      _
    $region231: #{mlp_forward.1} parent=1 // pred_check_branch
      %480 = sbr.rel (0) target = $region233
    $region232: #{mlp_forward.1} parent=1 // pred_region
      %482 = dma.done [#allocation27], 32
    $region233: #{mlp_forward.1} parent=1 // pred_fallthru
      _
    // Predicated region
    $region234: #{mlp_forward.1} parent=1 // pred_check
      _
    $region235: #{mlp_forward.1} parent=1 // pred_check_branch
      %484 = sbr.rel (0) target = $region237
    $region236: #{mlp_forward.1} parent=1 // pred_region
      %486 = dma.done [#allocation27], 32
    $region237: #{mlp_forward.1} parent=1 // pred_fallthru
      _
    // Predicated region
    $region238: #{mlp_forward.1} parent=1 // pred_check
      _
    $region239: #{mlp_forward.1} parent=1 // pred_check_branch
      %488 = sbr.rel (0) target = $region241
    $region240: #{mlp_forward.1} parent=1 // pred_region
      %490 = dma.done [#allocation30], 4096
    $region241: #{mlp_forward.1} parent=1 // pred_fallthru
      _
    // Predicated region
    $region242: #{mlp_forward.1} parent=1 // pred_check
      _
    $region243: #{mlp_forward.1} parent=1 // pred_check_branch
      %492 = sbr.rel (0) target = $region245
    $region244: #{mlp_forward.1} parent=1 // pred_region
      %494 = dma.done [#allocation30], 32
    $region245: #{mlp_forward.1} parent=1 // pred_fallthru
      _
    // Predicated region
    $region246: #{mlp_forward.1} parent=1 // pred_check
      _
    $region247: #{mlp_forward.1} parent=1 // pred_check_branch
      %496 = sbr.rel (0) target = $region249
    $region248: #{mlp_forward.1} parent=1 // pred_region
      %498 = dma.done [#allocation33], 32
    $region249: #{mlp_forward.1} parent=1 // pred_fallthru
      _
    // Predicated region
    $region250: #{mlp_forward.1} parent=1 // pred_check
      _
    $region251: #{mlp_forward.1} parent=1 // pred_check_branch
      %500 = sbr.rel (0) target = $region253
    $region252: #{mlp_forward.1} parent=1 // pred_region
      %502 = dma.done [#allocation33], 2048
    $region253: #{mlp_forward.1} parent=1 // pred_fallthru
      _
    // Predicated region
    $region254: #{mlp_forward.1} parent=1 // pred_check
      _
    $region255: #{mlp_forward.1} parent=1 // pred_check_branch
      %504 = sbr.rel (0) target = $region257
    $region256: #{mlp_forward.1} parent=1 // pred_region
      %506 = dma.done [#allocation36], 16
    $region257: #{mlp_forward.1} parent=1 // pred_fallthru
      _
    // Predicated region
    $region258: #{mlp_forward.1} parent=1 // pred_check
      _
    $region259: #{mlp_forward.1} parent=1 // pred_check_branch
      %508 = sbr.rel (0) target = $region261
    $region260: #{mlp_forward.1} parent=1 // pred_region
      %510 = dma.done [#allocation36], 1024
    $region261: #{mlp_forward.1} parent=1 // pred_fallthru
      _
    // Predicated region
    $region262: #{mlp_forward.1} parent=1 // pred_check
      _
    $region263: #{mlp_forward.1} parent=1 // pred_check_branch
      %512 = sbr.rel (0) target = $region265
    $region264: #{mlp_forward.1} parent=1 // pred_region
      %514 = dma.done [#allocation39], 16
    $region265: #{mlp_forward.1} parent=1 // pred_fallthru
      _
    %v516 = vld [vmem:[%s1] sm:$0xff]
    %v517 = vld [vmem:[%s3] sm:$0xf]
    %v518 = vld [vmem:[%s3 + $0x4] sm:$0xf]
    %v519 = vld [vmem:[%s3 + $0x8] sm:$0xf]
    %v520 = vld [vmem:[%s3 + $0xc] sm:$0xf]
    %v521 = vld [vmem:[#allocation3] sm:$0x1]
    %v522 = vld [vmem:[#allocation5] sm:$0x1]
    %v523 = vpack.c.bf16 %v516, %v516
    %v528 = vunpack.c.l.b16 %v517
    %v529 = vunpack.c.l.b16 %v518
    %v530 = vunpack.c.l.b16 %v519
    %v531 = vunpack.c.l.b16 %v520
    %v532 = vpack.c.b16 %v529, %v528
    %v533 = vpack.c.b16 %v531, %v530
    %vm536 = vcmask 261120
    %v538 = vsel %vm536, %v523, 0
    %540 = vmatpush.bf16.msra.mxu0 0
    %541 = vmatpush.bf16.msra.mxu0 0
    %542 = vmatpush.bf16.msra.mxu0 0
    %543 = vmatpush.bf16.msra.mxu0 0
    %544 = vmatpush.bf16.msra.mxu0 0
    %545 = vmatpush.bf16.msra.mxu0 0
    %546 = vmatpush.bf16.msra.mxu0 %v533
    %547 = vmatpush.bf16.msra.mxu0 %v532
    %548 = vmatmul.bf16.gmra.mxu0 %v538
    %v549 = vpop.f32.mrf.mxu0
    %v550 = vadd.f32 0.0, %v549
    %v551 = vpop.f32.mrf.mxu0
    %552 = vdwg.mxu0
    %vm553 = vcmask 523264
    %v554 = vsel %vm553, %v550, 0.0
    %v555 = vrot.slane %v554, 4
    %v556 = vadd.f32 %v554, %v555
    %v557 = vrot.slane %v556, 2
    %v558 = vadd.f32 %v556, %v557
    %v559 = vrot.slane %v558, 1
    %v560 = vadd.f32 %v558, %v559
    %v561 = vrcp.pop 8.0
    %v562 = vmul.f32 8.0, %v561
    %v563 = vsub.f32 1.0, %v562
    %v564 = vmul.f32 %v561, %v563
    %v565 = vadd.f32 %v561, %v564
    %vm566 = vweird.f32 %v561
    %v567 = vsel %vm566, %v561, %v565
    %v568 = vmul.f32 %v560, %v567
    %v569 = vsub.f32 %v550, %v568
    %v570 = vmul.f32 %v569, %v569
    %v571 = vsel %vm553, %v570, 0.0
    %v572 = vrot.slane %v571, 4
    %v573 = vadd.f32 %v571, %v572
    %v574 = vrot.slane %v573, 2
    %v575 = vadd.f32 %v573, %v574
    %v576 = vrot.slane %v575, 1
    %v577 = vadd.f32 %v575, %v576
    %v578 = vmul.f32 %v577, %v567
    %v579 = vadd.f32 %v578, 1e-05
    %v580 = vrsqrt.pop %v579
    %v581 = vmul.f32 %v580, %v579
    %v582 = vmul.f32 %v581, %v580
    %v583 = vmul.f32 0.5, %v582
    %v584 = vsub.f32 1.5, %v583
    %v585 = vmul.f32 %v580, %v584
    %vm586 = vweird.f32 %v579
    %vm587 = vweird.f32 %v580
    %vm588 = vmor %vm586, %vm587
    %v589 = vsel %vm588, %v580, %v585
    %v590 = vmul.f32 %v521, %v589
    %v592 = vperm.slane %v590, 0
    %v594 = vmul.f32 %v569, %v592
    %v596 = vperm.slane %v522, 0
    %v598 = vadd.f32 %v594, %v596
    %v599 = vmax.f32 %v598, 0.0
    %v600 = vld [vmem:[%s9] sm:$0xf]
    %v601 = vld [vmem:[%s9 + $0x4] sm:$0xf]
    %v602 = vld [vmem:[%s9 + $0x8] sm:$0xf]
    %v603 = vld [vmem:[%s9 + $0xc] sm:$0xf]
    %v604 = vld [vmem:[%s9 + $0x10] sm:$0xf]
    %v605 = vld [vmem:[%s9 + $0x14] sm:$0xf]
    %v606 = vld [vmem:[%s9 + $0x18] sm:$0xf]
    %v607 = vld [vmem:[%s9 + $0x1c] sm:$0xf]
    %v608 = vld [vmem:[#allocation7] sm:$0x1]
    %v609 = vld [vmem:[#allocation8] sm:$0x1]
    %v610 = vpack.c.bf16 %v599, %v599
    %v619 = vunpack.c.l.b16 %v600
    %v620 = vunpack.c.l.b16 %v601
    %v621 = vunpack.c.l.b16 %v602
    %v622 = vunpack.c.l.b16 %v603
    %v623 = vunpack.c.l.b16 %v604
    %v624 = vunpack.c.l.b16 %v605
    %v625 = vunpack.c.l.b16 %v606
    %v626 = vunpack.c.l.b16 %v607
    %v627 = vpack.c.b16 %v620, %v619
    %v628 = vpack.c.b16 %v622, %v621
    %v629 = vpack.c.b16 %v624, %v623
    %v630 = vpack.c.b16 %v626, %v625
    %v636 = vsel %vm553, %v610, 0
    %638 = vmatpush.bf16.msra.mxu0 0
    %639 = vmatpush.bf16.msra.mxu0 0
    %640 = vmatpush.bf16.msra.mxu0 0
    %641 = vmatpush.bf16.msra.mxu0 0
    %642 = vmatpush.bf16.msra.mxu0 %v630
    %643 = vmatpush.bf16.msra.mxu0 %v629
    %644 = vmatpush.bf16.msra.mxu0 %v628
    %645 = vmatpush.bf16.msra.mxu0 %v627
    %646 = vmatmul.bf16.gmra.mxu0 %v636
    %v647 = vpop.f32.mrf.mxu0
    %v648 = vadd.f32 0.0, %v647
    %v649 = vpop.f32.mrf.mxu0
    %650 = vdwg.mxu0
    %v651 = vsel %vm553, %v648, 0.0
    %v652 = vrot.slane %v651, 4
    %v653 = vadd.f32 %v651, %v652
    %v654 = vrot.slane %v653, 2
    %v655 = vadd.f32 %v653, %v654
    %v656 = vrot.slane %v655, 1
    %v657 = vadd.f32 %v655, %v656
    %v658 = vmul.f32 %v657, %v567
    %v659 = vsub.f32 %v648, %v658
    %v660 = vmul.f32 %v659, %v659
    %v661 = vsel %vm553, %v660, 0.0
    %v662 = vrot.slane %v661, 4
    %v663 = vadd.f32 %v661, %v662
    %v664 = vrot.slane %v663, 2
    %v665 = vadd.f32 %v663, %v664
    %v666 = vrot.slane %v665, 1
    %v667 = vadd.f32 %v665, %v666
    %v668 = vmul.f32 %v667, %v567
    %v669 = vadd.f32 %v668, 1e-05
    %v670 = vrsqrt.pop %v669
    %v671 = vmul.f32 %v670, %v669
    %v672 = vmul.f32 %v671, %v670
    %v673 = vmul.f32 0.5, %v672
    %v674 = vsub.f32 1.5, %v673
    %v675 = vmul.f32 %v670, %v674
    %vm676 = vweird.f32 %v669
    %vm677 = vweird.f32 %v670
    %vm678 = vmor %vm676, %vm677
    %v679 = vsel %vm678, %v670, %v675
    %v680 = vmul.f32 %v608, %v679
    %v682 = vperm.slane %v680, 0
    %v684 = vmul.f32 %v659, %v682
    %v686 = vperm.slane %v609, 0
    %v688 = vadd.f32 %v684, %v686
    %v689 = vmax.f32 %v688, 0.0
    %v690 = vld [vmem:[#allocation10] sm:$0xf]
    %v691 = vld [vmem:[#allocation10 + $0x4] sm:$0xf]
    %v692 = vld [vmem:[#allocation10 + $0x8] sm:$0xf]
    %v693 = vld [vmem:[#allocation10 + $0xc] sm:$0xf]
    %v694 = vld [vmem:[#allocation10 + $0x10] sm:$0xf]
    %v695 = vld [vmem:[#allocation10 + $0x14] sm:$0xf]
    %v696 = vld [vmem:[#allocation10 + $0x18] sm:$0xf]
    %v697 = vld [vmem:[#allocation10 + $0x1c] sm:$0xf]
    %v698 = vld [vmem:[#allocation11] sm:$0x1]
    %v699 = vld [vmem:[#allocation13] sm:$0x1]
    %v700 = vpack.c.bf16 %v689, %v689
    %v709 = vunpack.c.l.b16 %v690
    %v710 = vunpack.c.l.b16 %v691
    %v711 = vunpack.c.l.b16 %v692
    %v712 = vunpack.c.l.b16 %v693
    %v713 = vunpack.c.l.b16 %v694
    %v714 = vunpack.c.l.b16 %v695
    %v715 = vunpack.c.l.b16 %v696
    %v716 = vunpack.c.l.b16 %v697
    %v717 = vpack.c.b16 %v710, %v709
    %v718 = vpack.c.b16 %v712, %v711
    %v719 = vpack.c.b16 %v714, %v713
    %v720 = vpack.c.b16 %v716, %v715
    %v726 = vsel %vm553, %v700, 0
    %728 = vmatpush.bf16.msra.mxu0 0
    %729 = vmatpush.bf16.msra.mxu0 0
    %730 = vmatpush.bf16.msra.mxu0 0
    %731 = vmatpush.bf16.msra.mxu0 0
    %732 = vmatpush.bf16.msra.mxu0 %v720
    %733 = vmatpush.bf16.msra.mxu0 %v719
    %734 = vmatpush.bf16.msra.mxu0 %v718
    %735 = vmatpush.bf16.msra.mxu0 %v717
    %736 = vmatmul.bf16.gmra.mxu0 %v726
    %v737 = vpop.f32.mrf.mxu0
    %v738 = vadd.f32 0.0, %v737
    %v739 = vpop.f32.mrf.mxu0
    %740 = vdwg.mxu0
    %v741 = vrot.slane %v738, 4
    %v742 = vadd.f32 %v738, %v741
    %v743 = vrot.slane %v742, 2
    %v744 = vadd.f32 %v742, %v743
    %v745 = vrot.slane %v744, 1
    %v746 = vadd.f32 %v744, %v745
    %v747 = vmul.f32 %v746, %v567
    %v748 = vsub.f32 %v738, %v747
    %v749 = vmul.f32 %v748, %v748
    %v750 = vrot.slane %v749, 4
    %v751 = vadd.f32 %v749, %v750
    %v752 = vrot.slane %v751, 2
    %v753 = vadd.f32 %v751, %v752
    %v754 = vrot.slane %v753, 1
    %v755 = vadd.f32 %v753, %v754
    %v756 = vmul.f32 %v755, %v567
    %v757 = vadd.f32 %v756, 1e-05
    %v758 = vrsqrt.pop %v757
    %v759 = vmul.f32 %v758, %v757
    %v760 = vmul.f32 %v759, %v758
    %v761 = vmul.f32 0.5, %v760
    %v762 = vsub.f32 1.5, %v761
    %v763 = vmul.f32 %v758, %v762
    %vm764 = vweird.f32 %v757
    %vm765 = vweird.f32 %v758
    %vm766 = vmor %vm764, %vm765
    %v767 = vsel %vm766, %v758, %v763
    %v768 = vmul.f32 %v698, %v767
    %v770 = vperm.slane %v768, 0
    %v772 = vmul.f32 %v748, %v770
    %v774 = vperm.slane %v699, 0
    %v776 = vadd.f32 %v772, %v774
    %v777 = vmax.f32 %v776, 0.0
    %v778 = vld [vmem:[%s21] sm:$0xf]
    %v779 = vld [vmem:[%s21 + $0x4] sm:$0xf]
    %v780 = vld [vmem:[%s21 + $0x8] sm:$0xf]
    %v781 = vld [vmem:[%s21 + $0xc] sm:$0xf]
    %v782 = vld [vmem:[%s21 + $0x10] sm:$0xf]
    %v783 = vld [vmem:[%s21 + $0x14] sm:$0xf]
    %v784 = vld [vmem:[%s21 + $0x18] sm:$0xf]
    %v785 = vld [vmem:[%s21 + $0x1c] sm:$0xf]
    %v786 = vld [vmem:[%s21 + $0x20] sm:$0xf]
    %v787 = vld [vmem:[%s21 + $0x24] sm:$0xf]
    %v788 = vld [vmem:[%s21 + $0x28] sm:$0xf]
    %v789 = vld [vmem:[%s21 + $0x2c] sm:$0xf]
    %v790 = vld [vmem:[%s21 + $0x30] sm:$0xf]
    %v791 = vld [vmem:[%s21 + $0x34] sm:$0xf]
    %v792 = vld [vmem:[%s21 + $0x38] sm:$0xf]
    %v793 = vld [vmem:[%s21 + $0x3c] sm:$0xf]
    %v794 = vld [vmem:[#allocation14] sm:$0x1]
    %v795 = vld [vmem:[#allocation16] sm:$0x1]
    %v796 = vpack.c.bf16 %v777, %v777
    %v813 = vunpack.c.l.b16 %v778
    %v814 = vunpack.c.l.b16 %v779
    %v815 = vunpack.c.l.b16 %v780
    %v816 = vunpack.c.l.b16 %v781
    %v817 = vunpack.c.l.b16 %v782
    %v818 = vunpack.c.l.b16 %v783
    %v819 = vunpack.c.l.b16 %v784
    %v820 = vunpack.c.l.b16 %v785
    %v821 = vunpack.c.l.b16 %v786
    %v822 = vunpack.c.l.b16 %v787
    %v823 = vunpack.c.l.b16 %v788
    %v824 = vunpack.c.l.b16 %v789
    %v825 = vunpack.c.l.b16 %v790
    %v826 = vunpack.c.l.b16 %v791
    %v827 = vunpack.c.l.b16 %v792
    %v828 = vunpack.c.l.b16 %v793
    %v829 = vpack.c.b16 %v814, %v813
    %v830 = vpack.c.b16 %v816, %v815
    %v831 = vpack.c.b16 %v818, %v817
    %v832 = vpack.c.b16 %v820, %v819
    %v833 = vpack.c.b16 %v822, %v821
    %v834 = vpack.c.b16 %v824, %v823
    %v835 = vpack.c.b16 %v826, %v825
    %v836 = vpack.c.b16 %v828, %v827
    %845 = vmatpush.bf16.msra.mxu0 %v836
    %846 = vmatpush.bf16.msra.mxu0 %v835
    %847 = vmatpush.bf16.msra.mxu0 %v834
    %848 = vmatpush.bf16.msra.mxu0 %v833
    %849 = vmatpush.bf16.msra.mxu0 %v832
    %850 = vmatpush.bf16.msra.mxu0 %v831
    %851 = vmatpush.bf16.msra.mxu0 %v830
    %852 = vmatpush.bf16.msra.mxu0 %v829
    %853 = vmatmul.bf16.gmra.mxu0 %v796
    %v854 = vpop.f32.mrf.mxu0
    %v855 = vadd.f32 0.0, %v854
    %v856 = vpop.f32.mrf.mxu0
    %857 = vdwg.mxu0
    %v858 = vrot.slane %v855, 4
    %v859 = vadd.f32 %v855, %v858
    %v860 = vrot.slane %v859, 2
    %v861 = vadd.f32 %v859, %v860
    %v862 = vrot.slane %v861, 1
    %v863 = vadd.f32 %v861, %v862
    %v864 = vmul.f32 %v863, %v567
    %v865 = vsub.f32 %v855, %v864
    %v866 = vmul.f32 %v865, %v865
    %v867 = vrot.slane %v866, 4
    %v868 = vadd.f32 %v866, %v867
    %v869 = vrot.slane %v868, 2
    %v870 = vadd.f32 %v868, %v869
    %v871 = vrot.slane %v870, 1
    %v872 = vadd.f32 %v870, %v871
    %v873 = vmul.f32 %v872, %v567
    %v874 = vadd.f32 %v873, 1e-05
    %v875 = vrsqrt.pop %v874
    %v876 = vmul.f32 %v875, %v874
    %v877 = vmul.f32 %v876, %v875
    %v878 = vmul.f32 0.5, %v877
    %v879 = vsub.f32 1.5, %v878
    %v880 = vmul.f32 %v875, %v879
    %vm881 = vweird.f32 %v874
    %vm882 = vweird.f32 %v875
    %vm883 = vmor %vm881, %vm882
    %v884 = vsel %vm883, %v875, %v880
    %v885 = vmul.f32 %v794, %v884
    %v887 = vperm.slane %v885, 0
    %v889 = vmul.f32 %v865, %v887
    %v891 = vperm.slane %v795, 0
    %v893 = vadd.f32 %v889, %v891
    %v894 = vmax.f32 %v893, 0.0
    %v895 = vld [vmem:[#allocation17] sm:$0xff]
    %v896 = vld [vmem:[#allocation17 + $0x8] sm:$0xff]
    %v897 = vld [vmem:[#allocation17 + $0x10] sm:$0xff]
    %v898 = vld [vmem:[#allocation17 + $0x18] sm:$0xff]
    %v899 = vld [vmem:[#allocation17 + $0x20] sm:$0xff]
    %v900 = vld [vmem:[#allocation17 + $0x28] sm:$0xff]
    %v901 = vld [vmem:[#allocation17 + $0x30] sm:$0xff]
    %v902 = vld [vmem:[#allocation17 + $0x38] sm:$0xff]
    %v903 = vld [vmem:[#allocation17 + $0x40] sm:$0xff]
    %v904 = vld [vmem:[#allocation17 + $0x48] sm:$0xff]
    %v905 = vld [vmem:[#allocation17 + $0x50] sm:$0xff]
    %v906 = vld [vmem:[#allocation17 + $0x58] sm:$0xff]
    %v907 = vld [vmem:[#allocation17 + $0x60] sm:$0xff]
    %v908 = vld [vmem:[#allocation17 + $0x68] sm:$0xff]
    %v909 = vld [vmem:[#allocation17 + $0x70] sm:$0xff]
    %v910 = vld [vmem:[#allocation17 + $0x78] sm:$0xff]
    %v911 = vld [vmem:[%s29] sm:$0x3]
    %v912 = vld [vmem:[#allocation19] sm:$0x3]
    %v913 = vpack.c.bf16 %v894, %v894
    %v930 = vunpack.c.l.b16 %v895
    %v931 = vunpack.c.h.b16 %v895
    %v932 = vunpack.c.l.b16 %v896
    %v933 = vunpack.c.h.b16 %v896
    %v934 = vunpack.c.l.b16 %v897
    %v935 = vunpack.c.h.b16 %v897
    %v936 = vunpack.c.l.b16 %v898
    %v937 = vunpack.c.h.b16 %v898
    %v938 = vunpack.c.l.b16 %v899
    %v939 = vunpack.c.h.b16 %v899
    %v940 = vunpack.c.l.b16 %v900
    %v941 = vunpack.c.h.b16 %v900
    %v942 = vunpack.c.l.b16 %v901
    %v943 = vunpack.c.h.b16 %v901
    %v944 = vunpack.c.l.b16 %v902
    %v945 = vunpack.c.h.b16 %v902
    %v946 = vunpack.c.l.b16 %v903
    %v947 = vunpack.c.h.b16 %v903
    %v948 = vunpack.c.l.b16 %v904
    %v949 = vunpack.c.h.b16 %v904
    %v950 = vunpack.c.l.b16 %v905
    %v951 = vunpack.c.h.b16 %v905
    %v952 = vunpack.c.l.b16 %v906
    %v953 = vunpack.c.h.b16 %v906
    %v954 = vunpack.c.l.b16 %v907
    %v955 = vunpack.c.h.b16 %v907
    %v956 = vunpack.c.l.b16 %v908
    %v957 = vunpack.c.h.b16 %v908
    %v958 = vunpack.c.l.b16 %v909
    %v959 = vunpack.c.h.b16 %v909
    %v960 = vunpack.c.l.b16 %v910
    %v961 = vunpack.c.h.b16 %v910
    %v962 = vpack.c.b16 %v932, %v930
    %v963 = vpack.c.b16 %v933, %v931
    %v964 = vpack.c.b16 %v936, %v934
    %v965 = vpack.c.b16 %v937, %v935
    %v966 = vpack.c.b16 %v940, %v938
    %v967 = vpack.c.b16 %v941, %v939
    %v968 = vpack.c.b16 %v944, %v942
    %v969 = vpack.c.b16 %v945, %v943
    %v970 = vpack.c.b16 %v948, %v946
    %v971 = vpack.c.b16 %v949, %v947
    %v972 = vpack.c.b16 %v952, %v950
    %v973 = vpack.c.b16 %v953, %v951
    %v974 = vpack.c.b16 %v956, %v954
    %v975 = vpack.c.b16 %v957, %v955
    %v976 = vpack.c.b16 %v960, %v958
    %v977 = vpack.c.b16 %v961, %v959
    %994 = vmatpush.bf16.msra.mxu0 %v976
    %995 = vmatpush.bf16.msra.mxu0 %v974
    %996 = vmatpush.bf16.msra.mxu0 %v972
    %997 = vmatpush.bf16.msra.mxu0 %v970
    %998 = vmatpush.bf16.msra.mxu0 %v968
    %999 = vmatpush.bf16.msra.mxu0 %v966
    %1000 = vmatpush.bf16.msra.mxu0 %v964
    %1001 = vmatpush.bf16.msra.mxu0 %v962
    %1002 = vmatmul.bf16.gmra.mxu0 %v913
    %v1003 = vpop.f32.mrf.mxu0
    %v1004 = vadd.f32 0.0, %v1003
    %v1005 = vpop.f32.mrf.mxu0
    %1006 = vdwg.mxu0
    %1007 = vmatpush.bf16.msra.mxu0 %v977
    %1008 = vmatpush.bf16.msra.mxu0 %v975
    %1009 = vmatpush.bf16.msra.mxu0 %v973
    %1010 = vmatpush.bf16.msra.mxu0 %v971
    %1011 = vmatpush.bf16.msra.mxu0 %v969
    %1012 = vmatpush.bf16.msra.mxu0 %v967
    %1013 = vmatpush.bf16.msra.mxu0 %v965
    %1014 = vmatpush.bf16.msra.mxu0 %v963
    %1015 = vmatmul.bf16.gmra.mxu0 %v913
    %v1016 = vpop.f32.mrf.mxu0
    %v1017 = vadd.f32 0.0, %v1016
    %v1018 = vpop.f32.mrf.mxu0
    %1019 = vdwg.mxu0
    %v1020 = vrot.slane %v1004, 4
    %v1021 = vadd.f32 %v1004, %v1020
    %v1022 = vrot.slane %v1021, 2
    %v1023 = vadd.f32 %v1021, %v1022
    %v1024 = vrot.slane %v1023, 1
    %v1025 = vadd.f32 %v1023, %v1024
    %v1026 = vrot.slane %v1017, 4
    %v1027 = vadd.f32 %v1017, %v1026
    %v1028 = vrot.slane %v1027, 2
    %v1029 = vadd.f32 %v1027, %v1028
    %v1030 = vrot.slane %v1029, 1
    %v1031 = vadd.f32 %v1029, %v1030
    %v1032 = vmul.f32 %v1025, %v567
    %v1033 = vmul.f32 %v1031, %v567
    %v1034 = vsub.f32 %v1004, %v1032
    %v1035 = vsub.f32 %v1017, %v1033
    %v1036 = vmul.f32 %v1034, %v1034
    %v1037 = vmul.f32 %v1035, %v1035
    %v1038 = vrot.slane %v1036, 4
    %v1039 = vadd.f32 %v1036, %v1038
    %v1040 = vrot.slane %v1039, 2
    %v1041 = vadd.f32 %v1039, %v1040
    %v1042 = vrot.slane %v1041, 1
    %v1043 = vadd.f32 %v1041, %v1042
    %v1044 = vrot.slane %v1037, 4
    %v1045 = vadd.f32 %v1037, %v1044
    %v1046 = vrot.slane %v1045, 2
    %v1047 = vadd.f32 %v1045, %v1046
    %v1048 = vrot.slane %v1047, 1
    %v1049 = vadd.f32 %v1047, %v1048
    %v1050 = vmul.f32 %v1043, %v567
    %v1051 = vmul.f32 %v1049, %v567
    %v1052 = vadd.f32 %v1050, 1e-05
    %v1053 = vadd.f32 %v1051, 1e-05
    %v1054 = vrsqrt.pop %v1052
    %v1055 = vmul.f32 %v1054, %v1052
    %v1056 = vmul.f32 %v1055, %v1054
    %v1057 = vmul.f32 0.5, %v1056
    %v1058 = vsub.f32 1.5, %v1057
    %v1059 = vmul.f32 %v1054, %v1058
    %vm1060 = vweird.f32 %v1052
    %vm1061 = vweird.f32 %v1054
    %vm1062 = vmor %vm1060, %vm1061
    %v1063 = vsel %vm1062, %v1054, %v1059
    %v1064 = vrsqrt.pop %v1053
    %v1065 = vmul.f32 %v1064, %v1053
    %v1066 = vmul.f32 %v1065, %v1064
    %v1067 = vmul.f32 0.5, %v1066
    %v1068 = vsub.f32 1.5, %v1067
    %v1069 = vmul.f32 %v1064, %v1068
    %vm1070 = vweird.f32 %v1053
    %vm1071 = vweird.f32 %v1064
    %vm1072 = vmor %vm1070, %vm1071
    %v1073 = vsel %vm1072, %v1064, %v1069
    %v1076 = vrot.slane %v1073, 7
    %vm1077 = vcmask 1040384
    %v1078 = vsel %vm1077, %v1063, %v1076
    %v1080 = vmul.f32 %v911, %v1078
    %v1082 = vperm.slane %v1080, 0
    %v1083 = vperm.slane %v1080, 1
    %v1086 = vmul.f32 %v1034, %v1082
    %v1087 = vmul.f32 %v1035, %v1083
    %v1089 = vperm.slane %v912, 0
    %v1090 = vperm.slane %v912, 1
    %v1093 = vadd.f32 %v1086, %v1089
    %v1094 = vadd.f32 %v1087, %v1090
    %v1095 = vmax.f32 %v1093, 0.0
    %v1096 = vmax.f32 %v1094, 0.0
    %v1097 = vld [vmem:[#allocation20] sm:$0xff]
    %v1098 = vld [vmem:[#allocation20 + $0x8] sm:$0xff]
    %v1099 = vld [vmem:[#allocation20 + $0x10] sm:$0xff]
    %v1100 = vld [vmem:[#allocation20 + $0x18] sm:$0xff]
    %v1101 = vld [vmem:[#allocation20 + $0x20] sm:$0xff]
    %v1102 = vld [vmem:[#allocation20 + $0x28] sm:$0xff]
    %v1103 = vld [vmem:[#allocation20 + $0x30] sm:$0xff]
    %v1104 = vld [vmem:[#allocation20 + $0x38] sm:$0xff]
    %v1105 = vld [vmem:[#allocation20 + $0x40] sm:$0xff]
    %v1106 = vld [vmem:[#allocation20 + $0x48] sm:$0xff]
    %v1107 = vld [vmem:[#allocation20 + $0x50] sm:$0xff]
    %v1108 = vld [vmem:[#allocation20 + $0x58] sm:$0xff]
    %v1109 = vld [vmem:[#allocation20 + $0x60] sm:$0xff]
    %v1110 = vld [vmem:[#allocation20 + $0x68] sm:$0xff]
    %v1111 = vld [vmem:[#allocation20 + $0x70] sm:$0xff]
    %v1112 = vld [vmem:[#allocation20 + $0x78] sm:$0xff]
    %v1113 = vld [vmem:[#allocation20 + $0x80] sm:$0xff]
    %v1114 = vld [vmem:[#allocation20 + $0x88] sm:$0xff]
    %v1115 = vld [vmem:[#allocation20 + $0x90] sm:$0xff]
    %v1116 = vld [vmem:[#allocation20 + $0x98] sm:$0xff]
    %v1117 = vld [vmem:[#allocation20 + $0xa0] sm:$0xff]
    %v1118 = vld [vmem:[#allocation20 + $0xa8] sm:$0xff]
    %v1119 = vld [vmem:[#allocation20 + $0xb0] sm:$0xff]
    %v1120 = vld [vmem:[#allocation20 + $0xb8] sm:$0xff]
    %v1121 = vld [vmem:[#allocation20 + $0xc0] sm:$0xff]
    %v1122 = vld [vmem:[#allocation20 + $0xc8] sm:$0xff]
    %v1123 = vld [vmem:[#allocation20 + $0xd0] sm:$0xff]
    %v1124 = vld [vmem:[#allocation20 + $0xd8] sm:$0xff]
    %v1125 = vld [vmem:[#allocation20 + $0xe0] sm:$0xff]
    %v1126 = vld [vmem:[#allocation20 + $0xe8] sm:$0xff]
    %v1127 = vld [vmem:[#allocation20 + $0xf0] sm:$0xff]
    %v1128 = vld [vmem:[#allocation20 + $0xf8] sm:$0xff]
    %v1129 = vld [vmem:[#allocation22] sm:$0x3]
    %v1130 = vld [vmem:[#allocation23] sm:$0x3]
    %v1131 = vpack.c.bf16 %v1095, %v1095
    %v1132 = vpack.c.bf16 %v1096, %v1096
    %v1165 = vunpack.c.l.b16 %v1097
    %v1166 = vunpack.c.h.b16 %v1097
    %v1167 = vunpack.c.l.b16 %v1098
    %v1168 = vunpack.c.h.b16 %v1098
    %v1169 = vunpack.c.l.b16 %v1099
    %v1170 = vunpack.c.h.b16 %v1099
    %v1171 = vunpack.c.l.b16 %v1100
    %v1172 = vunpack.c.h.b16 %v1100
    %v1173 = vunpack.c.l.b16 %v1101
    %v1174 = vunpack.c.h.b16 %v1101
    %v1175 = vunpack.c.l.b16 %v1102
    %v1176 = vunpack.c.h.b16 %v1102
    %v1177 = vunpack.c.l.b16 %v1103
    %v1178 = vunpack.c.h.b16 %v1103
    %v1179 = vunpack.c.l.b16 %v1104
    %v1180 = vunpack.c.h.b16 %v1104
    %v1181 = vunpack.c.l.b16 %v1105
    %v1182 = vunpack.c.h.b16 %v1105
    %v1183 = vunpack.c.l.b16 %v1106
    %v1184 = vunpack.c.h.b16 %v1106
    %v1185 = vunpack.c.l.b16 %v1107
    %v1186 = vunpack.c.h.b16 %v1107
    %v1187 = vunpack.c.l.b16 %v1108
    %v1188 = vunpack.c.h.b16 %v1108
    %v1189 = vunpack.c.l.b16 %v1109
    %v1190 = vunpack.c.h.b16 %v1109
    %v1191 = vunpack.c.l.b16 %v1110
    %v1192 = vunpack.c.h.b16 %v1110
    %v1193 = vunpack.c.l.b16 %v1111
    %v1194 = vunpack.c.h.b16 %v1111
    %v1195 = vunpack.c.l.b16 %v1112
    %v1196 = vunpack.c.h.b16 %v1112
    %v1197 = vunpack.c.l.b16 %v1113
    %v1198 = vunpack.c.h.b16 %v1113
    %v1199 = vunpack.c.l.b16 %v1114
    %v1200 = vunpack.c.h.b16 %v1114
    %v1201 = vunpack.c.l.b16 %v1115
    %v1202 = vunpack.c.h.b16 %v1115
    %v1203 = vunpack.c.l.b16 %v1116
    %v1204 = vunpack.c.h.b16 %v1116
    %v1205 = vunpack.c.l.b16 %v1117
    %v1206 = vunpack.c.h.b16 %v1117
    %v1207 = vunpack.c.l.b16 %v1118
    %v1208 = vunpack.c.h.b16 %v1118
    %v1209 = vunpack.c.l.b16 %v1119
    %v1210 = vunpack.c.h.b16 %v1119
    %v1211 = vunpack.c.l.b16 %v1120
    %v1212 = vunpack.c.h.b16 %v1120
    %v1213 = vunpack.c.l.b16 %v1121
    %v1214 = vunpack.c.h.b16 %v1121
    %v1215 = vunpack.c.l.b16 %v1122
    %v1216 = vunpack.c.h.b16 %v1122
    %v1217 = vunpack.c.l.b16 %v1123
    %v1218 = vunpack.c.h.b16 %v1123
    %v1219 = vunpack.c.l.b16 %v1124
    %v1220 = vunpack.c.h.b16 %v1124
    %v1221 = vunpack.c.l.b16 %v1125
    %v1222 = vunpack.c.h.b16 %v1125
    %v1223 = vunpack.c.l.b16 %v1126
    %v1224 = vunpack.c.h.b16 %v1126
    %v1225 = vunpack.c.l.b16 %v1127
    %v1226 = vunpack.c.h.b16 %v1127
    %v1227 = vunpack.c.l.b16 %v1128
    %v1228 = vunpack.c.h.b16 %v1128
    %v1229 = vpack.c.b16 %v1167, %v1165
    %v1230 = vpack.c.b16 %v1168, %v1166
    %v1231 = vpack.c.b16 %v1171, %v1169
    %v1232 = vpack.c.b16 %v1172, %v1170
    %v1233 = vpack.c.b16 %v1175, %v1173
    %v1234 = vpack.c.b16 %v1176, %v1174
    %v1235 = vpack.c.b16 %v1179, %v1177
    %v1236 = vpack.c.b16 %v1180, %v1178
    %v1237 = vpack.c.b16 %v1183, %v1181
    %v1238 = vpack.c.b16 %v1184, %v1182
    %v1239 = vpack.c.b16 %v1187, %v1185
    %v1240 = vpack.c.b16 %v1188, %v1186
    %v1241 = vpack.c.b16 %v1191, %v1189
    %v1242 = vpack.c.b16 %v1192, %v1190
    %v1243 = vpack.c.b16 %v1195, %v1193
    %v1244 = vpack.c.b16 %v1196, %v1194
    %v1245 = vpack.c.b16 %v1199, %v1197
    %v1246 = vpack.c.b16 %v1200, %v1198
    %v1247 = vpack.c.b16 %v1203, %v1201
    %v1248 = vpack.c.b16 %v1204, %v1202
    %v1249 = vpack.c.b16 %v1207, %v1205
    %v1250 = vpack.c.b16 %v1208, %v1206
    %v1251 = vpack.c.b16 %v1211, %v1209
    %v1252 = vpack.c.b16 %v1212, %v1210
    %v1253 = vpack.c.b16 %v1215, %v1213
    %v1254 = vpack.c.b16 %v1216, %v1214
    %v1255 = vpack.c.b16 %v1219, %v1217
    %v1256 = vpack.c.b16 %v1220, %v1218
    %v1257 = vpack.c.b16 %v1223, %v1221
    %v1258 = vpack.c.b16 %v1224, %v1222
    %v1259 = vpack.c.b16 %v1227, %v1225
    %v1260 = vpack.c.b16 %v1228, %v1226
    %1293 = vmatpush.bf16.msra.mxu0 %v1243
    %1294 = vmatpush.bf16.msra.mxu0 %v1241
    %1295 = vmatpush.bf16.msra.mxu0 %v1239
    %1296 = vmatpush.bf16.msra.mxu0 %v1237
    %1297 = vmatpush.bf16.msra.mxu0 %v1235
    %1298 = vmatpush.bf16.msra.mxu0 %v1233
    %1299 = vmatpush.bf16.msra.mxu0 %v1231
    %1300 = vmatpush.bf16.msra.mxu0 %v1229
    %1301 = vmatmul.bf16.gmra.mxu0 %v1131
    %v1302 = vpop.f32.mrf.mxu0
    %v1303 = vadd.f32 0.0, %v1302
    %v1304 = vpop.f32.mrf.mxu0
    %1305 = vdwg.mxu0
    %1306 = vmatpush.bf16.msra.mxu0 %v1259
    %1307 = vmatpush.bf16.msra.mxu0 %v1257
    %1308 = vmatpush.bf16.msra.mxu0 %v1255
    %1309 = vmatpush.bf16.msra.mxu0 %v1253
    %1310 = vmatpush.bf16.msra.mxu0 %v1251
    %1311 = vmatpush.bf16.msra.mxu0 %v1249
    %1312 = vmatpush.bf16.msra.mxu0 %v1247
    %1313 = vmatpush.bf16.msra.mxu0 %v1245
    %1314 = vmatmul.bf16.gmra.mxu0 %v1132
    %v1315 = vpop.f32.mrf.mxu0
    %v1316 = vadd.f32 %v1303, %v1315
    %v1317 = vpop.f32.mrf.mxu0
    %1318 = vdwg.mxu0
    %1319 = vmatpush.bf16.msra.mxu0 %v1244
    %1320 = vmatpush.bf16.msra.mxu0 %v1242
    %1321 = vmatpush.bf16.msra.mxu0 %v1240
    %1322 = vmatpush.bf16.msra.mxu0 %v1238
    %1323 = vmatpush.bf16.msra.mxu0 %v1236
    %1324 = vmatpush.bf16.msra.mxu0 %v1234
    %1325 = vmatpush.bf16.msra.mxu0 %v1232
    %1326 = vmatpush.bf16.msra.mxu0 %v1230
    %1327 = vmatmul.bf16.gmra.mxu0 %v1131
    %v1328 = vpop.f32.mrf.mxu0
    %v1329 = vadd.f32 0.0, %v1328
    %v1330 = vpop.f32.mrf.mxu0
    %1331 = vdwg.mxu0
    %1332 = vmatpush.bf16.msra.mxu0 %v1260
    %1333 = vmatpush.bf16.msra.mxu0 %v1258
    %1334 = vmatpush.bf16.msra.mxu0 %v1256
    %1335 = vmatpush.bf16.msra.mxu0 %v1254
    %1336 = vmatpush.bf16.msra.mxu0 %v1252
    %1337 = vmatpush.bf16.msra.mxu0 %v1250
    %1338 = vmatpush.bf16.msra.mxu0 %v1248
    %1339 = vmatpush.bf16.msra.mxu0 %v1246
    %1340 = vmatmul.bf16.gmra.mxu0 %v1132
    %v1341 = vpop.f32.mrf.mxu0
    %v1342 = vadd.f32 %v1329, %v1341
    %v1343 = vpop.f32.mrf.mxu0
    %1344 = vdwg.mxu0
    %v1345 = vrot.slane %v1316, 4
    %v1346 = vadd.f32 %v1316, %v1345
    %v1347 = vrot.slane %v1346, 2
    %v1348 = vadd.f32 %v1346, %v1347
    %v1349 = vrot.slane %v1348, 1
    %v1350 = vadd.f32 %v1348, %v1349
    %v1351 = vrot.slane %v1342, 4
    %v1352 = vadd.f32 %v1342, %v1351
    %v1353 = vrot.slane %v1352, 2
    %v1354 = vadd.f32 %v1352, %v1353
    %v1355 = vrot.slane %v1354, 1
    %v1356 = vadd.f32 %v1354, %v1355
    %v1357 = vmul.f32 %v1350, %v567
    %v1358 = vmul.f32 %v1356, %v567
    %v1359 = vsub.f32 %v1316, %v1357
    %v1360 = vsub.f32 %v1342, %v1358
    %v1361 = vmul.f32 %v1359, %v1359
    %v1362 = vmul.f32 %v1360, %v1360
    %v1363 = vrot.slane %v1361, 4
    %v1364 = vadd.f32 %v1361, %v1363
    %v1365 = vrot.slane %v1364, 2
    %v1366 = vadd.f32 %v1364, %v1365
    %v1367 = vrot.slane %v1366, 1
    %v1368 = vadd.f32 %v1366, %v1367
    %v1369 = vrot.slane %v1362, 4
    %v1370 = vadd.f32 %v1362, %v1369
    %v1371 = vrot.slane %v1370, 2
    %v1372 = vadd.f32 %v1370, %v1371
    %v1373 = vrot.slane %v1372, 1
    %v1374 = vadd.f32 %v1372, %v1373
    %v1375 = vmul.f32 %v1368, %v567
    %v1376 = vmul.f32 %v1374, %v567
    %v1377 = vadd.f32 %v1375, 1e-05
    %v1378 = vadd.f32 %v1376, 1e-05
    %v1379 = vrsqrt.pop %v1377
    %v1380 = vmul.f32 %v1379, %v1377
    %v1381 = vmul.f32 %v1380, %v1379
    %v1382 = vmul.f32 0.5, %v1381
    %v1383 = vsub.f32 1.5, %v1382
    %v1384 = vmul.f32 %v1379, %v1383
    %vm1385 = vweird.f32 %v1377
    %vm1386 = vweird.f32 %v1379
    %vm1387 = vmor %vm1385, %vm1386
    %v1388 = vsel %vm1387, %v1379, %v1384
    %v1389 = vrsqrt.pop %v1378
    %v1390 = vmul.f32 %v1389, %v1378
    %v1391 = vmul.f32 %v1390, %v1389
    %v1392 = vmul.f32 0.5, %v1391
    %v1393 = vsub.f32 1.5, %v1392
    %v1394 = vmul.f32 %v1389, %v1393
    %vm1395 = vweird.f32 %v1378
    %vm1396 = vweird.f32 %v1389
    %vm1397 = vmor %vm1395, %vm1396
    %v1398 = vsel %vm1397, %v1389, %v1394
    %v1401 = vrot.slane %v1398, 7
    %v1402 = vsel %vm1077, %v1388, %v1401
    %v1404 = vmul.f32 %v1129, %v1402
    %v1406 = vperm.slane %v1404, 0
    %v1407 = vperm.slane %v1404, 1
    %v1410 = vmul.f32 %v1359, %v1406
    %v1411 = vmul.f32 %v1360, %v1407
    %v1413 = vperm.slane %v1130, 0
    %v1414 = vperm.slane %v1130, 1
    %v1417 = vadd.f32 %v1410, %v1413
    %v1418 = vadd.f32 %v1411, %v1414
    %v1419 = vmax.f32 %v1417, 0.0
    %v1420 = vmax.f32 %v1418, 0.0
    %v1421 = vld [vmem:[#allocation25] sm:$0xff]
    %v1422 = vld [vmem:[#allocation25 + $0x8] sm:$0xff]
    %v1423 = vld [vmem:[#allocation25 + $0x10] sm:$0xff]
    %v1424 = vld [vmem:[#allocation25 + $0x18] sm:$0xff]
    %v1425 = vld [vmem:[#allocation25 + $0x20] sm:$0xff]
    %v1426 = vld [vmem:[#allocation25 + $0x28] sm:$0xff]
    %v1427 = vld [vmem:[#allocation25 + $0x30] sm:$0xff]
    %v1428 = vld [vmem:[#allocation25 + $0x38] sm:$0xff]
    %v1429 = vld [vmem:[#allocation25 + $0x40] sm:$0xff]
    %v1430 = vld [vmem:[#allocation25 + $0x48] sm:$0xff]
    %v1431 = vld [vmem:[#allocation25 + $0x50] sm:$0xff]
    %v1432 = vld [vmem:[#allocation25 + $0x58] sm:$0xff]
    %v1433 = vld [vmem:[#allocation25 + $0x60] sm:$0xff]
    %v1434 = vld [vmem:[#allocation25 + $0x68] sm:$0xff]
    %v1435 = vld [vmem:[#allocation25 + $0x70] sm:$0xff]
    %v1436 = vld [vmem:[#allocation25 + $0x78] sm:$0xff]
    %v1437 = vld [vmem:[#allocation25 + $0x80] sm:$0xff]
    %v1438 = vld [vmem:[#allocation25 + $0x88] sm:$0xff]
    %v1439 = vld [vmem:[#allocation25 + $0x90] sm:$0xff]
    %v1440 = vld [vmem:[#allocation25 + $0x98] sm:$0xff]
    %v1441 = vld [vmem:[#allocation25 + $0xa0] sm:$0xff]
    %v1442 = vld [vmem:[#allocation25 + $0xa8] sm:$0xff]
    %v1443 = vld [vmem:[#allocation25 + $0xb0] sm:$0xff]
    %v1444 = vld [vmem:[#allocation25 + $0xb8] sm:$0xff]
    %v1445 = vld [vmem:[#allocation25 + $0xc0] sm:$0xff]
    %v1446 = vld [vmem:[#allocation25 + $0xc8] sm:$0xff]
    %v1447 = vld [vmem:[#allocation25 + $0xd0] sm:$0xff]
    %v1448 = vld [vmem:[#allocation25 + $0xd8] sm:$0xff]
    %v1449 = vld [vmem:[#allocation25 + $0xe0] sm:$0xff]
    %v1450 = vld [vmem:[#allocation25 + $0xe8] sm:$0xff]
    %v1451 = vld [vmem:[#allocation25 + $0xf0] sm:$0xff]
    %v1452 = vld [vmem:[#allocation25 + $0xf8] sm:$0xff]
    %v1453 = vld [vmem:[#allocation26] sm:$0x3]
    %v1454 = vld [vmem:[#allocation28] sm:$0x3]
    %v1455 = vpack.c.bf16 %v1419, %v1419
    %v1456 = vpack.c.bf16 %v1420, %v1420
    %v1489 = vunpack.c.l.b16 %v1421
    %v1490 = vunpack.c.h.b16 %v1421
    %v1491 = vunpack.c.l.b16 %v1422
    %v1492 = vunpack.c.h.b16 %v1422
    %v1493 = vunpack.c.l.b16 %v1423
    %v1494 = vunpack.c.h.b16 %v1423
    %v1495 = vunpack.c.l.b16 %v1424
    %v1496 = vunpack.c.h.b16 %v1424
    %v1497 = vunpack.c.l.b16 %v1425
    %v1498 = vunpack.c.h.b16 %v1425
    %v1499 = vunpack.c.l.b16 %v1426
    %v1500 = vunpack.c.h.b16 %v1426
    %v1501 = vunpack.c.l.b16 %v1427
    %v1502 = vunpack.c.h.b16 %v1427
    %v1503 = vunpack.c.l.b16 %v1428
    %v1504 = vunpack.c.h.b16 %v1428
    %v1505 = vunpack.c.l.b16 %v1429
    %v1506 = vunpack.c.h.b16 %v1429
    %v1507 = vunpack.c.l.b16 %v1430
    %v1508 = vunpack.c.h.b16 %v1430
    %v1509 = vunpack.c.l.b16 %v1431
    %v1510 = vunpack.c.h.b16 %v1431
    %v1511 = vunpack.c.l.b16 %v1432
    %v1512 = vunpack.c.h.b16 %v1432
    %v1513 = vunpack.c.l.b16 %v1433
    %v1514 = vunpack.c.h.b16 %v1433
    %v1515 = vunpack.c.l.b16 %v1434
    %v1516 = vunpack.c.h.b16 %v1434
    %v1517 = vunpack.c.l.b16 %v1435
    %v1518 = vunpack.c.h.b16 %v1435
    %v1519 = vunpack.c.l.b16 %v1436
    %v1520 = vunpack.c.h.b16 %v1436
    %v1521 = vunpack.c.l.b16 %v1437
    %v1522 = vunpack.c.h.b16 %v1437
    %v1523 = vunpack.c.l.b16 %v1438
    %v1524 = vunpack.c.h.b16 %v1438
    %v1525 = vunpack.c.l.b16 %v1439
    %v1526 = vunpack.c.h.b16 %v1439
    %v1527 = vunpack.c.l.b16 %v1440
    %v1528 = vunpack.c.h.b16 %v1440
    %v1529 = vunpack.c.l.b16 %v1441
    %v1530 = vunpack.c.h.b16 %v1441
    %v1531 = vunpack.c.l.b16 %v1442
    %v1532 = vunpack.c.h.b16 %v1442
    %v1533 = vunpack.c.l.b16 %v1443
    %v1534 = vunpack.c.h.b16 %v1443
    %v1535 = vunpack.c.l.b16 %v1444
    %v1536 = vunpack.c.h.b16 %v1444
    %v1537 = vunpack.c.l.b16 %v1445
    %v1538 = vunpack.c.h.b16 %v1445
    %v1539 = vunpack.c.l.b16 %v1446
    %v1540 = vunpack.c.h.b16 %v1446
    %v1541 = vunpack.c.l.b16 %v1447
    %v1542 = vunpack.c.h.b16 %v1447
    %v1543 = vunpack.c.l.b16 %v1448
    %v1544 = vunpack.c.h.b16 %v1448
    %v1545 = vunpack.c.l.b16 %v1449
    %v1546 = vunpack.c.h.b16 %v1449
    %v1547 = vunpack.c.l.b16 %v1450
    %v1548 = vunpack.c.h.b16 %v1450
    %v1549 = vunpack.c.l.b16 %v1451
    %v1550 = vunpack.c.h.b16 %v1451
    %v1551 = vunpack.c.l.b16 %v1452
    %v1552 = vunpack.c.h.b16 %v1452
    %v1553 = vpack.c.b16 %v1491, %v1489
    %v1554 = vpack.c.b16 %v1492, %v1490
    %v1555 = vpack.c.b16 %v1495, %v1493
    %v1556 = vpack.c.b16 %v1496, %v1494
    %v1557 = vpack.c.b16 %v1499, %v1497
    %v1558 = vpack.c.b16 %v1500, %v1498
    %v1559 = vpack.c.b16 %v1503, %v1501
    %v1560 = vpack.c.b16 %v1504, %v1502
    %v1561 = vpack.c.b16 %v1507, %v1505
    %v1562 = vpack.c.b16 %v1508, %v1506
    %v1563 = vpack.c.b16 %v1511, %v1509
    %v1564 = vpack.c.b16 %v1512, %v1510
    %v1565 = vpack.c.b16 %v1515, %v1513
    %v1566 = vpack.c.b16 %v1516, %v1514
    %v1567 = vpack.c.b16 %v1519, %v1517
    %v1568 = vpack.c.b16 %v1520, %v1518
    %v1569 = vpack.c.b16 %v1523, %v1521
    %v1570 = vpack.c.b16 %v1524, %v1522
    %v1571 = vpack.c.b16 %v1527, %v1525
    %v1572 = vpack.c.b16 %v1528, %v1526
    %v1573 = vpack.c.b16 %v1531, %v1529
    %v1574 = vpack.c.b16 %v1532, %v1530
    %v1575 = vpack.c.b16 %v1535, %v1533
    %v1576 = vpack.c.b16 %v1536, %v1534
    %v1577 = vpack.c.b16 %v1539, %v1537
    %v1578 = vpack.c.b16 %v1540, %v1538
    %v1579 = vpack.c.b16 %v1543, %v1541
    %v1580 = vpack.c.b16 %v1544, %v1542
    %v1581 = vpack.c.b16 %v1547, %v1545
    %v1582 = vpack.c.b16 %v1548, %v1546
    %v1583 = vpack.c.b16 %v1551, %v1549
    %v1584 = vpack.c.b16 %v1552, %v1550
    %1617 = vmatpush.bf16.msra.mxu0 %v1567
    %1618 = vmatpush.bf16.msra.mxu0 %v1565
    %1619 = vmatpush.bf16.msra.mxu0 %v1563
    %1620 = vmatpush.bf16.msra.mxu0 %v1561
    %1621 = vmatpush.bf16.msra.mxu0 %v1559
    %1622 = vmatpush.bf16.msra.mxu0 %v1557
    %1623 = vmatpush.bf16.msra.mxu0 %v1555
    %1624 = vmatpush.bf16.msra.mxu0 %v1553
    %1625 = vmatmul.bf16.gmra.mxu0 %v1455
    %v1626 = vpop.f32.mrf.mxu0
    %v1627 = vadd.f32 0.0, %v1626
    %v1628 = vpop.f32.mrf.mxu0
    %1629 = vdwg.mxu0
    %1630 = vmatpush.bf16.msra.mxu0 %v1583
    %1631 = vmatpush.bf16.msra.mxu0 %v1581
    %1632 = vmatpush.bf16.msra.mxu0 %v1579
    %1633 = vmatpush.bf16.msra.mxu0 %v1577
    %1634 = vmatpush.bf16.msra.mxu0 %v1575
    %1635 = vmatpush.bf16.msra.mxu0 %v1573
    %1636 = vmatpush.bf16.msra.mxu0 %v1571
    %1637 = vmatpush.bf16.msra.mxu0 %v1569
    %1638 = vmatmul.bf16.gmra.mxu0 %v1456
    %v1639 = vpop.f32.mrf.mxu0
    %v1640 = vadd.f32 %v1627, %v1639
    %v1641 = vpop.f32.mrf.mxu0
    %1642 = vdwg.mxu0
    %1643 = vmatpush.bf16.msra.mxu0 %v1568
    %1644 = vmatpush.bf16.msra.mxu0 %v1566
    %1645 = vmatpush.bf16.msra.mxu0 %v1564
    %1646 = vmatpush.bf16.msra.mxu0 %v1562
    %1647 = vmatpush.bf16.msra.mxu0 %v1560
    %1648 = vmatpush.bf16.msra.mxu0 %v1558
    %1649 = vmatpush.bf16.msra.mxu0 %v1556
    %1650 = vmatpush.bf16.msra.mxu0 %v1554
    %1651 = vmatmul.bf16.gmra.mxu0 %v1455
    %v1652 = vpop.f32.mrf.mxu0
    %v1653 = vadd.f32 0.0, %v1652
    %v1654 = vpop.f32.mrf.mxu0
    %1655 = vdwg.mxu0
    %1656 = vmatpush.bf16.msra.mxu0 %v1584
    %1657 = vmatpush.bf16.msra.mxu0 %v1582
    %1658 = vmatpush.bf16.msra.mxu0 %v1580
    %1659 = vmatpush.bf16.msra.mxu0 %v1578
    %1660 = vmatpush.bf16.msra.mxu0 %v1576
    %1661 = vmatpush.bf16.msra.mxu0 %v1574
    %1662 = vmatpush.bf16.msra.mxu0 %v1572
    %1663 = vmatpush.bf16.msra.mxu0 %v1570
    %1664 = vmatmul.bf16.gmra.mxu0 %v1456
    %v1665 = vpop.f32.mrf.mxu0
    %v1666 = vadd.f32 %v1653, %v1665
    %v1667 = vpop.f32.mrf.mxu0
    %1668 = vdwg.mxu0
    %v1669 = vrot.slane %v1640, 4
    %v1670 = vadd.f32 %v1640, %v1669
    %v1671 = vrot.slane %v1670, 2
    %v1672 = vadd.f32 %v1670, %v1671
    %v1673 = vrot.slane %v1672, 1
    %v1674 = vadd.f32 %v1672, %v1673
    %v1675 = vrot.slane %v1666, 4
    %v1676 = vadd.f32 %v1666, %v1675
    %v1677 = vrot.slane %v1676, 2
    %v1678 = vadd.f32 %v1676, %v1677
    %v1679 = vrot.slane %v1678, 1
    %v1680 = vadd.f32 %v1678, %v1679
    %v1681 = vmul.f32 %v1674, %v567
    %v1682 = vmul.f32 %v1680, %v567
    %v1683 = vsub.f32 %v1640, %v1681
    %v1684 = vsub.f32 %v1666, %v1682
    %v1685 = vmul.f32 %v1683, %v1683
    %v1686 = vmul.f32 %v1684, %v1684
    %v1687 = vrot.slane %v1685, 4
    %v1688 = vadd.f32 %v1685, %v1687
    %v1689 = vrot.slane %v1688, 2
    %v1690 = vadd.f32 %v1688, %v1689
    %v1691 = vrot.slane %v1690, 1
    %v1692 = vadd.f32 %v1690, %v1691
    %v1693 = vrot.slane %v1686, 4
    %v1694 = vadd.f32 %v1686, %v1693
    %v1695 = vrot.slane %v1694, 2
    %v1696 = vadd.f32 %v1694, %v1695
    %v1697 = vrot.slane %v1696, 1
    %v1698 = vadd.f32 %v1696, %v1697
    %v1699 = vmul.f32 %v1692, %v567
    %v1700 = vmul.f32 %v1698, %v567
    %v1701 = vadd.f32 %v1699, 1e-05
    %v1702 = vadd.f32 %v1700, 1e-05
    %v1703 = vrsqrt.pop %v1701
    %v1704 = vmul.f32 %v1703, %v1701
    %v1705 = vmul.f32 %v1704, %v1703
    %v1706 = vmul.f32 0.5, %v1705
    %v1707 = vsub.f32 1.5, %v1706
    %v1708 = vmul.f32 %v1703, %v1707
    %vm1709 = vweird.f32 %v1701
    %vm1710 = vweird.f32 %v1703
    %vm1711 = vmor %vm1709, %vm1710
    %v1712 = vsel %vm1711, %v1703, %v1708
    %v1713 = vrsqrt.pop %v1702
    %v1714 = vmul.f32 %v1713, %v1702
    %v1715 = vmul.f32 %v1714, %v1713
    %v1716 = vmul.f32 0.5, %v1715
    %v1717 = vsub.f32 1.5, %v1716
    %v1718 = vmul.f32 %v1713, %v1717
    %vm1719 = vweird.f32 %v1702
    %vm1720 = vweird.f32 %v1713
    %vm1721 = vmor %vm1719, %vm1720
    %v1722 = vsel %vm1721, %v1713, %v1718
    %v1725 = vrot.slane %v1722, 7
    %v1726 = vsel %vm1077, %v1712, %v1725
    %v1728 = vmul.f32 %v1453, %v1726
    %v1730 = vperm.slane %v1728, 0
    %v1731 = vperm.slane %v1728, 1
    %v1734 = vmul.f32 %v1683, %v1730
    %v1735 = vmul.f32 %v1684, %v1731
    %v1737 = vperm.slane %v1454, 0
    %v1738 = vperm.slane %v1454, 1
    %v1741 = vadd.f32 %v1734, %v1737
    %v1742 = vadd.f32 %v1735, %v1738
    %v1743 = vmax.f32 %v1741, 0.0
    %v1744 = vmax.f32 %v1742, 0.0
    %v1745 = vld [vmem:[#allocation29] sm:$0xff]
    %v1746 = vld [vmem:[#allocation29 + $0x8] sm:$0xff]
    %v1747 = vld [vmem:[#allocation29 + $0x10] sm:$0xff]
    %v1748 = vld [vmem:[#allocation29 + $0x18] sm:$0xff]
    %v1749 = vld [vmem:[#allocation29 + $0x20] sm:$0xff]
    %v1750 = vld [vmem:[#allocation29 + $0x28] sm:$0xff]
    %v1751 = vld [vmem:[#allocation29 + $0x30] sm:$0xff]
    %v1752 = vld [vmem:[#allocation29 + $0x38] sm:$0xff]
    %v1753 = vld [vmem:[#allocation29 + $0x40] sm:$0xff]
    %v1754 = vld [vmem:[#allocation29 + $0x48] sm:$0xff]
    %v1755 = vld [vmem:[#allocation29 + $0x50] sm:$0xff]
    %v1756 = vld [vmem:[#allocation29 + $0x58] sm:$0xff]
    %v1757 = vld [vmem:[#allocation29 + $0x60] sm:$0xff]
    %v1758 = vld [vmem:[#allocation29 + $0x68] sm:$0xff]
    %v1759 = vld [vmem:[#allocation29 + $0x70] sm:$0xff]
    %v1760 = vld [vmem:[#allocation29 + $0x78] sm:$0xff]
    %v1761 = vld [vmem:[#allocation29 + $0x80] sm:$0xff]
    %v1762 = vld [vmem:[#allocation29 + $0x88] sm:$0xff]
    %v1763 = vld [vmem:[#allocation29 + $0x90] sm:$0xff]
    %v1764 = vld [vmem:[#allocation29 + $0x98] sm:$0xff]
    %v1765 = vld [vmem:[#allocation29 + $0xa0] sm:$0xff]
    %v1766 = vld [vmem:[#allocation29 + $0xa8] sm:$0xff]
    %v1767 = vld [vmem:[#allocation29 + $0xb0] sm:$0xff]
    %v1768 = vld [vmem:[#allocation29 + $0xb8] sm:$0xff]
    %v1769 = vld [vmem:[#allocation29 + $0xc0] sm:$0xff]
    %v1770 = vld [vmem:[#allocation29 + $0xc8] sm:$0xff]
    %v1771 = vld [vmem:[#allocation29 + $0xd0] sm:$0xff]
    %v1772 = vld [vmem:[#allocation29 + $0xd8] sm:$0xff]
    %v1773 = vld [vmem:[#allocation29 + $0xe0] sm:$0xff]
    %v1774 = vld [vmem:[#allocation29 + $0xe8] sm:$0xff]
    %v1775 = vld [vmem:[#allocation29 + $0xf0] sm:$0xff]
    %v1776 = vld [vmem:[#allocation29 + $0xf8] sm:$0xff]
    %v1777 = vld [vmem:[#allocation31] sm:$0x3]
    %v1778 = vld [vmem:[#allocation32] sm:$0x3]
    %v1779 = vpack.c.bf16 %v1743, %v1743
    %v1780 = vpack.c.bf16 %v1744, %v1744
    %v1813 = vunpack.c.l.b16 %v1745
    %v1814 = vunpack.c.h.b16 %v1745
    %v1815 = vunpack.c.l.b16 %v1746
    %v1816 = vunpack.c.h.b16 %v1746
    %v1817 = vunpack.c.l.b16 %v1747
    %v1818 = vunpack.c.h.b16 %v1747
    %v1819 = vunpack.c.l.b16 %v1748
    %v1820 = vunpack.c.h.b16 %v1748
    %v1821 = vunpack.c.l.b16 %v1749
    %v1822 = vunpack.c.h.b16 %v1749
    %v1823 = vunpack.c.l.b16 %v1750
    %v1824 = vunpack.c.h.b16 %v1750
    %v1825 = vunpack.c.l.b16 %v1751
    %v1826 = vunpack.c.h.b16 %v1751
    %v1827 = vunpack.c.l.b16 %v1752
    %v1828 = vunpack.c.h.b16 %v1752
    %v1829 = vunpack.c.l.b16 %v1753
    %v1830 = vunpack.c.h.b16 %v1753
    %v1831 = vunpack.c.l.b16 %v1754
    %v1832 = vunpack.c.h.b16 %v1754
    %v1833 = vunpack.c.l.b16 %v1755
    %v1834 = vunpack.c.h.b16 %v1755
    %v1835 = vunpack.c.l.b16 %v1756
    %v1836 = vunpack.c.h.b16 %v1756
    %v1837 = vunpack.c.l.b16 %v1757
    %v1838 = vunpack.c.h.b16 %v1757
    %v1839 = vunpack.c.l.b16 %v1758
    %v1840 = vunpack.c.h.b16 %v1758
    %v1841 = vunpack.c.l.b16 %v1759
    %v1842 = vunpack.c.h.b16 %v1759
    %v1843 = vunpack.c.l.b16 %v1760
    %v1844 = vunpack.c.h.b16 %v1760
    %v1845 = vunpack.c.l.b16 %v1761
    %v1846 = vunpack.c.h.b16 %v1761
    %v1847 = vunpack.c.l.b16 %v1762
    %v1848 = vunpack.c.h.b16 %v1762
    %v1849 = vunpack.c.l.b16 %v1763
    %v1850 = vunpack.c.h.b16 %v1763
    %v1851 = vunpack.c.l.b16 %v1764
    %v1852 = vunpack.c.h.b16 %v1764
    %v1853 = vunpack.c.l.b16 %v1765
    %v1854 = vunpack.c.h.b16 %v1765
    %v1855 = vunpack.c.l.b16 %v1766
    %v1856 = vunpack.c.h.b16 %v1766
    %v1857 = vunpack.c.l.b16 %v1767
    %v1858 = vunpack.c.h.b16 %v1767
    %v1859 = vunpack.c.l.b16 %v1768
    %v1860 = vunpack.c.h.b16 %v1768
    %v1861 = vunpack.c.l.b16 %v1769
    %v1862 = vunpack.c.h.b16 %v1769
    %v1863 = vunpack.c.l.b16 %v1770
    %v1864 = vunpack.c.h.b16 %v1770
    %v1865 = vunpack.c.l.b16 %v1771
    %v1866 = vunpack.c.h.b16 %v1771
    %v1867 = vunpack.c.l.b16 %v1772
    %v1868 = vunpack.c.h.b16 %v1772
    %v1869 = vunpack.c.l.b16 %v1773
    %v1870 = vunpack.c.h.b16 %v1773
    %v1871 = vunpack.c.l.b16 %v1774
    %v1872 = vunpack.c.h.b16 %v1774
    %v1873 = vunpack.c.l.b16 %v1775
    %v1874 = vunpack.c.h.b16 %v1775
    %v1875 = vunpack.c.l.b16 %v1776
    %v1876 = vunpack.c.h.b16 %v1776
    %v1877 = vpack.c.b16 %v1815, %v1813
    %v1878 = vpack.c.b16 %v1816, %v1814
    %v1879 = vpack.c.b16 %v1819, %v1817
    %v1880 = vpack.c.b16 %v1820, %v1818
    %v1881 = vpack.c.b16 %v1823, %v1821
    %v1882 = vpack.c.b16 %v1824, %v1822
    %v1883 = vpack.c.b16 %v1827, %v1825
    %v1884 = vpack.c.b16 %v1828, %v1826
    %v1885 = vpack.c.b16 %v1831, %v1829
    %v1886 = vpack.c.b16 %v1832, %v1830
    %v1887 = vpack.c.b16 %v1835, %v1833
    %v1888 = vpack.c.b16 %v1836, %v1834
    %v1889 = vpack.c.b16 %v1839, %v1837
    %v1890 = vpack.c.b16 %v1840, %v1838
    %v1891 = vpack.c.b16 %v1843, %v1841
    %v1892 = vpack.c.b16 %v1844, %v1842
    %v1893 = vpack.c.b16 %v1847, %v1845
    %v1894 = vpack.c.b16 %v1848, %v1846
    %v1895 = vpack.c.b16 %v1851, %v1849
    %v1896 = vpack.c.b16 %v1852, %v1850
    %v1897 = vpack.c.b16 %v1855, %v1853
    %v1898 = vpack.c.b16 %v1856, %v1854
    %v1899 = vpack.c.b16 %v1859, %v1857
    %v1900 = vpack.c.b16 %v1860, %v1858
    %v1901 = vpack.c.b16 %v1863, %v1861
    %v1902 = vpack.c.b16 %v1864, %v1862
    %v1903 = vpack.c.b16 %v1867, %v1865
    %v1904 = vpack.c.b16 %v1868, %v1866
    %v1905 = vpack.c.b16 %v1871, %v1869
    %v1906 = vpack.c.b16 %v1872, %v1870
    %v1907 = vpack.c.b16 %v1875, %v1873
    %v1908 = vpack.c.b16 %v1876, %v1874
    %1941 = vmatpush.bf16.msra.mxu0 %v1891
    %1942 = vmatpush.bf16.msra.mxu0 %v1889
    %1943 = vmatpush.bf16.msra.mxu0 %v1887
    %1944 = vmatpush.bf16.msra.mxu0 %v1885
    %1945 = vmatpush.bf16.msra.mxu0 %v1883
    %1946 = vmatpush.bf16.msra.mxu0 %v1881
    %1947 = vmatpush.bf16.msra.mxu0 %v1879
    %1948 = vmatpush.bf16.msra.mxu0 %v1877
    %1949 = vmatmul.bf16.gmra.mxu0 %v1779
    %v1950 = vpop.f32.mrf.mxu0
    %v1951 = vadd.f32 0.0, %v1950
    %v1952 = vpop.f32.mrf.mxu0
    %1953 = vdwg.mxu0
    %1954 = vmatpush.bf16.msra.mxu0 %v1907
    %1955 = vmatpush.bf16.msra.mxu0 %v1905
    %1956 = vmatpush.bf16.msra.mxu0 %v1903
    %1957 = vmatpush.bf16.msra.mxu0 %v1901
    %1958 = vmatpush.bf16.msra.mxu0 %v1899
    %1959 = vmatpush.bf16.msra.mxu0 %v1897
    %1960 = vmatpush.bf16.msra.mxu0 %v1895
    %1961 = vmatpush.bf16.msra.mxu0 %v1893
    %1962 = vmatmul.bf16.gmra.mxu0 %v1780
    %v1963 = vpop.f32.mrf.mxu0
    %v1964 = vadd.f32 %v1951, %v1963
    %v1965 = vpop.f32.mrf.mxu0
    %1966 = vdwg.mxu0
    %1967 = vmatpush.bf16.msra.mxu0 %v1892
    %1968 = vmatpush.bf16.msra.mxu0 %v1890
    %1969 = vmatpush.bf16.msra.mxu0 %v1888
    %1970 = vmatpush.bf16.msra.mxu0 %v1886
    %1971 = vmatpush.bf16.msra.mxu0 %v1884
    %1972 = vmatpush.bf16.msra.mxu0 %v1882
    %1973 = vmatpush.bf16.msra.mxu0 %v1880
    %1974 = vmatpush.bf16.msra.mxu0 %v1878
    %1975 = vmatmul.bf16.gmra.mxu0 %v1779
    %v1976 = vpop.f32.mrf.mxu0
    %v1977 = vadd.f32 0.0, %v1976
    %v1978 = vpop.f32.mrf.mxu0
    %1979 = vdwg.mxu0
    %1980 = vmatpush.bf16.msra.mxu0 %v1908
    %1981 = vmatpush.bf16.msra.mxu0 %v1906
    %1982 = vmatpush.bf16.msra.mxu0 %v1904
    %1983 = vmatpush.bf16.msra.mxu0 %v1902
    %1984 = vmatpush.bf16.msra.mxu0 %v1900
    %1985 = vmatpush.bf16.msra.mxu0 %v1898
    %1986 = vmatpush.bf16.msra.mxu0 %v1896
    %1987 = vmatpush.bf16.msra.mxu0 %v1894
    %1988 = vmatmul.bf16.gmra.mxu0 %v1780
    %v1989 = vpop.f32.mrf.mxu0
    %v1990 = vadd.f32 %v1977, %v1989
    %v1991 = vpop.f32.mrf.mxu0
    %1992 = vdwg.mxu0
    %v1993 = vrot.slane %v1964, 4
    %v1994 = vadd.f32 %v1964, %v1993
    %v1995 = vrot.slane %v1994, 2
    %v1996 = vadd.f32 %v1994, %v1995
    %v1997 = vrot.slane %v1996, 1
    %v1998 = vadd.f32 %v1996, %v1997
    %v1999 = vrot.slane %v1990, 4
    %v2000 = vadd.f32 %v1990, %v1999
    %v2001 = vrot.slane %v2000, 2
    %v2002 = vadd.f32 %v2000, %v2001
    %v2003 = vrot.slane %v2002, 1
    %v2004 = vadd.f32 %v2002, %v2003
    %v2005 = vmul.f32 %v1998, %v567
    %v2006 = vmul.f32 %v2004, %v567
    %v2007 = vsub.f32 %v1964, %v2005
    %v2008 = vsub.f32 %v1990, %v2006
    %v2009 = vmul.f32 %v2007, %v2007
    %v2010 = vmul.f32 %v2008, %v2008
    %v2011 = vrot.slane %v2009, 4
    %v2012 = vadd.f32 %v2009, %v2011
    %v2013 = vrot.slane %v2012, 2
    %v2014 = vadd.f32 %v2012, %v2013
    %v2015 = vrot.slane %v2014, 1
    %v2016 = vadd.f32 %v2014, %v2015
    %v2017 = vrot.slane %v2010, 4
    %v2018 = vadd.f32 %v2010, %v2017
    %v2019 = vrot.slane %v2018, 2
    %v2020 = vadd.f32 %v2018, %v2019
    %v2021 = vrot.slane %v2020, 1
    %v2022 = vadd.f32 %v2020, %v2021
    %v2023 = vmul.f32 %v2016, %v567
    %v2024 = vmul.f32 %v2022, %v567
    %v2025 = vadd.f32 %v2023, 1e-05
    %v2026 = vadd.f32 %v2024, 1e-05
    %v2027 = vrsqrt.pop %v2025
    %v2028 = vmul.f32 %v2027, %v2025
    %v2029 = vmul.f32 %v2028, %v2027
    %v2030 = vmul.f32 0.5, %v2029
    %v2031 = vsub.f32 1.5, %v2030
    %v2032 = vmul.f32 %v2027, %v2031
    %vm2033 = vweird.f32 %v2025
    %vm2034 = vweird.f32 %v2027
    %vm2035 = vmor %vm2033, %vm2034
    %v2036 = vsel %vm2035, %v2027, %v2032
    %v2037 = vrsqrt.pop %v2026
    %v2038 = vmul.f32 %v2037, %v2026
    %v2039 = vmul.f32 %v2038, %v2037
    %v2040 = vmul.f32 0.5, %v2039
    %v2041 = vsub.f32 1.5, %v2040
    %v2042 = vmul.f32 %v2037, %v2041
    %vm2043 = vweird.f32 %v2026
    %vm2044 = vweird.f32 %v2037
    %vm2045 = vmor %vm2043, %vm2044
    %v2046 = vsel %vm2045, %v2037, %v2042
    %v2049 = vrot.slane %v2046, 7
    %v2050 = vsel %vm1077, %v2036, %v2049
    %v2052 = vmul.f32 %v1777, %v2050
    %v2054 = vperm.slane %v2052, 0
    %v2055 = vperm.slane %v2052, 1
    %v2058 = vmul.f32 %v2007, %v2054
    %v2059 = vmul.f32 %v2008, %v2055
    %v2061 = vperm.slane %v1778, 0
    %v2062 = vperm.slane %v1778, 1
    %v2065 = vadd.f32 %v2058, %v2061
    %v2066 = vadd.f32 %v2059, %v2062
    %v2067 = vmax.f32 %v2065, 0.0
    %v2068 = vmax.f32 %v2066, 0.0
    %v2069 = vld [vmem:[#allocation34] sm:$0xf]
    %v2070 = vld [vmem:[#allocation34 + $0x4] sm:$0xf]
    %v2071 = vld [vmem:[#allocation34 + $0x8] sm:$0xf]
    %v2072 = vld [vmem:[#allocation34 + $0xc] sm:$0xf]
    %v2073 = vld [vmem:[#allocation34 + $0x10] sm:$0xf]
    %v2074 = vld [vmem:[#allocation34 + $0x14] sm:$0xf]
    %v2075 = vld [vmem:[#allocation34 + $0x18] sm:$0xf]
    %v2076 = vld [vmem:[#allocation34 + $0x1c] sm:$0xf]
    %v2077 = vld [vmem:[#allocation34 + $0x20] sm:$0xf]
    %v2078 = vld [vmem:[#allocation34 + $0x24] sm:$0xf]
    %v2079 = vld [vmem:[#allocation34 + $0x28] sm:$0xf]
    %v2080 = vld [vmem:[#allocation34 + $0x2c] sm:$0xf]
    %v2081 = vld [vmem:[#allocation34 + $0x30] sm:$0xf]
    %v2082 = vld [vmem:[#allocation34 + $0x34] sm:$0xf]
    %v2083 = vld [vmem:[#allocation34 + $0x38] sm:$0xf]
    %v2084 = vld [vmem:[#allocation34 + $0x3c] sm:$0xf]
    %v2085 = vld [vmem:[#allocation34 + $0x40] sm:$0xf]
    %v2086 = vld [vmem:[#allocation34 + $0x44] sm:$0xf]
    %v2087 = vld [vmem:[#allocation34 + $0x48] sm:$0xf]
    %v2088 = vld [vmem:[#allocation34 + $0x4c] sm:$0xf]
    %v2089 = vld [vmem:[#allocation34 + $0x50] sm:$0xf]
    %v2090 = vld [vmem:[#allocation34 + $0x54] sm:$0xf]
    %v2091 = vld [vmem:[#allocation34 + $0x58] sm:$0xf]
    %v2092 = vld [vmem:[#allocation34 + $0x5c] sm:$0xf]
    %v2093 = vld [vmem:[#allocation34 + $0x60] sm:$0xf]
    %v2094 = vld [vmem:[#allocation34 + $0x64] sm:$0xf]
    %v2095 = vld [vmem:[#allocation34 + $0x68] sm:$0xf]
    %v2096 = vld [vmem:[#allocation34 + $0x6c] sm:$0xf]
    %v2097 = vld [vmem:[#allocation34 + $0x70] sm:$0xf]
    %v2098 = vld [vmem:[#allocation34 + $0x74] sm:$0xf]
    %v2099 = vld [vmem:[#allocation34 + $0x78] sm:$0xf]
    %v2100 = vld [vmem:[#allocation34 + $0x7c] sm:$0xf]
    %v2101 = vld [vmem:[#allocation35] sm:$0x1]
    %v2102 = vld [vmem:[%s55] sm:$0x1]
    %v2103 = vpack.c.bf16 %v2067, %v2067
    %v2104 = vpack.c.bf16 %v2068, %v2068
    %v2137 = vunpack.c.l.b16 %v2069
    %v2138 = vunpack.c.l.b16 %v2070
    %v2139 = vunpack.c.l.b16 %v2071
    %v2140 = vunpack.c.l.b16 %v2072
    %v2141 = vunpack.c.l.b16 %v2073
    %v2142 = vunpack.c.l.b16 %v2074
    %v2143 = vunpack.c.l.b16 %v2075
    %v2144 = vunpack.c.l.b16 %v2076
    %v2145 = vunpack.c.l.b16 %v2077
    %v2146 = vunpack.c.l.b16 %v2078
    %v2147 = vunpack.c.l.b16 %v2079
    %v2148 = vunpack.c.l.b16 %v2080
    %v2149 = vunpack.c.l.b16 %v2081
    %v2150 = vunpack.c.l.b16 %v2082
    %v2151 = vunpack.c.l.b16 %v2083
    %v2152 = vunpack.c.l.b16 %v2084
    %v2153 = vunpack.c.l.b16 %v2085
    %v2154 = vunpack.c.l.b16 %v2086
    %v2155 = vunpack.c.l.b16 %v2087
    %v2156 = vunpack.c.l.b16 %v2088
    %v2157 = vunpack.c.l.b16 %v2089
    %v2158 = vunpack.c.l.b16 %v2090
    %v2159 = vunpack.c.l.b16 %v2091
    %v2160 = vunpack.c.l.b16 %v2092
    %v2161 = vunpack.c.l.b16 %v2093
    %v2162 = vunpack.c.l.b16 %v2094
    %v2163 = vunpack.c.l.b16 %v2095
    %v2164 = vunpack.c.l.b16 %v2096
    %v2165 = vunpack.c.l.b16 %v2097
    %v2166 = vunpack.c.l.b16 %v2098
    %v2167 = vunpack.c.l.b16 %v2099
    %v2168 = vunpack.c.l.b16 %v2100
    %v2169 = vpack.c.b16 %v2138, %v2137
    %v2170 = vpack.c.b16 %v2140, %v2139
    %v2171 = vpack.c.b16 %v2142, %v2141
    %v2172 = vpack.c.b16 %v2144, %v2143
    %v2173 = vpack.c.b16 %v2146, %v2145
    %v2174 = vpack.c.b16 %v2148, %v2147
    %v2175 = vpack.c.b16 %v2150, %v2149
    %v2176 = vpack.c.b16 %v2152, %v2151
    %v2177 = vpack.c.b16 %v2154, %v2153
    %v2178 = vpack.c.b16 %v2156, %v2155
    %v2179 = vpack.c.b16 %v2158, %v2157
    %v2180 = vpack.c.b16 %v2160, %v2159
    %v2181 = vpack.c.b16 %v2162, %v2161
    %v2182 = vpack.c.b16 %v2164, %v2163
    %v2183 = vpack.c.b16 %v2166, %v2165
    %v2184 = vpack.c.b16 %v2168, %v2167
    %2201 = vmatpush.bf16.msra.mxu0 %v2176
    %2202 = vmatpush.bf16.msra.mxu0 %v2175
    %2203 = vmatpush.bf16.msra.mxu0 %v2174
    %2204 = vmatpush.bf16.msra.mxu0 %v2173
    %2205 = vmatpush.bf16.msra.mxu0 %v2172
    %2206 = vmatpush.bf16.msra.mxu0 %v2171
    %2207 = vmatpush.bf16.msra.mxu0 %v2170
    %2208 = vmatpush.bf16.msra.mxu0 %v2169
    %2209 = vmatmul.bf16.gmra.mxu0 %v2103
    %v2210 = vpop.f32.mrf.mxu0
    %v2211 = vadd.f32 0.0, %v2210
    %v2212 = vpop.f32.mrf.mxu0
    %2213 = vdwg.mxu0
    %2214 = vmatpush.bf16.msra.mxu0 %v2184
    %2215 = vmatpush.bf16.msra.mxu0 %v2183
    %2216 = vmatpush.bf16.msra.mxu0 %v2182
    %2217 = vmatpush.bf16.msra.mxu0 %v2181
    %2218 = vmatpush.bf16.msra.mxu0 %v2180
    %2219 = vmatpush.bf16.msra.mxu0 %v2179
    %2220 = vmatpush.bf16.msra.mxu0 %v2178
    %2221 = vmatpush.bf16.msra.mxu0 %v2177
    %2222 = vmatmul.bf16.gmra.mxu0 %v2104
    %v2223 = vpop.f32.mrf.mxu0
    %v2224 = vadd.f32 %v2211, %v2223
    %v2225 = vpop.f32.mrf.mxu0
    %2226 = vdwg.mxu0
    %v2227 = vrot.slane %v2224, 4
    %v2228 = vadd.f32 %v2224, %v2227
    %v2229 = vrot.slane %v2228, 2
    %v2230 = vadd.f32 %v2228, %v2229
    %v2231 = vrot.slane %v2230, 1
    %v2232 = vadd.f32 %v2230, %v2231
    %v2233 = vmul.f32 %v2232, %v567
    %v2234 = vsub.f32 %v2224, %v2233
    %v2235 = vmul.f32 %v2234, %v2234
    %v2236 = vrot.slane %v2235, 4
    %v2237 = vadd.f32 %v2235, %v2236
    %v2238 = vrot.slane %v2237, 2
    %v2239 = vadd.f32 %v2237, %v2238
    %v2240 = vrot.slane %v2239, 1
    %v2241 = vadd.f32 %v2239, %v2240
    %v2242 = vmul.f32 %v2241, %v567
    %v2243 = vadd.f32 %v2242, 1e-05
    %v2244 = vrsqrt.pop %v2243
    %v2245 = vmul.f32 %v2244, %v2243
    %v2246 = vmul.f32 %v2245, %v2244
    %v2247 = vmul.f32 0.5, %v2246
    %v2248 = vsub.f32 1.5, %v2247
    %v2249 = vmul.f32 %v2244, %v2248
    %vm2250 = vweird.f32 %v2243
    %vm2251 = vweird.f32 %v2244
    %vm2252 = vmor %vm2250, %vm2251
    %v2253 = vsel %vm2252, %v2244, %v2249
    %v2254 = vmul.f32 %v2101, %v2253
    %v2256 = vperm.slane %v2254, 0
    %v2258 = vmul.f32 %v2234, %v2256
    %v2260 = vperm.slane %v2102, 0
    %v2262 = vadd.f32 %v2258, %v2260
    %v2263 = vmax.f32 %v2262, 0.0
    %v2264 = vld [vmem:[#allocation37] sm:$0xf]
    %v2265 = vld [vmem:[#allocation37 + $0x4] sm:$0xf]
    %v2266 = vld [vmem:[#allocation37 + $0x8] sm:$0xf]
    %v2267 = vld [vmem:[#allocation37 + $0xc] sm:$0xf]
    %v2268 = vld [vmem:[#allocation37 + $0x10] sm:$0xf]
    %v2269 = vld [vmem:[#allocation37 + $0x14] sm:$0xf]
    %v2270 = vld [vmem:[#allocation37 + $0x18] sm:$0xf]
    %v2271 = vld [vmem:[#allocation37 + $0x1c] sm:$0xf]
    %v2272 = vld [vmem:[#allocation37 + $0x20] sm:$0xf]
    %v2273 = vld [vmem:[#allocation37 + $0x24] sm:$0xf]
    %v2274 = vld [vmem:[#allocation37 + $0x28] sm:$0xf]
    %v2275 = vld [vmem:[#allocation37 + $0x2c] sm:$0xf]
    %v2276 = vld [vmem:[#allocation37 + $0x30] sm:$0xf]
    %v2277 = vld [vmem:[#allocation37 + $0x34] sm:$0xf]
    %v2278 = vld [vmem:[#allocation37 + $0x38] sm:$0xf]
    %v2279 = vld [vmem:[#allocation37 + $0x3c] sm:$0xf]
    %v2280 = vld [vmem:[#allocation38] sm:$0x1]
    %v2281 = vld [vmem:[%s61] sm:$0x1]
    %v2282 = vpack.c.bf16 %v2263, %v2263
    %v2299 = vunpack.c.l.b16 %v2264
    %v2300 = vunpack.c.l.b16 %v2265
    %v2301 = vunpack.c.l.b16 %v2266
    %v2302 = vunpack.c.l.b16 %v2267
    %v2303 = vunpack.c.l.b16 %v2268
    %v2304 = vunpack.c.l.b16 %v2269
    %v2305 = vunpack.c.l.b16 %v2270
    %v2306 = vunpack.c.l.b16 %v2271
    %v2307 = vunpack.c.l.b16 %v2272
    %v2308 = vunpack.c.l.b16 %v2273
    %v2309 = vunpack.c.l.b16 %v2274
    %v2310 = vunpack.c.l.b16 %v2275
    %v2311 = vunpack.c.l.b16 %v2276
    %v2312 = vunpack.c.l.b16 %v2277
    %v2313 = vunpack.c.l.b16 %v2278
    %v2314 = vunpack.c.l.b16 %v2279
    %v2315 = vpack.c.b16 %v2300, %v2299
    %v2316 = vpack.c.b16 %v2302, %v2301
    %v2317 = vpack.c.b16 %v2304, %v2303
    %v2318 = vpack.c.b16 %v2306, %v2305
    %v2319 = vpack.c.b16 %v2308, %v2307
    %v2320 = vpack.c.b16 %v2310, %v2309
    %v2321 = vpack.c.b16 %v2312, %v2311
    %v2322 = vpack.c.b16 %v2314, %v2313
    %2331 = vmatpush.bf16.msra.mxu0 %v2322
    %2332 = vmatpush.bf16.msra.mxu0 %v2321
    %2333 = vmatpush.bf16.msra.mxu0 %v2320
    %2334 = vmatpush.bf16.msra.mxu0 %v2319
    %2335 = vmatpush.bf16.msra.mxu0 %v2318
    %2336 = vmatpush.bf16.msra.mxu0 %v2317
    %2337 = vmatpush.bf16.msra.mxu0 %v2316
    %2338 = vmatpush.bf16.msra.mxu0 %v2315
    %2339 = vmatmul.bf16.gmra.mxu0 %v2282
    %v2340 = vpop.f32.mrf.mxu0
    %v2341 = vadd.f32 0.0, %v2340
    %v2342 = vpop.f32.mrf.mxu0
    %2343 = vdwg.mxu0
    %v2344 = vrot.slane %v2341, 4
    %v2345 = vadd.f32 %v2341, %v2344
    %v2346 = vrot.slane %v2345, 2
    %v2347 = vadd.f32 %v2345, %v2346
    %v2348 = vrot.slane %v2347, 1
    %v2349 = vadd.f32 %v2347, %v2348
    %v2350 = vmul.f32 %v2349, %v567
    %v2351 = vsub.f32 %v2341, %v2350
    %v2352 = vmul.f32 %v2351, %v2351
    %v2353 = vrot.slane %v2352, 4
    %v2354 = vadd.f32 %v2352, %v2353
    %v2355 = vrot.slane %v2354, 2
    %v2356 = vadd.f32 %v2354, %v2355
    %v2357 = vrot.slane %v2356, 1
    %v2358 = vadd.f32 %v2356, %v2357
    %v2359 = vmul.f32 %v2358, %v567
    %v2360 = vadd.f32 %v2359, 1e-05
    %v2361 = vrsqrt.pop %v2360
    %v2362 = vmul.f32 %v2361, %v2360
    %v2363 = vmul.f32 %v2362, %v2361
    %v2364 = vmul.f32 0.5, %v2363
    %v2365 = vsub.f32 1.5, %v2364
    %v2366 = vmul.f32 %v2361, %v2365
    %vm2367 = vweird.f32 %v2360
    %vm2368 = vweird.f32 %v2361
    %vm2369 = vmor %vm2367, %vm2368
    %v2370 = vsel %vm2369, %v2361, %v2366
    %v2371 = vmul.f32 %v2280, %v2370
    %v2373 = vperm.slane %v2371, 0
    %v2375 = vmul.f32 %v2351, %v2373
    %v2377 = vperm.slane %v2281, 0
    %v2379 = vadd.f32 %v2375, %v2377
    %v2380 = vmax.f32 %v2379, 0.0
    %v2381 = vld [vmem:[%s63] sm:$0xf]
    %v2382 = vld [vmem:[%s63 + $0x4] sm:$0xf]
    %v2383 = vld [vmem:[%s63 + $0x8] sm:$0xf]
    %v2384 = vld [vmem:[%s63 + $0xc] sm:$0xf]
    %v2385 = vld [vmem:[%s63 + $0x10] sm:$0xf]
    %v2386 = vld [vmem:[%s63 + $0x14] sm:$0xf]
    %v2387 = vld [vmem:[%s63 + $0x18] sm:$0xf]
    %v2388 = vld [vmem:[%s63 + $0x1c] sm:$0xf]
    %v2389 = vld [vmem:[%s63 + $0x20] sm:$0xf]
    %v2390 = vld [vmem:[%s63 + $0x24] sm:$0xf]
    %v2391 = vld [vmem:[%s63 + $0x28] sm:$0xf]
    %v2392 = vld [vmem:[%s63 + $0x2c] sm:$0xf]
    %v2393 = vld [vmem:[%s63 + $0x30] sm:$0xf]
    %v2394 = vld [vmem:[%s63 + $0x34] sm:$0xf]
    %v2395 = vld [vmem:[%s63 + $0x38] sm:$0xf]
    %v2396 = vld [vmem:[%s63 + $0x3c] sm:$0xf]
    %v2397 = vld [vmem:[%s65] sm:$0x1]
    %v2398 = vld [vmem:[%s67] sm:$0x1]
    %v2399 = vpack.c.bf16 %v2380, %v2380
    %v2416 = vunpack.c.l.b16 %v2381
    %v2417 = vunpack.c.l.b16 %v2382
    %v2418 = vunpack.c.l.b16 %v2383
    %v2419 = vunpack.c.l.b16 %v2384
    %v2420 = vunpack.c.l.b16 %v2385
    %v2421 = vunpack.c.l.b16 %v2386
    %v2422 = vunpack.c.l.b16 %v2387
    %v2423 = vunpack.c.l.b16 %v2388
    %v2424 = vunpack.c.l.b16 %v2389
    %v2425 = vunpack.c.l.b16 %v2390
    %v2426 = vunpack.c.l.b16 %v2391
    %v2427 = vunpack.c.l.b16 %v2392
    %v2428 = vunpack.c.l.b16 %v2393
    %v2429 = vunpack.c.l.b16 %v2394
    %v2430 = vunpack.c.l.b16 %v2395
    %v2431 = vunpack.c.l.b16 %v2396
    %v2432 = vpack.c.b16 %v2417, %v2416
    %v2433 = vpack.c.b16 %v2419, %v2418
    %v2434 = vpack.c.b16 %v2421, %v2420
    %v2435 = vpack.c.b16 %v2423, %v2422
    %v2436 = vpack.c.b16 %v2425, %v2424
    %v2437 = vpack.c.b16 %v2427, %v2426
    %v2438 = vpack.c.b16 %v2429, %v2428
    %v2439 = vpack.c.b16 %v2431, %v2430
    %2448 = vmatpush.bf16.msra.mxu0 %v2439
    %2449 = vmatpush.bf16.msra.mxu0 %v2438
    %2450 = vmatpush.bf16.msra.mxu0 %v2437
    %2451 = vmatpush.bf16.msra.mxu0 %v2436
    %2452 = vmatpush.bf16.msra.mxu0 %v2435
    %2453 = vmatpush.bf16.msra.mxu0 %v2434
    %2454 = vmatpush.bf16.msra.mxu0 %v2433
    %2455 = vmatpush.bf16.msra.mxu0 %v2432
    %2456 = vmatmul.bf16.gmra.mxu0 %v2399
    %v2457 = vpop.f32.mrf.mxu0
    %v2458 = vadd.f32 0.0, %v2457
    %v2459 = vpop.f32.mrf.mxu0
    %2460 = vdwg.mxu0
    %v2461 = vsel %vm553, %v2458, 0.0
    %v2462 = vrot.slane %v2461, 4
    %v2463 = vadd.f32 %v2461, %v2462
    %v2464 = vrot.slane %v2463, 2
    %v2465 = vadd.f32 %v2463, %v2464
    %v2466 = vrot.slane %v2465, 1
    %v2467 = vadd.f32 %v2465, %v2466
    %v2468 = vmul.f32 %v2467, %v567
    %v2469 = vsub.f32 %v2458, %v2468
    %v2470 = vmul.f32 %v2469, %v2469
    %v2471 = vsel %vm553, %v2470, 0.0
    %v2472 = vrot.slane %v2471, 4
    %v2473 = vadd.f32 %v2471, %v2472
    %v2474 = vrot.slane %v2473, 2
    %v2475 = vadd.f32 %v2473, %v2474
    %v2476 = vrot.slane %v2475, 1
    %v2477 = vadd.f32 %v2475, %v2476
    %v2478 = vmul.f32 %v2477, %v567
    %v2479 = vadd.f32 %v2478, 1e-05
    %v2480 = vrsqrt.pop %v2479
    %v2481 = vmul.f32 %v2480, %v2479
    %v2482 = vmul.f32 %v2481, %v2480
    %v2483 = vmul.f32 0.5, %v2482
    %v2484 = vsub.f32 1.5, %v2483
    %v2485 = vmul.f32 %v2480, %v2484
    %vm2486 = vweird.f32 %v2479
    %vm2487 = vweird.f32 %v2480
    %vm2488 = vmor %vm2486, %vm2487
    %v2489 = vsel %vm2488, %v2480, %v2485
    %v2490 = vmul.f32 %v2397, %v2489
    %v2492 = vperm.slane %v2490, 0
    %v2494 = vmul.f32 %v2469, %v2492
    %v2496 = vperm.slane %v2398, 0
    %v2498 = vadd.f32 %v2494, %v2496
    %v2499 = vmax.f32 %v2498, 0.0
    %v2500 = vld [vmem:[%s69] sm:$0xf]
    %v2501 = vld [vmem:[%s69 + $0x4] sm:$0xf]
    %v2502 = vld [vmem:[%s69 + $0x8] sm:$0xf]
    %v2503 = vld [vmem:[%s69 + $0xc] sm:$0xf]
    %v2504 = vld [vmem:[%s69 + $0x10] sm:$0xf]
    %v2505 = vld [vmem:[%s69 + $0x14] sm:$0xf]
    %v2506 = vld [vmem:[%s69 + $0x18] sm:$0xf]
    %v2507 = vld [vmem:[%s69 + $0x1c] sm:$0xf]
    %v2508 = vld [vmem:[%s71] sm:$0x1]
    %v2509 = vld [vmem:[%s73] sm:$0x1]
    %v2510 = vpack.c.bf16 %v2499, %v2499
    %v2519 = vunpack.c.l.b16 %v2500
    %v2520 = vunpack.c.l.b16 %v2501
    %v2521 = vunpack.c.l.b16 %v2502
    %v2522 = vunpack.c.l.b16 %v2503
    %v2523 = vunpack.c.l.b16 %v2504
    %v2524 = vunpack.c.l.b16 %v2505
    %v2525 = vunpack.c.l.b16 %v2506
    %v2526 = vunpack.c.l.b16 %v2507
    %v2527 = vpack.c.b16 %v2520, %v2519
    %v2528 = vpack.c.b16 %v2522, %v2521
    %v2529 = vpack.c.b16 %v2524, %v2523
    %v2530 = vpack.c.b16 %v2526, %v2525
    %v2536 = vsel %vm553, %v2510, 0
    %2538 = vmatpush.bf16.msra.mxu0 0
    %2539 = vmatpush.bf16.msra.mxu0 0
    %2540 = vmatpush.bf16.msra.mxu0 0
    %2541 = vmatpush.bf16.msra.mxu0 0
    %2542 = vmatpush.bf16.msra.mxu0 %v2530
    %2543 = vmatpush.bf16.msra.mxu0 %v2529
    %2544 = vmatpush.bf16.msra.mxu0 %v2528
    %2545 = vmatpush.bf16.msra.mxu0 %v2527
    %2546 = vmatmul.bf16.gmra.mxu0 %v2536
    %v2547 = vpop.f32.mrf.mxu0
    %v2548 = vadd.f32 0.0, %v2547
    %v2549 = vpop.f32.mrf.mxu0
    %2550 = vdwg.mxu0
    %v2551 = vsel %vm553, %v2548, 0.0
    %v2552 = vrot.slane %v2551, 4
    %v2553 = vadd.f32 %v2551, %v2552
    %v2554 = vrot.slane %v2553, 2
    %v2555 = vadd.f32 %v2553, %v2554
    %v2556 = vrot.slane %v2555, 1
    %v2557 = vadd.f32 %v2555, %v2556
    %v2558 = vmul.f32 %v2557, %v567
    %v2559 = vsub.f32 %v2548, %v2558
    %v2560 = vmul.f32 %v2559, %v2559
    %v2561 = vsel %vm553, %v2560, 0.0
    %v2562 = vrot.slane %v2561, 4
    %v2563 = vadd.f32 %v2561, %v2562
    %v2564 = vrot.slane %v2563, 2
    %v2565 = vadd.f32 %v2563, %v2564
    %v2566 = vrot.slane %v2565, 1
    %v2567 = vadd.f32 %v2565, %v2566
    %v2568 = vmul.f32 %v2567, %v567
    %v2569 = vadd.f32 %v2568, 1e-05
    %v2570 = vrsqrt.pop %v2569
    %v2571 = vmul.f32 %v2570, %v2569
    %v2572 = vmul.f32 %v2571, %v2570
    %v2573 = vmul.f32 0.5, %v2572
    %v2574 = vsub.f32 1.5, %v2573
    %v2575 = vmul.f32 %v2570, %v2574
    %vm2576 = vweird.f32 %v2569
    %vm2577 = vweird.f32 %v2570
    %vm2578 = vmor %vm2576, %vm2577
    %v2579 = vsel %vm2578, %v2570, %v2575
    %v2580 = vmul.f32 %v2508, %v2579
    %v2582 = vperm.slane %v2580, 0
    %v2584 = vmul.f32 %v2559, %v2582
    %v2586 = vperm.slane %v2509, 0
    %v2588 = vadd.f32 %v2584, %v2586
    %v2589 = vmax.f32 %v2588, 0.0
    %v2590 = vld [vmem:[%s75] sm:$0xf]
    %v2591 = vld [vmem:[%s75 + $0x4] sm:$0xf]
    %v2592 = vld [vmem:[%s75 + $0x8] sm:$0xf]
    %v2593 = vld [vmem:[%s75 + $0xc] sm:$0xf]
    %v2594 = vld [vmem:[%s75 + $0x10] sm:$0xf]
    %v2595 = vld [vmem:[%s75 + $0x14] sm:$0xf]
    %v2596 = vld [vmem:[%s75 + $0x18] sm:$0xf]
    %v2597 = vld [vmem:[%s75 + $0x1c] sm:$0xf]
    %v2598 = vld [vmem:[%s77] sm:$0x1]
    %v2599 = vld [vmem:[%s79] sm:$0x1]
    %v2600 = vpack.c.bf16 %v2589, %v2589
    %v2609 = vunpack.c.l.b16 %v2590
    %v2610 = vunpack.c.l.b16 %v2591
    %v2611 = vunpack.c.l.b16 %v2592
    %v2612 = vunpack.c.l.b16 %v2593
    %v2613 = vunpack.c.l.b16 %v2594
    %v2614 = vunpack.c.l.b16 %v2595
    %v2615 = vunpack.c.l.b16 %v2596
    %v2616 = vunpack.c.l.b16 %v2597
    %v2617 = vpack.c.b16 %v2610, %v2609
    %v2618 = vpack.c.b16 %v2612, %v2611
    %v2619 = vpack.c.b16 %v2614, %v2613
    %v2620 = vpack.c.b16 %v2616, %v2615
    %v2626 = vsel %vm553, %v2600, 0
    %2628 = vmatpush.bf16.msra.mxu0 0
    %2629 = vmatpush.bf16.msra.mxu0 0
    %2630 = vmatpush.bf16.msra.mxu0 0
    %2631 = vmatpush.bf16.msra.mxu0 0
    %2632 = vmatpush.bf16.msra.mxu0 %v2620
    %2633 = vmatpush.bf16.msra.mxu0 %v2619
    %2634 = vmatpush.bf16.msra.mxu0 %v2618
    %2635 = vmatpush.bf16.msra.mxu0 %v2617
    %2636 = vmatmul.bf16.gmra.mxu0 %v2626
    %v2637 = vpop.f32.mrf.mxu0
    %v2638 = vadd.f32 0.0, %v2637
    %v2639 = vpop.f32.mrf.mxu0
    %2640 = vdwg.mxu0
    %v2641 = vsel %vm536, %v2638, 0.0
    %v2642 = vrot.slane %v2641, 4
    %v2643 = vadd.f32 %v2641, %v2642
    %v2644 = vrot.slane %v2643, 2
    %v2645 = vadd.f32 %v2643, %v2644
    %v2646 = vrot.slane %v2645, 1
    %v2647 = vadd.f32 %v2645, %v2646
    %v2648 = vmul.f32 %v2647, %v567
    %v2649 = vsub.f32 %v2638, %v2648
    %v2650 = vmul.f32 %v2649, %v2649
    %v2651 = vsel %vm536, %v2650, 0.0
    %v2652 = vrot.slane %v2651, 4
    %v2653 = vadd.f32 %v2651, %v2652
    %v2654 = vrot.slane %v2653, 2
    %v2655 = vadd.f32 %v2653, %v2654
    %v2656 = vrot.slane %v2655, 1
    %v2657 = vadd.f32 %v2655, %v2656
    %v2658 = vmul.f32 %v2657, %v567
    %v2659 = vadd.f32 %v2658, 1e-05
    %v2660 = vrsqrt.pop %v2659
    %v2661 = vmul.f32 %v2660, %v2659
    %v2662 = vmul.f32 %v2661, %v2660
    %v2663 = vmul.f32 0.5, %v2662
    %v2664 = vsub.f32 1.5, %v2663
    %v2665 = vmul.f32 %v2660, %v2664
    %vm2666 = vweird.f32 %v2659
    %vm2667 = vweird.f32 %v2660
    %vm2668 = vmor %vm2666, %vm2667
    %v2669 = vsel %vm2668, %v2660, %v2665
    %v2670 = vmul.f32 %v2598, %v2669
    %v2672 = vperm.slane %v2670, 0
    %v2674 = vmul.f32 %v2649, %v2672
    %v2676 = vperm.slane %v2599, 0
    %v2678 = vadd.f32 %v2674, %v2676
    %v2679 = vmax.f32 %v2678, 0.0
    %v2680 = vld [vmem:[%s81] sm:$0x1]
    %v2681 = vld [vmem:[#allocation2] sm:$0x1]
    %v2683 = vperm.slane %v2680, 0
    %v2685 = vmul.f32 %v2679, %v2683
    %v2686 = vsel %vm536, %v2685, 0.0
    %2687 = vadd.xlane.f32.xlu0 %v2686
    %v2688 = vpop.xlane.xlu0 %2687
    %v2690 = vperm.slane %v2681, 0
    %v2692 = vadd.f32 %v2688, %v2690
    %vm2693 = vcmask 7168
    %2694 = vst.msk [vmem:[%s85] sm:$0xff] %vm2693, %v2692
    // Predicated region
    $region266: #{mlp_forward.1} parent=1 // pred_check
      _
    $region267: #{mlp_forward.1} parent=1 // pred_check_branch
      %2696 = sbr.rel (0) target = $region269
    $region268: #{mlp_forward.1} parent=1 // pred_region
      _
    $region269: #{mlp_forward.1} parent=1 // pred_fallthru
      _
    // Predicated region
    $region270: #{mlp_forward.1} parent=1 // pred_check
      _
    $region271: #{mlp_forward.1} parent=1 // pred_check_branch
      %2698 = sbr.rel (0) target = $region273
    $region272: #{mlp_forward.1} parent=1 // pred_region
      _
    $region273: #{mlp_forward.1} parent=1 // pred_fallthru
      _
    %2699 = vsyncpa [#allocation4], 1
    %2700 = vsyncpa [#allocation6], 1
    %2701 = vsyncpa [#allocation9], 1
    %2702 = vsyncpa [#allocation12], 1
    %2703 = vsyncpa [#allocation15], 1
    %2704 = vsyncpa [#allocation18], 1
    %2705 = vsyncpa [#allocation21], 1
    %2706 = vsyncpa [#allocation24], 1
    %2707 = vsyncpa [#allocation27], 1
    %2708 = vsyncpa [#allocation30], 1
    %2709 = vsyncpa [#allocation33], 1
    %2710 = vsyncpa [#allocation36], 1
    %2711 = vsyncpa [#allocation39], 1

</llo_original>
